<compile_context>
chip_gen: v6e
topology: v6e:2x2x1
jax: 0.10.0
libtpu: 0.0.40
codegen_flags: <defaults>
</compile_context>

<pallas_src>
import math

import jax
import jax.numpy as jnp
from jax.experimental import pallas as pl
from jax.experimental.pallas import tpu as pltpu

_F32 = jnp.float32
_PARALLEL_1D = pltpu.CompilerParams(dimension_semantics=("parallel",))


# --------------------------------------------------------------------------------------
# helpers
# --------------------------------------------------------------------------------------
def _row_tile(m: int, target: int = 256) -> int:
    """Largest multiple of 8 that divides m and is <= min(m, target)."""
    assert m % 8 == 0, f"row count {m} must be a multiple of 8"
    best, t, limit = 8, 8, min(m, target)
    while t <= limit:
        if m % t == 0:
            best = t
        t += 8
    return best


def _gspec(grid, in_specs, out_specs):
    return pltpu.PrefetchScalarGridSpec(
        num_scalar_prefetch=0, grid=grid, in_specs=in_specs, out_specs=out_specs)


# --------------------------------------------------------------------------------------
# Kernel 1: fused token embedding (one-hot x table) + SinusoidalPosEmb add
# --------------------------------------------------------------------------------------
def embed_posenc_pallas(onehot, pos, table, freq, phase):
    """out[r] = onehot[r] @ table + sin(pos[r] * freq + phase)   (cos == sin shifted by pi/2)."""
    m, v = onehot.shape
    d = table.shape[1]
    tm = _row_tile(m)

    def kernel(oh_ref, pos_ref, tab_ref, fr_ref, ph_ref, o_ref):
        oh = oh_ref[...]                                   # (tm, V)
        # tiny-K (V=4) "matmul" as a VPU broadcast-sum (keeps the MXU free, no tiny-K dot)
        emb = oh[:, 0:1] * tab_ref[0:1, :]
        for j in range(1, v):
            emb = emb + oh[:, j:j + 1] * tab_ref[j:j + 1, :]
        pe = jnp.sin(pos_ref[...] * fr_ref[...] + ph_ref[...])   # one transcendental / element
        o_ref[...] = emb + pe

    cost = pl.CostEstimate(
        flops=2 * m * v * d + 2 * m * d,
        transcendentals=m * d,
        bytes_accessed=4 * (m * v + m + v * d + 2 * d + m * d),
    )
    return pl.pallas_call(
        kernel,
        out_shape=jax.ShapeDtypeStruct((m, d), _F32),
        grid_spec=_gspec(
            (m // tm,),
            [pl.BlockSpec((tm, v), lambda i: (i, 0)),
             pl.BlockSpec((tm, 1), lambda i: (i, 0)),
             pl.BlockSpec((v, d), lambda i: (0, 0)),
             pl.BlockSpec((1, d), lambda i: (0, 0)),
             pl.BlockSpec((1, d), lambda i: (0, 0))],
            pl.BlockSpec((tm, d), lambda i: (i, 0))),
        compiler_params=_PARALLEL_1D,
        cost_estimate=cost,
    )(onehot, pos, table, freq, phase)


# --------------------------------------------------------------------------------------
# Kernel 2: Conv1d(k=3, pad=1) + bias + ReLU + BatchNorm(inference) + Hyena in_proj
#           (conv expressed as 3 MXU matmuls on host-shifted views; in_proj fused)
# --------------------------------------------------------------------------------------
def conv_bn_relu_inproj_pallas(xp, xc, xn, w0, w1, w2, cnn_bias, bn_scale, bn_shift,
                               in_w, in_b):
    m, cin = xc.shape
    cout = w0.shape[1]
    n = in_w.shape[1]
    tm = _row_tile(m)

    def kernel(xp_ref, xc_ref, xn_ref, w0_ref, w1_ref, w2_ref,
               cb_ref, s_ref, t_ref, iw_ref, ib_ref, o_ref):
        acc = jnp.dot(xp_ref[...], w0_ref[...], preferred_element_type=jnp.float32)
        acc = acc + jnp.dot(xc_ref[...], w1_ref[...], preferred_element_type=jnp.float32)
        acc = acc + jnp.dot(xn_ref[...], w2_ref[...], preferred_element_type=jnp.float32)
        h = jnp.maximum(acc + cb_ref[...], 0.0)            # Conv bias + ReLU (torch order)
        h = h * s_ref[...] + t_ref[...]                    # BatchNorm1d (inference, folded)
        o_ref[...] = (jnp.dot(h, iw_ref[...], preferred_element_type=jnp.float32)
                      + ib_ref[...])                       # Hyena in_proj

    x_spec = pl.BlockSpec((tm, cin), lambda i: (i, 0))
    w_spec = pl.BlockSpec((cin, cout), lambda i: (0, 0))
    v_spec = pl.BlockSpec((1, cout), lambda i: (0, 0))
    return pl.pallas_call(
        kernel,
        out_shape=jax.ShapeDtypeStruct((m, n), _F32),
        grid_spec=_gspec(
            (m // tm,),
            [x_spec, x_spec, x_spec, w_spec, w_spec, w_spec,
             v_spec, v_spec, v_spec,
             pl.BlockSpec((cout, n), lambda i: (0, 0)),
             pl.BlockSpec((1, n), lambda i: (0, 0))],
            pl.BlockSpec((tm, n), lambda i: (i, 0))),
        compiler_params=_PARALLEL_1D,
    )(xp, xc, xn, w0, w1, w2, cnn_bias, bn_scale, bn_shift, in_w, in_b)


# --------------------------------------------------------------------------------------
# Kernel 3: Hyena depthwise short filter (k=3, causal) + split + v*x1 gate
# --------------------------------------------------------------------------------------
def short_filter_gate_pallas(um2, um1, u0, w0, w1, w2, b):
    m, iw = u0.shape
    d = iw // 3
    tm = _row_tile(m)

    def kernel(um2_ref, um1_ref, u0_ref, w0_ref, w1_ref, w2_ref, b_ref, x0_ref, vg_ref):
        uc = (um2_ref[...] * w0_ref[...] + um1_ref[...] * w1_ref[...]
              + u0_ref[...] * w2_ref[...] + b_ref[...])           # (tm, 3d)
        x0_ref[...] = uc[:, 0:d]
        vg_ref[...] = uc[:, 2 * d:3 * d] * uc[:, d:2 * d]         # v * x1

    u_spec = pl.BlockSpec((tm, iw), lambda i: (i, 0))
    w_spec = pl.BlockSpec((1, iw), lambda i: (0, 0))
    o_spec = pl.BlockSpec((tm, d), lambda i: (i, 0))
    return pl.pallas_call(
        kernel,
        out_shape=(jax.ShapeDtypeStruct((m, d), _F32),
                   jax.ShapeDtypeStruct((m, d), _F32)),
        grid_spec=_gspec((m // tm,),
                         [u_spec, u_spec, u_spec, w_spec, w_spec, w_spec, w_spec],
                         [o_spec, o_spec]),
        compiler_params=_PARALLEL_1D,
    )(um2, um1, u0, w0, w1, w2, b)


# --------------------------------------------------------------------------------------
# Kernel 4: HyenaFilter implicit MLP (Linear+Sin x3, Linear) + exponential modulation
# --------------------------------------------------------------------------------------
def hyena_filter_pallas(z, t, p):
    L, e_dim = z.shape
    d = p['f_w4'].shape[1]
    tl = _row_tile(L)

    def kernel(z_ref, t_ref, w1_ref, b1_ref, fr_ref, w2_ref, b2_ref,
               w3_ref, b3_ref, w4_ref, da_ref, o_ref):
        z_v = z_ref[...]                                         # (tl, 3)
        f = fr_ref[...]                                          # (1, O), shared Sin freq
        h = b1_ref[...]
        for j in range(e_dim):                                   # tiny-K (3) first layer on VPU
            h = h + z_v[:, j:j + 1] * w1_ref[j:j + 1, :]
        h = jnp.sin(f * h)
        h = jnp.sin(f * (jnp.dot(h, w2_ref[...], preferred_element_type=jnp.float32)
                         + b2_ref[...]))
        h = jnp.sin(f * (jnp.dot(h, w3_ref[...], preferred_element_type=jnp.float32)
                         + b3_ref[...]))
        h = jnp.dot(h, w4_ref[...], preferred_element_type=jnp.float32)     # (tl, d)
        decay = jnp.exp(-t_ref[...] * da_ref[...] + 1e-16)                  # modulation
        o_ref[...] = h * decay

    def full(arr):
        return pl.BlockSpec(arr.shape, lambda i: (0, 0))

    return pl.pallas_call(
        kernel,
        out_shape=jax.ShapeDtypeStruct((L, d), _F32),
        grid_spec=_gspec(
            (L // tl,),
            [pl.BlockSpec((tl, e_dim), lambda i: (i, 0)),
             pl.BlockSpec((tl, 1), lambda i: (i, 0)),
             full(p['f_w1']), full(p['f_b1']), full(p['f_freq']),
             full(p['f_w2']), full(p['f_b2']),
             full(p['f_w3']), full(p['f_b3']),
             full(p['f_w4']), full(p['f_deltas_abs'])],
            pl.BlockSpec((tl, d), lambda i: (i, 0))),
        compiler_params=_PARALLEL_1D,
    )(z, t, p['f_w1'], p['f_b1'], p['f_freq'], p['f_w2'], p['f_b2'],
      p['f_w3'], p['f_b3'], p['f_w4'], p['f_deltas_abs'])


# --------------------------------------------------------------------------------------
# Kernel 5: epilogue  ((y * x0) @ out_w + out_b) @ proj_w + proj_b
#           (fuses the x[0] gate, HyenaOperator.out_proj and the model proj_out)
# --------------------------------------------------------------------------------------
def gated_out_final_pallas(y, x0, out_w, out_b, proj_w, proj_b):
    m, d = y.shape
    dmid = out_w.shape[1]
    n = proj_w.shape[1]
    tm = _row_tile(m)

    def kernel(y_ref, g_ref, ow_ref, ob_ref, pw_ref, pb_ref, o_ref):
        h = (jnp.dot(y_ref[...] * g_ref[...], ow_ref[...],
                     preferred_element_type=jnp.float32) + ob_ref[...])
        o_ref[...] = (jnp.dot(h, pw_ref[...], preferred_element_type=jnp.float32)
                      + pb_ref[...])

    x_spec = pl.BlockSpec((tm, d), lambda i: (i, 0))
    return pl.pallas_call(
        kernel,
        out_shape=jax.ShapeDtypeStruct((m, n), _F32),
        grid_spec=_gspec(
            (m // tm,),
            [x_spec, x_spec,
             pl.BlockSpec((d, dmid), lambda i: (0, 0)),
             pl.BlockSpec((1, dmid), lambda i: (0, 0)),
             pl.BlockSpec((dmid, n), lambda i: (0, 0)),
             pl.BlockSpec((1, n), lambda i: (0, 0))],
            pl.BlockSpec((tm, n), lambda i: (i, 0))),
        compiler_params=_PARALLEL_1D,
    )(y, x0, out_w, out_b, proj_w, proj_b)


# --------------------------------------------------------------------------------------
# fftconv (long convolution) -- XLA FFT, matches the torch reference maths.
# Operates directly on the (B, L, D) time-major layout (FFT over axis=1).
# --------------------------------------------------------------------------------------
def fftconv_time_major(u_bld, k_ld, D):
    """u_bld: (B, L, D), k_ld: (L, D), D: (D,)."""
    # TODO(synk): FFT has no Pallas/Mosaic primitive; the long convolution uses XLA's FFT.
    L = u_bld.shape[1]
    fft_size = 2 * L
    k_f = jnp.fft.rfft(k_ld, n=fft_size, axis=0) / (fft_size + 1e-16)
    u_f = jnp.fft.rfft(u_bld, n=fft_size, axis=1) + 1e-16
    y = jnp.fft.irfft(u_f * k_f[None], n=fft_size, axis=1, norm='forward')[:, :L]
    return y + u_bld * D[None, None, :]


# --------------------------------------------------------------------------------------
# parameters (random init with shapes matching the PyTorch module, matmul-ready layouts)
# --------------------------------------------------------------------------------------
def init_params(key, *, vocab=4, emb_dim=192, d_model=192, l_max=64,
                order=2, filter_order=64, filter_emb_dim=3):
    assert emb_dim % 2 == 0, "SinusoidalPosEmb dim must be even"
    assert filter_emb_dim == 3, "only the default emb_dim=3 Hyena filter embedding is implemented"
    assert emb_dim == d_model, "emb_dim must equal cnn_out_channels in this model"
    ks = iter(jax.random.split(key, 32))

    def dense(fan_in, shape):
        return jax.random.normal(next(ks), shape, _F32) / jnp.sqrt(jnp.asarray(fan_in, _F32))

    p = {}
    p['emb_table'] = jax.random.normal(next(ks), (vocab, emb_dim), _F32)

    # SinusoidalPosEmb tables (host-precomputed; cos(x) == sin(x + pi/2))
    half = emb_dim // 2
    freq = jnp.exp(jnp.arange(half, dtype=_F32) * (-math.log(10000.0) / half))
    p['pe_freq'] = jnp.concatenate([freq, freq])[None, :]
    p['pe_phase'] = jnp.concatenate(
        [jnp.zeros((half,), _F32), jnp.full((half,), math.pi / 2, _F32)])[None, :]

    # CNN: Conv1d(k=3) weights as 3 matmul slabs; bias separate (ReLU comes before BN),
    # inference BatchNorm folded to a per-channel affine applied AFTER the ReLU.
    p['cnn_w0'] = dense(3 * emb_dim, (emb_dim, d_model))
    p['cnn_w1'] = dense(3 * emb_dim, (emb_dim, d_model))
    p['cnn_w2'] = dense(3 * emb_dim, (emb_dim, d_model))
    p['cnn_bias'] = dense(3 * emb_dim, (d_model,))[None, :]
    bn_gamma = 1.0 + 0.1 * jax.random.normal(next(ks), (d_model,), _F32)
    bn_beta = 0.1 * jax.random.normal(next(ks), (d_model,), _F32)
    bn_mean = 0.1 * jax.random.normal(next(ks), (d_model,), _F32)
    bn_var = 1.0 + 0.1 * jnp.abs(jax.random.normal(next(ks), (d_model,), _F32))
    bn_scale = bn_gamma / jnp.sqrt(bn_var + 1e-5)
    p['bn_scale'] = bn_scale[None, :]
    p['bn_shift'] = (bn_beta - bn_mean * bn_scale)[None, :]

    # Hyena operator projections + depthwise short filter (k=3, causal).
    iw = d_model * (order + 1)
    p['in_w'] = dense(d_model, (d_model, iw));       p['in_b'] = dense(d_model, (1, iw))
    p['out_w'] = dense(d_model, (d_model, d_model)); p['out_b'] = dense(d_model, (1, d_model))
    p['sf_w0'] = dense(3, (1, iw)); p['sf_w1'] = dense(3, (1, iw)); p['sf_w2'] = dense(3, (1, iw))
    p['sf_b'] = dense(3, (1, iw))

    # HyenaFilter: positional tables z/t, implicit MLP, modulation deltas, bias D.
    d_filt = d_model * (order - 1)
    t = jnp.linspace(0.0, 1.0, l_max, dtype=_F32)[:, None]                     # (l_max, 1)
    t_rescaled = jnp.linspace(0.0, l_max - 1, l_max, dtype=_F32)[:, None]
    w_ang = 2.0 * math.pi * t_rescaled / l_max
    bands = (filter_emb_dim - 1) // 2
    f_bands = jnp.linspace(1e-4, float(bands - 1), bands, dtype=_F32)[None, :]
    p['pe_z'] = jnp.concatenate([t, jnp.cos(f_bands * w_ang), -jnp.sin(f_bands * w_ang)], axis=-1)
    p['pe_t'] = t
    O = filter_order
    p['f_w1'] = dense(filter_emb_dim, (filter_emb_dim, O)); p['f_b1'] = dense(filter_emb_dim, (1, O))
    p['f_w2'] = dense(O, (O, O)); p['f_b2'] = dense(O, (1, O))
    p['f_w3'] = dense(O, (O, O)); p['f_b3'] = dense(O, (1, O))
    p['f_w4'] = dense(O, (O, d_filt))                                          # no bias
    p['f_freq'] = jnp.ones((1, O), _F32)                                       # Sin act, w=1, shared
    max_decay = math.log(0.01 + 1e-16) / 0.3
    min_decay = math.log(0.01 + 1e-16) / 1.5
    p['f_deltas_abs'] = jnp.abs(jnp.linspace(min_decay, max_decay, d_filt, dtype=_F32))[None, :]
    p['filt_bias'] = jax.random.normal(next(ks), (d_filt,), _F32)

    # final projection
    p['proj_w'] = dense(emb_dim, (emb_dim, 2)); p['proj_b'] = dense(emb_dim, (1, 2))
    return p


# --------------------------------------------------------------------------------------
# full forward pass (Pallas kernels + XLA FFT)
# --------------------------------------------------------------------------------------
def rna_cnn_forward(params, batch):
    seq, mask = batch['seq'], batch['mask']
    Lmax = int(jnp.max(jnp.sum(mask, axis=-1)))
    assert Lmax % 8 == 0, "this implementation requires Lmax to be a multiple of 8"
    L = Lmax
    assert L <= params['pe_z'].shape[0], "sequence longer than l_max"
    seq = seq[:, :L]
    B = seq.shape[0]
    vocab, d = params['emb_table'].shape
    M = B * L

    # 1) embedding + sinusoidal positional encoding (fused Pallas kernel)
    onehot = jax.nn.one_hot(seq, vocab, dtype=_F32).reshape(M, vocab)
    pos = jnp.tile(jnp.arange(L, dtype=_F32), (B,)).reshape(M, 1)
    x = embed_posenc_pallas(onehot, pos, params['emb_table'],
                            params['pe_freq'], params['pe_phase'])              # (M, d)

    # 2+3a) CNN block (Conv1d k=3 pad=1 + bias + ReLU + BN) fused with Hyena in_proj
    x_bld = x.reshape(B, L, d)
    xp = jnp.pad(x_bld, ((0, 0), (1, 0), (0, 0)))[:, :L].reshape(M, d)
    xn = jnp.pad(x_bld, ((0, 0), (0, 1), (0, 0)))[:, 1:].reshape(M, d)
    u = conv_bn_relu_inproj_pallas(xp, x, xn,
                                   params['cnn_w0'], params['cnn_w1'], params['cnn_w2'],
                                   params['cnn_bias'], params['bn_scale'], params['bn_shift'],
                                   params['in_w'], params['in_b'])              # (M, 3d)

    # 3b) Hyena depthwise short filter + v*x1 gate
    iw = u.shape[1]
    u_bld = u.reshape(B, L, iw)
    um1 = jnp.pad(u_bld, ((0, 0), (1, 0), (0, 0)))[:, :L].reshape(M, iw)
    um2 = jnp.pad(u_bld, ((0, 0), (2, 0), (0, 0)))[:, :L].reshape(M, iw)
    x0, vg = short_filter_gate_pallas(um2, um1, u,
                                      params['sf_w0'], params['sf_w1'],
                                      params['sf_w2'], params['sf_b'])          # (M, d) each

    # 3c) implicit Hyena filter (MLP + exponential modulation) and long convolution
    k_filt = hyena_filter_pallas(params['pe_z'][:L], params['pe_t'][:L], params)  # (L, d)
    y = fftconv_time_major(vg.reshape(B, L, d), k_filt, params['filt_bias'])      # (B, L, d)

    # 3d+4) x0 gate + out_proj, dropout (identity at inference), final projection
    out = gated_out_final_pallas(y.reshape(M, d), x0,
                                 params['out_w'], params['out_b'],
                                 params['proj_w'], params['proj_b'])            # (M, 2)
    return out.reshape(B, L, 2)


# --------------------------------------------------------------------------------------
# pure-JAX reference (same maths, no Pallas) for correctness checking
# --------------------------------------------------------------------------------------
def forward_reference(params, batch):
    p = params
    seq, mask = batch['seq'], batch['mask']
    L = int(jnp.max(jnp.sum(mask, axis=-1)))
    s = seq[:, :L]
    d = p['emb_table'].shape[1]
    x = p['emb_table'][s]
    half = d // 2
    posv = jnp.arange(L, dtype=_F32)
    freq = jnp.exp(jnp.arange(half, dtype=_F32) * (-math.log(10000.0) / half))
    ang = posv[:, None] * freq[None, :]
    x = x + jnp.concatenate([jnp.sin(ang), jnp.cos(ang)], axis=-1)[None]

    xp = jnp.pad(x, ((0, 0), (1, 0), (0, 0)))[:, :L]
    xn = jnp.pad(x, ((0, 0), (0, 1), (0, 0)))[:, 1:]
    y = xp @ p['cnn_w0'] + x @ p['cnn_w1'] + xn @ p['cnn_w2'] + p['cnn_bias']
    y = jnp.maximum(y, 0.0) * p['bn_scale'] + p['bn_shift']     # Conv -> ReLU -> BN

    u = y @ p['in_w'] + p['in_b']
    um1 = jnp.pad(u, ((0, 0), (1, 0), (0, 0)))[:, :L]
    um2 = jnp.pad(u, ((0, 0), (2, 0), (0, 0)))[:, :L]
    uc = um2 * p['sf_w0'] + um1 * p['sf_w1'] + u * p['sf_w2'] + p['sf_b']
    x0, x1, v = uc[..., :d], uc[..., d:2 * d], uc[..., 2 * d:]

    z, t = p['pe_z'][:L], p['pe_t'][:L]
    h = jnp.sin(p['f_freq'] * (z @ p['f_w1'] + p['f_b1']))
    h = jnp.sin(p['f_freq'] * (h @ p['f_w2'] + p['f_b2']))
    h = jnp.sin(p['f_freq'] * (h @ p['f_w3'] + p['f_b3']))
    k = (h @ p['f_w4']) * jnp.exp(-t * p['f_deltas_abs'] + 1e-16)

    vg = v * x1
    yc = fftconv_time_major(vg, k, p['filt_bias'])
    y = (yc * x0) @ p['out_w'] + p['out_b']
    return y @ p['proj_w'] + p['proj_b']


# --------------------------------------------------------------------------------------
if __name__ == "__main__":
    key = jax.random.PRNGKey(0)
    k_par, k_seq = jax.random.split(key)

    B, L_pad, vocab = 2, 80, 4
    emb_dim, l_max = 192, 64
    params = init_params(k_par, vocab=vocab, emb_dim=emb_dim, d_model=emb_dim,
                         l_max=l_max, order=2, filter_order=64, filter_emb_dim=3)

    seq = jax.random.randint(k_seq, (B, L_pad), 0, vocab, dtype=jnp.int32)
    lengths = jnp.array([64, 48], dtype=jnp.int32)
    mask = (jnp.arange(L_pad)[None, :] < lengths[:, None]).astype(jnp.int32)
    batch = {'seq': seq, 'mask': mask}

    out = jax.block_until_ready(rna_cnn_forward(params, batch))
    assert out.shape == (B, 64, 2), out.shape
    assert bool(jnp.all(jnp.isfinite(out))), "non-finite output"

    ref = jax.block_until_ready(forward_reference(params, batch))
    rel_err = float(jnp.max(jnp.abs(out - ref)) / (jnp.max(jnp.abs(ref)) + 1e-6))
    assert rel_err < 5e-2, f"mismatch vs pure-JAX reference: rel_err={rel_err}"

    print("KERNEL_OK")
</pallas_src>

<mosaic_0001>
module attributes {stable_mosaic.version = 11 : i64} {
  func.func @kernel(%arg0: i32, %arg1: memref<128x4xf32, #tpu.memory_space<vmem>>, %arg2: memref<128x1xf32, #tpu.memory_space<vmem>>, %arg3: memref<4x192xf32, #tpu.memory_space<vmem>>, %arg4: memref<1x192xf32, #tpu.memory_space<vmem>>, %arg5: memref<1x192xf32, #tpu.memory_space<vmem>>, %arg6: memref<128x192xf32, #tpu.memory_space<vmem>>) attributes {dimension_semantics = [#tpu.dimension_semantics<parallel>], iteration_bounds = array<i64: 1>, scalar_prefetch = 0 : i64, scratch_operands = 0 : i64, tpu.core_type = #tpu.core_type<tc>, window_params = [{transform_indices = @transform_0, window_bounds = array<i64: 128, 4>}, {transform_indices = @transform_1, window_bounds = array<i64: 128, 1>}, {pipeline_mode = #tpu.pipeline_mode<synchronous>, transform_indices = @transform_2, window_bounds = array<i64: 4, 192>}, {pipeline_mode = #tpu.pipeline_mode<synchronous>, transform_indices = @transform_3, window_bounds = array<i64: 1, 192>}, {pipeline_mode = #tpu.pipeline_mode<synchronous>, transform_indices = @transform_4, window_bounds = array<i64: 1, 192>}, {transform_indices = @transform_5, window_bounds = array<i64: 128, 192>}]} {
    %c0 = arith.constant 0 : index
    %c0_0 = arith.constant 0 : index
    %0 = vector.load %arg1[%c0, %c0_0] : memref<128x4xf32, #tpu.memory_space<vmem>>, vector<128x4xf32>
    %1 = vector.extract_strided_slice %0 {offsets = [0, 0], sizes = [128, 1], strides = [1, 1]} : vector<128x4xf32> to vector<128x1xf32>
    %c0_1 = arith.constant 0 : index
    %c0_2 = arith.constant 0 : index
    %2 = vector.load %arg3[%c0_1, %c0_2] : memref<4x192xf32, #tpu.memory_space<vmem>>, vector<1x192xf32>
    %3 = vector.broadcast %1 : vector<128x1xf32> to vector<128x192xf32>
    %4 = vector.broadcast %2 : vector<1x192xf32> to vector<128x192xf32>
    %5 = arith.mulf %3, %4 : vector<128x192xf32>
    %6 = vector.extract_strided_slice %0 {offsets = [0, 1], sizes = [128, 1], strides = [1, 1]} : vector<128x4xf32> to vector<128x1xf32>
    %c1 = arith.constant 1 : index
    %c0_3 = arith.constant 0 : index
    %7 = vector.load %arg3[%c1, %c0_3] : memref<4x192xf32, #tpu.memory_space<vmem>>, vector<1x192xf32>
    %8 = vector.broadcast %6 : vector<128x1xf32> to vector<128x192xf32>
    %9 = vector.broadcast %7 : vector<1x192xf32> to vector<128x192xf32>
    %10 = arith.mulf %8, %9 : vector<128x192xf32>
    %11 = arith.addf %5, %10 : vector<128x192xf32>
    %12 = vector.extract_strided_slice %0 {offsets = [0, 2], sizes = [128, 1], strides = [1, 1]} : vector<128x4xf32> to vector<128x1xf32>
    %c2 = arith.constant 2 : index
    %c0_4 = arith.constant 0 : index
    %13 = vector.load %arg3[%c2, %c0_4] : memref<4x192xf32, #tpu.memory_space<vmem>>, vector<1x192xf32>
    %14 = vector.broadcast %12 : vector<128x1xf32> to vector<128x192xf32>
    %15 = vector.broadcast %13 : vector<1x192xf32> to vector<128x192xf32>
    %16 = arith.mulf %14, %15 : vector<128x192xf32>
    %17 = arith.addf %11, %16 : vector<128x192xf32>
    %18 = vector.extract_strided_slice %0 {offsets = [0, 3], sizes = [128, 1], strides = [1, 1]} : vector<128x4xf32> to vector<128x1xf32>
    %c3 = arith.constant 3 : index
    %c0_5 = arith.constant 0 : index
    %19 = vector.load %arg3[%c3, %c0_5] : memref<4x192xf32, #tpu.memory_space<vmem>>, vector<1x192xf32>
    %20 = vector.broadcast %18 : vector<128x1xf32> to vector<128x192xf32>
    %21 = vector.broadcast %19 : vector<1x192xf32> to vector<128x192xf32>
    %22 = arith.mulf %20, %21 : vector<128x192xf32>
    %23 = arith.addf %17, %22 : vector<128x192xf32>
    %c0_6 = arith.constant 0 : index
    %c0_7 = arith.constant 0 : index
    %24 = vector.load %arg2[%c0_6, %c0_7] : memref<128x1xf32, #tpu.memory_space<vmem>>, vector<128x1xf32>
    %c0_8 = arith.constant 0 : index
    %c0_9 = arith.constant 0 : index
    %25 = vector.load %arg4[%c0_8, %c0_9] : memref<1x192xf32, #tpu.memory_space<vmem>>, vector<1x192xf32>
    %26 = vector.broadcast %24 : vector<128x1xf32> to vector<128x192xf32>
    %27 = vector.broadcast %25 : vector<1x192xf32> to vector<128x192xf32>
    %28 = arith.mulf %26, %27 : vector<128x192xf32>
    %c0_10 = arith.constant 0 : index
    %c0_11 = arith.constant 0 : index
    %29 = vector.load %arg5[%c0_10, %c0_11] : memref<1x192xf32, #tpu.memory_space<vmem>>, vector<1x192xf32>
    %30 = vector.broadcast %29 : vector<1x192xf32> to vector<128x192xf32>
    %31 = arith.addf %28, %30 : vector<128x192xf32>
    %32 = math.sin %31 : vector<128x192xf32>
    %33 = arith.addf %23, %32 : vector<128x192xf32>
    %c0_12 = arith.constant 0 : index
    %c0_13 = arith.constant 0 : index
    %34 = vector.load %arg6[%c0_12, %c0_13] : memref<128x192xf32, #tpu.memory_space<vmem>>, vector<128x192xf32>
    tpu.vector_store %arg6[%c0_12, %c0_13], %33 {strides = array<i32>} : memref<128x192xf32, #tpu.memory_space<vmem>>, vector<128x192xf32>,
    return
  }
  func.func @transform_0(%arg0: i32) -> (i32, i32) {
    %c0_i32 = arith.constant 0 : i32
    %c0_i32_0 = arith.constant 0 : i32
    return %arg0, %c0_i32 : i32, i32
  }
  func.func @transform_1(%arg0: i32) -> (i32, i32) {
    %c0_i32 = arith.constant 0 : i32
    %c0_i32_0 = arith.constant 0 : i32
    return %arg0, %c0_i32 : i32, i32
  }
  func.func @transform_2(%arg0: i32) -> (i32, i32) {
    %c0_i32 = arith.constant 0 : i32
    %c0_i32_0 = arith.constant 0 : i32
    %c0_i32_1 = arith.constant 0 : i32
    return %c0_i32, %c0_i32_0 : i32, i32
  }
  func.func @transform_3(%arg0: i32) -> (i32, i32) {
    %c0_i32 = arith.constant 0 : i32
    %c0_i32_0 = arith.constant 0 : i32
    %c0_i32_1 = arith.constant 0 : i32
    return %c0_i32, %c0_i32_0 : i32, i32
  }
  func.func @transform_4(%arg0: i32) -> (i32, i32) {
    %c0_i32 = arith.constant 0 : i32
    %c0_i32_0 = arith.constant 0 : i32
    %c0_i32_1 = arith.constant 0 : i32
    return %c0_i32, %c0_i32_0 : i32, i32
  }
  func.func @transform_5(%arg0: i32) -> (i32, i32) {
    %c0_i32 = arith.constant 0 : i32
    %c0_i32_0 = arith.constant 0 : i32
    return %arg0, %c0_i32 : i32, i32
  }
}

</mosaic_0001>

<llo_original>
// kernel: tpu_custom_call.1
$region0: #{tpu_custom_call.1}
  #allocation0 [shape = 'u32[]', space=smem, size = 0x4, offset = 0x4, fixed_abs, tag = 'smem constant byte address 0x4 - core index']
  #allocation1 [shape = 'u32[144,128]{1,0:T(1,128)}', space=vmem, size = 0x12000, scoped, tag = 'internal scratch']
  %s0 = inlined_call_operand.vmem [shape: f32[128,4], index: 0, kind: input, shape index: {}]
  %s1 = inlined_call_operand.vmem [shape: f32[128,1], index: 1, kind: input, shape index: {}]
  %s2 = inlined_call_operand.vmem [shape: f32[4,192], index: 2, kind: input, shape index: {}]
  %s3 = inlined_call_operand.vmem [shape: f32[1,192], index: 3, kind: input, shape index: {}]
  %s4 = inlined_call_operand.vmem [shape: f32[1,192], index: 4, kind: input, shape index: {}]
  %s5 = inlined_call_operand.vmem [shape: f32[128,192], index: 5, kind: output, shape index: {}]
  %s6 = sld [smem:[#allocation0]]
  $region30: #{tpu_custom_call.1} parent=0
    _
  %s8 = ssub.s32 1, %s6
  %s9 = scalar_select 0, %s8, %s6
  // Predicated region
  $region2: #{tpu_custom_call.1} parent=0 // pred_check
    _
  $region3: #{tpu_custom_call.1} parent=0 // pred_check_branch
    %11 = sbr.rel (0) target = $region5
  $region4: #{tpu_custom_call.1} parent=0 // pred_region
    _
  $region5: #{tpu_custom_call.1} parent=0 // pred_fallthru
    _
  // Predicated region
  $region6: #{tpu_custom_call.1} parent=0 // pred_check
    _
  $region7: #{tpu_custom_call.1} parent=0 // pred_check_branch
    %13 = sbr.rel (0) target = $region9
  $region8: #{tpu_custom_call.1} parent=0 // pred_region
    _
  $region9: #{tpu_custom_call.1} parent=0 // pred_fallthru
    _
  // Predicated region
  $region10: #{tpu_custom_call.1} parent=0 // pred_check
    _
  $region11: #{tpu_custom_call.1} parent=0 // pred_check_branch
    %15 = sbr.rel (0) target = $region13
  $region12: #{tpu_custom_call.1} parent=0 // pred_region
    _
  $region13: #{tpu_custom_call.1} parent=0 // pred_fallthru
    _
  // Predicated region
  $region14: #{tpu_custom_call.1} parent=0 // pred_check
    _
  $region15: #{tpu_custom_call.1} parent=0 // pred_check_branch
    %17 = sbr.rel (0) target = $region17
  $region16: #{tpu_custom_call.1} parent=0 // pred_region
    _
  $region17: #{tpu_custom_call.1} parent=0 // pred_fallthru
    _
  // Predicated region
  $region18: #{tpu_custom_call.1} parent=0 // pred_check
    _
  $region19: #{tpu_custom_call.1} parent=0 // pred_check_branch
    %19 = sbr.rel (0) target = $region21
  $region20: #{tpu_custom_call.1} parent=0 // pred_region
    _
  $region21: #{tpu_custom_call.1} parent=0 // pred_fallthru
    _
  %v20 = vld [vmem:[%s0] sm:$0xff]
  %v21 = vld [vmem:[%s0 + $0x8] sm:$0xff]
  %v22 = vld [vmem:[%s0 + $0x10] sm:$0xff]
  %v23 = vld [vmem:[%s0 + $0x18] sm:$0xff]
  %v24 = vld [vmem:[%s0 + $0x20] sm:$0xff]
  %v25 = vld [vmem:[%s0 + $0x28] sm:$0xff]
  %v26 = vld [vmem:[%s0 + $0x30] sm:$0xff]
  %v27 = vld [vmem:[%s0 + $0x38] sm:$0xff]
  %v28 = vld [vmem:[%s0 + $0x40] sm:$0xff]
  %v29 = vld [vmem:[%s0 + $0x48] sm:$0xff]
  %v30 = vld [vmem:[%s0 + $0x50] sm:$0xff]
  %v31 = vld [vmem:[%s0 + $0x58] sm:$0xff]
  %v32 = vld [vmem:[%s0 + $0x60] sm:$0xff]
  %v33 = vld [vmem:[%s0 + $0x68] sm:$0xff]
  %v34 = vld [vmem:[%s0 + $0x70] sm:$0xff]
  %v35 = vld [vmem:[%s0 + $0x78] sm:$0xff]
  %v36 = vld [vmem:[%s2] ss:$4 sm:$0x3]
  %38 = vset.pattern.permute.xlu0 0
  %39 = vperm.xlu0 %38, %v20
  %v40 = vpop.permute.xlu0 %39
  %43 = vset.pattern.permute.xlu0 0
  %44 = vperm.xlu0 %43, %v21
  %v45 = vpop.permute.xlu0 %44
  %48 = vset.pattern.permute.xlu0 0
  %49 = vperm.xlu0 %48, %v22
  %v50 = vpop.permute.xlu0 %49
  %53 = vset.pattern.permute.xlu0 0
  %54 = vperm.xlu0 %53, %v23
  %v55 = vpop.permute.xlu0 %54
  %58 = vset.pattern.permute.xlu0 0
  %59 = vperm.xlu0 %58, %v24
  %v60 = vpop.permute.xlu0 %59
  %63 = vset.pattern.permute.xlu0 0
  %64 = vperm.xlu0 %63, %v25
  %v65 = vpop.permute.xlu0 %64
  %68 = vset.pattern.permute.xlu0 0
  %69 = vperm.xlu0 %68, %v26
  %v70 = vpop.permute.xlu0 %69
  %73 = vset.pattern.permute.xlu0 0
  %74 = vperm.xlu0 %73, %v27
  %v75 = vpop.permute.xlu0 %74
  %78 = vset.pattern.permute.xlu0 0
  %79 = vperm.xlu0 %78, %v28
  %v80 = vpop.permute.xlu0 %79
  %83 = vset.pattern.permute.xlu0 0
  %84 = vperm.xlu0 %83, %v29
  %v85 = vpop.permute.xlu0 %84
  %88 = vset.pattern.permute.xlu0 0
  %89 = vperm.xlu0 %88, %v30
  %v90 = vpop.permute.xlu0 %89
  %93 = vset.pattern.permute.xlu0 0
  %94 = vperm.xlu0 %93, %v31
  %v95 = vpop.permute.xlu0 %94
  %98 = vset.pattern.permute.xlu0 0
  %99 = vperm.xlu0 %98, %v32
  %v100 = vpop.permute.xlu0 %99
  %103 = vset.pattern.permute.xlu0 0
  %104 = vperm.xlu0 %103, %v33
  %v105 = vpop.permute.xlu0 %104
  %108 = vset.pattern.permute.xlu0 0
  %109 = vperm.xlu0 %108, %v34
  %v110 = vpop.permute.xlu0 %109
  %113 = vset.pattern.permute.xlu0 0
  %114 = vperm.xlu0 %113, %v35
  %v115 = vpop.permute.xlu0 %114
  %v118 = vlaneseq
  %v119 = vshrl.u32 %v118, 7
  %v120 = vsub.s32 0, %v119
  %v121 = vrot.slane %v36, %v120
  %v122 = vlaneseq
  %v123 = vshrl.u32 %v122, 7
  %v124 = vsub.s32 1, %v123
  %v125 = vrot.slane %v36, %v124
  %v128 = vmul.f32 %v40, %v121
  %v129 = vmul.f32 %v40, %v125
  %v130 = vmul.f32 %v45, %v121
  %v131 = vmul.f32 %v45, %v125
  %v132 = vmul.f32 %v50, %v121
  %v133 = vmul.f32 %v50, %v125
  %v134 = vmul.f32 %v55, %v121
  %v135 = vmul.f32 %v55, %v125
  %v136 = vmul.f32 %v60, %v121
  %v137 = vmul.f32 %v60, %v125
  %v138 = vmul.f32 %v65, %v121
  %v139 = vmul.f32 %v65, %v125
  %v140 = vmul.f32 %v70, %v121
  %v141 = vmul.f32 %v70, %v125
  %v142 = vmul.f32 %v75, %v121
  %v143 = vmul.f32 %v75, %v125
  %v144 = vmul.f32 %v80, %v121
  %v145 = vmul.f32 %v80, %v125
  %v146 = vmul.f32 %v85, %v121
  %v147 = vmul.f32 %v85, %v125
  %v148 = vmul.f32 %v90, %v121
  %v149 = vmul.f32 %v90, %v125
  %v150 = vmul.f32 %v95, %v121
  %v151 = vmul.f32 %v95, %v125
  %v152 = vmul.f32 %v100, %v121
  %v153 = vmul.f32 %v100, %v125
  %v154 = vmul.f32 %v105, %v121
  %v155 = vmul.f32 %v105, %v125
  %v156 = vmul.f32 %v110, %v121
  %v157 = vmul.f32 %v110, %v125
  %v158 = vmul.f32 %v115, %v121
  %v159 = vmul.f32 %v115, %v125
  %s160 = scalar_lea.vmem %s2, 1
  %v161 = vld [vmem:[%s160] ss:$4 sm:$0x3]
  %162 = vset.pattern.permute.xlu0 1
  %163 = vperm.xlu0 %162, %v20
  %v164 = vpop.permute.xlu0 %163
  %166 = vset.pattern.permute.xlu0 1
  %167 = vperm.xlu0 %166, %v21
  %v168 = vpop.permute.xlu0 %167
  %170 = vset.pattern.permute.xlu0 1
  %171 = vperm.xlu0 %170, %v22
  %v172 = vpop.permute.xlu0 %171
  %174 = vset.pattern.permute.xlu0 1
  %175 = vperm.xlu0 %174, %v23
  %v176 = vpop.permute.xlu0 %175
  %178 = vset.pattern.permute.xlu0 1
  %179 = vperm.xlu0 %178, %v24
  %v180 = vpop.permute.xlu0 %179
  %182 = vset.pattern.permute.xlu0 1
  %183 = vperm.xlu0 %182, %v25
  %v184 = vpop.permute.xlu0 %183
  %186 = vset.pattern.permute.xlu0 1
  %187 = vperm.xlu0 %186, %v26
  %v188 = vpop.permute.xlu0 %187
  %190 = vset.pattern.permute.xlu0 1
  %191 = vperm.xlu0 %190, %v27
  %v192 = vpop.permute.xlu0 %191
  %194 = vset.pattern.permute.xlu0 1
  %195 = vperm.xlu0 %194, %v28
  %v196 = vpop.permute.xlu0 %195
  %198 = vset.pattern.permute.xlu0 1
  %199 = vperm.xlu0 %198, %v29
  %v200 = vpop.permute.xlu0 %199
  %202 = vset.pattern.permute.xlu0 1
  %203 = vperm.xlu0 %202, %v30
  %v204 = vpop.permute.xlu0 %203
  %206 = vset.pattern.permute.xlu0 1
  %207 = vperm.xlu0 %206, %v31
  %v208 = vpop.permute.xlu0 %207
  %210 = vset.pattern.permute.xlu0 1
  %211 = vperm.xlu0 %210, %v32
  %v212 = vpop.permute.xlu0 %211
  %214 = vset.pattern.permute.xlu0 1
  %215 = vperm.xlu0 %214, %v33
  %v216 = vpop.permute.xlu0 %215
  %218 = vset.pattern.permute.xlu0 1
  %219 = vperm.xlu0 %218, %v34
  %v220 = vpop.permute.xlu0 %219
  %222 = vset.pattern.permute.xlu0 1
  %223 = vperm.xlu0 %222, %v35
  %v224 = vpop.permute.xlu0 %223
  %v227 = vlaneseq
  %v228 = vshrl.u32 %v227, 7
  %v229 = vsub.s32 0, %v228
  %v230 = vrot.slane %v161, %v229
  %v231 = vlaneseq
  %v232 = vshrl.u32 %v231, 7
  %v233 = vsub.s32 1, %v232
  %v234 = vrot.slane %v161, %v233
  %v237 = vmul.f32 %v164, %v230
  %v238 = vmul.f32 %v164, %v234
  %v239 = vmul.f32 %v168, %v230
  %v240 = vmul.f32 %v168, %v234
  %v241 = vmul.f32 %v172, %v230
  %v242 = vmul.f32 %v172, %v234
  %v243 = vmul.f32 %v176, %v230
  %v244 = vmul.f32 %v176, %v234
  %v245 = vmul.f32 %v180, %v230
  %v246 = vmul.f32 %v180, %v234
  %v247 = vmul.f32 %v184, %v230
  %v248 = vmul.f32 %v184, %v234
  %v249 = vmul.f32 %v188, %v230
  %v250 = vmul.f32 %v188, %v234
  %v251 = vmul.f32 %v192, %v230
  %v252 = vmul.f32 %v192, %v234
  %v253 = vmul.f32 %v196, %v230
  %v254 = vmul.f32 %v196, %v234
  %v255 = vmul.f32 %v200, %v230
  %v256 = vmul.f32 %v200, %v234
  %v257 = vmul.f32 %v204, %v230
  %v258 = vmul.f32 %v204, %v234
  %v259 = vmul.f32 %v208, %v230
  %v260 = vmul.f32 %v208, %v234
  %v261 = vmul.f32 %v212, %v230
  %v262 = vmul.f32 %v212, %v234
  %v263 = vmul.f32 %v216, %v230
  %v264 = vmul.f32 %v216, %v234
  %v265 = vmul.f32 %v220, %v230
  %v266 = vmul.f32 %v220, %v234
  %v267 = vmul.f32 %v224, %v230
  %v268 = vmul.f32 %v224, %v234
  %v269 = vadd.f32 %v128, %v237
  %v270 = vadd.f32 %v129, %v238
  %v271 = vadd.f32 %v130, %v239
  %v272 = vadd.f32 %v131, %v240
  %v273 = vadd.f32 %v132, %v241
  %v274 = vadd.f32 %v133, %v242
  %v275 = vadd.f32 %v134, %v243
  %v276 = vadd.f32 %v135, %v244
  %v277 = vadd.f32 %v136, %v245
  %v278 = vadd.f32 %v137, %v246
  %v279 = vadd.f32 %v138, %v247
  %v280 = vadd.f32 %v139, %v248
  %v281 = vadd.f32 %v140, %v249
  %v282 = vadd.f32 %v141, %v250
  %v283 = vadd.f32 %v142, %v251
  %v284 = vadd.f32 %v143, %v252
  %v285 = vadd.f32 %v144, %v253
  %v286 = vadd.f32 %v145, %v254
  %v287 = vadd.f32 %v146, %v255
  %v288 = vadd.f32 %v147, %v256
  %v289 = vadd.f32 %v148, %v257
  %v290 = vadd.f32 %v149, %v258
  %v291 = vadd.f32 %v150, %v259
  %v292 = vadd.f32 %v151, %v260
  %v293 = vadd.f32 %v152, %v261
  %v294 = vadd.f32 %v153, %v262
  %v295 = vadd.f32 %v154, %v263
  %v296 = vadd.f32 %v155, %v264
  %v297 = vadd.f32 %v156, %v265
  %v298 = vadd.f32 %v157, %v266
  %v299 = vadd.f32 %v158, %v267
  %v300 = vadd.f32 %v159, %v268
  %s301 = scalar_lea.vmem %s2, 2
  %v302 = vld [vmem:[%s301] ss:$4 sm:$0x3]
  %303 = vset.pattern.permute.xlu0 2
  %304 = vperm.xlu0 %303, %v20
  %v305 = vpop.permute.xlu0 %304
  %307 = vset.pattern.permute.xlu0 2
  %308 = vperm.xlu0 %307, %v21
  %v309 = vpop.permute.xlu0 %308
  %311 = vset.pattern.permute.xlu0 2
  %312 = vperm.xlu0 %311, %v22
  %v313 = vpop.permute.xlu0 %312
  %315 = vset.pattern.permute.xlu0 2
  %316 = vperm.xlu0 %315, %v23
  %v317 = vpop.permute.xlu0 %316
  %319 = vset.pattern.permute.xlu0 2
  %320 = vperm.xlu0 %319, %v24
  %v321 = vpop.permute.xlu0 %320
  %323 = vset.pattern.permute.xlu0 2
  %324 = vperm.xlu0 %323, %v25
  %v325 = vpop.permute.xlu0 %324
  %327 = vset.pattern.permute.xlu0 2
  %328 = vperm.xlu0 %327, %v26
  %v329 = vpop.permute.xlu0 %328
  %331 = vset.pattern.permute.xlu0 2
  %332 = vperm.xlu0 %331, %v27
  %v333 = vpop.permute.xlu0 %332
  %335 = vset.pattern.permute.xlu0 2
  %336 = vperm.xlu0 %335, %v28
  %v337 = vpop.permute.xlu0 %336
  %339 = vset.pattern.permute.xlu0 2
  %340 = vperm.xlu0 %339, %v29
  %v341 = vpop.permute.xlu0 %340
  %343 = vset.pattern.permute.xlu0 2
  %344 = vperm.xlu0 %343, %v30
  %v345 = vpop.permute.xlu0 %344
  %347 = vset.pattern.permute.xlu0 2
  %348 = vperm.xlu0 %347, %v31
  %v349 = vpop.permute.xlu0 %348
  %351 = vset.pattern.permute.xlu0 2
  %352 = vperm.xlu0 %351, %v32
  %v353 = vpop.permute.xlu0 %352
  %355 = vset.pattern.permute.xlu0 2
  %356 = vperm.xlu0 %355, %v33
  %v357 = vpop.permute.xlu0 %356
  %359 = vset.pattern.permute.xlu0 2
  %360 = vperm.xlu0 %359, %v34
  %v361 = vpop.permute.xlu0 %360
  %363 = vset.pattern.permute.xlu0 2
  %364 = vperm.xlu0 %363, %v35
  %v365 = vpop.permute.xlu0 %364
  %v368 = vlaneseq
  %v369 = vshrl.u32 %v368, 7
  %v370 = vsub.s32 0, %v369
  %v371 = vrot.slane %v302, %v370
  %v372 = vlaneseq
  %v373 = vshrl.u32 %v372, 7
  %v374 = vsub.s32 1, %v373
  %v375 = vrot.slane %v302, %v374
  %v378 = vmul.f32 %v305, %v371
  %v379 = vmul.f32 %v305, %v375
  %v380 = vmul.f32 %v309, %v371
  %v381 = vmul.f32 %v309, %v375
  %v382 = vmul.f32 %v313, %v371
  %v383 = vmul.f32 %v313, %v375
  %v384 = vmul.f32 %v317, %v371
  %v385 = vmul.f32 %v317, %v375
  %v386 = vmul.f32 %v321, %v371
  %v387 = vmul.f32 %v321, %v375
  %v388 = vmul.f32 %v325, %v371
  %v389 = vmul.f32 %v325, %v375
  %v390 = vmul.f32 %v329, %v371
  %v391 = vmul.f32 %v329, %v375
  %v392 = vmul.f32 %v333, %v371
  %v393 = vmul.f32 %v333, %v375
  %v394 = vmul.f32 %v337, %v371
  %v395 = vmul.f32 %v337, %v375
  %v396 = vmul.f32 %v341, %v371
  %v397 = vmul.f32 %v341, %v375
  %v398 = vmul.f32 %v345, %v371
  %v399 = vmul.f32 %v345, %v375
  %v400 = vmul.f32 %v349, %v371
  %v401 = vmul.f32 %v349, %v375
  %v402 = vmul.f32 %v353, %v371
  %v403 = vmul.f32 %v353, %v375
  %v404 = vmul.f32 %v357, %v371
  %v405 = vmul.f32 %v357, %v375
  %v406 = vmul.f32 %v361, %v371
  %v407 = vmul.f32 %v361, %v375
  %v408 = vmul.f32 %v365, %v371
  %v409 = vmul.f32 %v365, %v375
  %v410 = vadd.f32 %v269, %v378
  %v411 = vadd.f32 %v270, %v379
  %v412 = vadd.f32 %v271, %v380
  %v413 = vadd.f32 %v272, %v381
  %v414 = vadd.f32 %v273, %v382
  %v415 = vadd.f32 %v274, %v383
  %v416 = vadd.f32 %v275, %v384
  %v417 = vadd.f32 %v276, %v385
  %v418 = vadd.f32 %v277, %v386
  %v419 = vadd.f32 %v278, %v387
  %v420 = vadd.f32 %v279, %v388
  %v421 = vadd.f32 %v280, %v389
  %v422 = vadd.f32 %v281, %v390
  %v423 = vadd.f32 %v282, %v391
  %v424 = vadd.f32 %v283, %v392
  %v425 = vadd.f32 %v284, %v393
  %v426 = vadd.f32 %v285, %v394
  %v427 = vadd.f32 %v286, %v395
  %v428 = vadd.f32 %v287, %v396
  %v429 = vadd.f32 %v288, %v397
  %v430 = vadd.f32 %v289, %v398
  %v431 = vadd.f32 %v290, %v399
  %v432 = vadd.f32 %v291, %v400
  %v433 = vadd.f32 %v292, %v401
  %v434 = vadd.f32 %v293, %v402
  %v435 = vadd.f32 %v294, %v403
  %v436 = vadd.f32 %v295, %v404
  %v437 = vadd.f32 %v296, %v405
  %v438 = vadd.f32 %v297, %v406
  %v439 = vadd.f32 %v298, %v407
  %v440 = vadd.f32 %v299, %v408
  %v441 = vadd.f32 %v300, %v409
  %s442 = scalar_lea.vmem %s2, 3
  %v443 = vld [vmem:[%s442] ss:$4 sm:$0x3]
  %444 = vset.pattern.permute.xlu0 3
  %445 = vperm.xlu0 %444, %v20
  %v446 = vpop.permute.xlu0 %445
  %448 = vset.pattern.permute.xlu0 3
  %449 = vperm.xlu0 %448, %v21
  %v450 = vpop.permute.xlu0 %449
  %452 = vset.pattern.permute.xlu0 3
  %453 = vperm.xlu0 %452, %v22
  %v454 = vpop.permute.xlu0 %453
  %456 = vset.pattern.permute.xlu0 3
  %457 = vperm.xlu0 %456, %v23
  %v458 = vpop.permute.xlu0 %457
  %460 = vset.pattern.permute.xlu0 3
  %461 = vperm.xlu0 %460, %v24
  %v462 = vpop.permute.xlu0 %461
  %464 = vset.pattern.permute.xlu0 3
  %465 = vperm.xlu0 %464, %v25
  %v466 = vpop.permute.xlu0 %465
  %468 = vset.pattern.permute.xlu0 3
  %469 = vperm.xlu0 %468, %v26
  %v470 = vpop.permute.xlu0 %469
  %472 = vset.pattern.permute.xlu0 3
  %473 = vperm.xlu0 %472, %v27
  %v474 = vpop.permute.xlu0 %473
  %476 = vset.pattern.permute.xlu0 3
  %477 = vperm.xlu0 %476, %v28
  %v478 = vpop.permute.xlu0 %477
  %480 = vset.pattern.permute.xlu0 3
  %481 = vperm.xlu0 %480, %v29
  %v482 = vpop.permute.xlu0 %481
  %484 = vset.pattern.permute.xlu0 3
  %485 = vperm.xlu0 %484, %v30
  %v486 = vpop.permute.xlu0 %485
  %488 = vset.pattern.permute.xlu0 3
  %489 = vperm.xlu0 %488, %v31
  %v490 = vpop.permute.xlu0 %489
  %492 = vset.pattern.permute.xlu0 3
  %493 = vperm.xlu0 %492, %v32
  %v494 = vpop.permute.xlu0 %493
  %496 = vset.pattern.permute.xlu0 3
  %497 = vperm.xlu0 %496, %v33
  %v498 = vpop.permute.xlu0 %497
  %500 = vset.pattern.permute.xlu0 3
  %501 = vperm.xlu0 %500, %v34
  %v502 = vpop.permute.xlu0 %501
  %504 = vset.pattern.permute.xlu0 3
  %505 = vperm.xlu0 %504, %v35
  %v506 = vpop.permute.xlu0 %505
  %v509 = vlaneseq
  %v510 = vshrl.u32 %v509, 7
  %v511 = vsub.s32 0, %v510
  %v512 = vrot.slane %v443, %v511
  %v513 = vlaneseq
  %v514 = vshrl.u32 %v513, 7
  %v515 = vsub.s32 1, %v514
  %v516 = vrot.slane %v443, %v515
  %v519 = vmul.f32 %v446, %v512
  %v520 = vmul.f32 %v446, %v516
  %v521 = vmul.f32 %v450, %v512
  %v522 = vmul.f32 %v450, %v516
  %v523 = vmul.f32 %v454, %v512
  %v524 = vmul.f32 %v454, %v516
  %v525 = vmul.f32 %v458, %v512
  %v526 = vmul.f32 %v458, %v516
  %v527 = vmul.f32 %v462, %v512
  %v528 = vmul.f32 %v462, %v516
  %v529 = vmul.f32 %v466, %v512
  %v530 = vmul.f32 %v466, %v516
  %v531 = vmul.f32 %v470, %v512
  %v532 = vmul.f32 %v470, %v516
  %v533 = vmul.f32 %v474, %v512
  %v534 = vmul.f32 %v474, %v516
  %v535 = vmul.f32 %v478, %v512
  %v536 = vmul.f32 %v478, %v516
  %v537 = vmul.f32 %v482, %v512
  %v538 = vmul.f32 %v482, %v516
  %v539 = vmul.f32 %v486, %v512
  %v540 = vmul.f32 %v486, %v516
  %v541 = vmul.f32 %v490, %v512
  %v542 = vmul.f32 %v490, %v516
  %v543 = vmul.f32 %v494, %v512
  %v544 = vmul.f32 %v494, %v516
  %v545 = vmul.f32 %v498, %v512
  %v546 = vmul.f32 %v498, %v516
  %v547 = vmul.f32 %v502, %v512
  %v548 = vmul.f32 %v502, %v516
  %v549 = vmul.f32 %v506, %v512
  %v550 = vmul.f32 %v506, %v516
  %v551 = vadd.f32 %v410, %v519
  %v552 = vadd.f32 %v411, %v520
  %v553 = vadd.f32 %v412, %v521
  %v554 = vadd.f32 %v413, %v522
  %v555 = vadd.f32 %v414, %v523
  %v556 = vadd.f32 %v415, %v524
  %v557 = vadd.f32 %v416, %v525
  %v558 = vadd.f32 %v417, %v526
  %v559 = vadd.f32 %v418, %v527
  %v560 = vadd.f32 %v419, %v528
  %v561 = vadd.f32 %v420, %v529
  %v562 = vadd.f32 %v421, %v530
  %v563 = vadd.f32 %v422, %v531
  %v564 = vadd.f32 %v423, %v532
  %v565 = vadd.f32 %v424, %v533
  %v566 = vadd.f32 %v425, %v534
  %v567 = vadd.f32 %v426, %v535
  %v568 = vadd.f32 %v427, %v536
  %v569 = vadd.f32 %v428, %v537
  %v570 = vadd.f32 %v429, %v538
  %v571 = vadd.f32 %v430, %v539
  %v572 = vadd.f32 %v431, %v540
  %v573 = vadd.f32 %v432, %v541
  %v574 = vadd.f32 %v433, %v542
  %v575 = vadd.f32 %v434, %v543
  %v576 = vadd.f32 %v435, %v544
  %v577 = vadd.f32 %v436, %v545
  %v578 = vadd.f32 %v437, %v546
  %v579 = vadd.f32 %v438, %v547
  %v580 = vadd.f32 %v439, %v548
  %v581 = vadd.f32 %v440, %v549
  %v582 = vadd.f32 %v441, %v550
  %v583 = vld [vmem:[%s1] sm:$0xff]
  %v584 = vld [vmem:[%s1 + $0x8] sm:$0xff]
  %v585 = vld [vmem:[%s1 + $0x10] sm:$0xff]
  %v586 = vld [vmem:[%s1 + $0x18] sm:$0xff]
  %v587 = vld [vmem:[%s1 + $0x20] sm:$0xff]
  %v588 = vld [vmem:[%s1 + $0x28] sm:$0xff]
  %v589 = vld [vmem:[%s1 + $0x30] sm:$0xff]
  %v590 = vld [vmem:[%s1 + $0x38] sm:$0xff]
  %v591 = vld [vmem:[%s1 + $0x40] sm:$0xff]
  %v592 = vld [vmem:[%s1 + $0x48] sm:$0xff]
  %v593 = vld [vmem:[%s1 + $0x50] sm:$0xff]
  %v594 = vld [vmem:[%s1 + $0x58] sm:$0xff]
  %v595 = vld [vmem:[%s1 + $0x60] sm:$0xff]
  %v596 = vld [vmem:[%s1 + $0x68] sm:$0xff]
  %v597 = vld [vmem:[%s1 + $0x70] sm:$0xff]
  %v598 = vld [vmem:[%s1 + $0x78] sm:$0xff]
  %v599 = vld [vmem:[%s3] sm:$0x3]
  %601 = vset.pattern.permute.xlu0 0
  %602 = vperm.xlu0 %601, %v583
  %v603 = vpop.permute.xlu0 %602
  %606 = vset.pattern.permute.xlu0 0
  %607 = vperm.xlu0 %606, %v584
  %v608 = vpop.permute.xlu0 %607
  %611 = vset.pattern.permute.xlu0 0
  %612 = vperm.xlu0 %611, %v585
  %v613 = vpop.permute.xlu0 %612
  %616 = vset.pattern.permute.xlu0 0
  %617 = vperm.xlu0 %616, %v586
  %v618 = vpop.permute.xlu0 %617
  %621 = vset.pattern.permute.xlu0 0
  %622 = vperm.xlu0 %621, %v587
  %v623 = vpop.permute.xlu0 %622
  %626 = vset.pattern.permute.xlu0 0
  %627 = vperm.xlu0 %626, %v588
  %v628 = vpop.permute.xlu0 %627
  %631 = vset.pattern.permute.xlu0 0
  %632 = vperm.xlu0 %631, %v589
  %v633 = vpop.permute.xlu0 %632
  %636 = vset.pattern.permute.xlu0 0
  %637 = vperm.xlu0 %636, %v590
  %v638 = vpop.permute.xlu0 %637
  %641 = vset.pattern.permute.xlu0 0
  %642 = vperm.xlu0 %641, %v591
  %v643 = vpop.permute.xlu0 %642
  %646 = vset.pattern.permute.xlu0 0
  %647 = vperm.xlu0 %646, %v592
  %v648 = vpop.permute.xlu0 %647
  %651 = vset.pattern.permute.xlu0 0
  %652 = vperm.xlu0 %651, %v593
  %v653 = vpop.permute.xlu0 %652
  %656 = vset.pattern.permute.xlu0 0
  %657 = vperm.xlu0 %656, %v594
  %v658 = vpop.permute.xlu0 %657
  %661 = vset.pattern.permute.xlu0 0
  %662 = vperm.xlu0 %661, %v595
  %v663 = vpop.permute.xlu0 %662
  %666 = vset.pattern.permute.xlu0 0
  %667 = vperm.xlu0 %666, %v596
  %v668 = vpop.permute.xlu0 %667
  %671 = vset.pattern.permute.xlu0 0
  %672 = vperm.xlu0 %671, %v597
  %v673 = vpop.permute.xlu0 %672
  %676 = vset.pattern.permute.xlu0 0
  %677 = vperm.xlu0 %676, %v598
  %v678 = vpop.permute.xlu0 %677
  %v681 = vlaneseq
  %v682 = vshrl.u32 %v681, 7
  %v683 = vsub.s32 0, %v682
  %v684 = vrot.slane %v599, %v683
  %v685 = vlaneseq
  %v686 = vshrl.u32 %v685, 7
  %v687 = vsub.s32 1, %v686
  %v688 = vrot.slane %v599, %v687
  %v691 = vmul.f32 %v603, %v684
  %v692 = vmul.f32 %v603, %v688
  %v693 = vmul.f32 %v608, %v684
  %v694 = vmul.f32 %v608, %v688
  %v695 = vmul.f32 %v613, %v684
  %v696 = vmul.f32 %v613, %v688
  %v697 = vmul.f32 %v618, %v684
  %v698 = vmul.f32 %v618, %v688
  %v699 = vmul.f32 %v623, %v684
  %v700 = vmul.f32 %v623, %v688
  %v701 = vmul.f32 %v628, %v684
  %v702 = vmul.f32 %v628, %v688
  %v703 = vmul.f32 %v633, %v684
  %v704 = vmul.f32 %v633, %v688
  %v705 = vmul.f32 %v638, %v684
  %v706 = vmul.f32 %v638, %v688
  %v707 = vmul.f32 %v643, %v684
  %v708 = vmul.f32 %v643, %v688
  %v709 = vmul.f32 %v648, %v684
  %v710 = vmul.f32 %v648, %v688
  %v711 = vmul.f32 %v653, %v684
  %v712 = vmul.f32 %v653, %v688
  %v713 = vmul.f32 %v658, %v684
  %v714 = vmul.f32 %v658, %v688
  %v715 = vmul.f32 %v663, %v684
  %v716 = vmul.f32 %v663, %v688
  %v717 = vmul.f32 %v668, %v684
  %v718 = vmul.f32 %v668, %v688
  %v719 = vmul.f32 %v673, %v684
  %v720 = vmul.f32 %v673, %v688
  %v721 = vmul.f32 %v678, %v684
  %v722 = vmul.f32 %v678, %v688
  %v723 = vld [vmem:[%s4] sm:$0x3]
  %v725 = vlaneseq
  %v726 = vshrl.u32 %v725, 7
  %v727 = vsub.s32 0, %v726
  %v728 = vrot.slane %v723, %v727
  %v729 = vlaneseq
  %v730 = vshrl.u32 %v729, 7
  %v731 = vsub.s32 1, %v730
  %v732 = vrot.slane %v723, %v731
  %v735 = vadd.f32 %v691, %v728
  %v736 = vadd.f32 %v692, %v732
  %v737 = vadd.f32 %v693, %v728
  %v738 = vadd.f32 %v694, %v732
  %v739 = vadd.f32 %v695, %v728
  %v740 = vadd.f32 %v696, %v732
  %v741 = vadd.f32 %v697, %v728
  %v742 = vadd.f32 %v698, %v732
  %v743 = vadd.f32 %v699, %v728
  %v744 = vadd.f32 %v700, %v732
  %v745 = vadd.f32 %v701, %v728
  %v746 = vadd.f32 %v702, %v732
  %v747 = vadd.f32 %v703, %v728
  %v748 = vadd.f32 %v704, %v732
  %v749 = vadd.f32 %v705, %v728
  %v750 = vadd.f32 %v706, %v732
  %v751 = vadd.f32 %v707, %v728
  %v752 = vadd.f32 %v708, %v732
  %v753 = vadd.f32 %v709, %v728
  %v754 = vadd.f32 %v710, %v732
  %v755 = vadd.f32 %v711, %v728
  %v756 = vadd.f32 %v712, %v732
  %v757 = vadd.f32 %v713, %v728
  %v758 = vadd.f32 %v714, %v732
  %v759 = vadd.f32 %v715, %v728
  %v760 = vadd.f32 %v716, %v732
  %v761 = vadd.f32 %v717, %v728
  %v762 = vadd.f32 %v718, %v732
  %v763 = vadd.f32 %v719, %v728
  %v764 = vadd.f32 %v720, %v732
  %v765 = vadd.f32 %v721, %v728
  %v766 = vadd.f32 %v722, %v732
  %v767 = vand.u32 2147483647, %v735
  %vm768 = vcmp.le.f32.partialorder %v767, 0.7853982
  %vm769 = vcmp.lt.s32.totalorder %v735, 0
  %v770 = vand.u32 %v735, 2139095040
  %v771 = vshrl.u32 %v770, 23
  %v772 = vsub.s32 %v771, 127
  %v773 = vand.u32 2147483647, %v735
  %v774 = vand.u32 %v773, 8388607
  %v775 = vor.u32 %v774, 8388608
  %v776 = vsub.s32 0, %v775
  %v777 = vadd.s32 %v772, 1
  %vm778 = vcmp.gt.s32.totalorder %v777, 0
  %v779 = vsel %vm778, %v777, 0
  %v780 = vshrl.u32 %v779, 5
  %v781 = vand.u32 %v779, 31
  %v782 = vsub.s32 32, %v781
  %v783 = vshrl.u32 683565275, %v782
  %v784 = vshll.u32 683565275, %v781
  %v785 = vshrl.u32 2475754826, %v782
  %v786 = vor.u32 %v784, %v785
  %v787 = vshll.u32 2475754826, %v781
  %v788 = vshrl.u32 2131351028, %v782
  %v789 = vor.u32 %v787, %v788
  %v790 = vshll.u32 2131351028, %v781
  %v791 = vshrl.u32 2102212464, %v782
  %v792 = vor.u32 %v790, %v791
  %v793 = vshll.u32 2102212464, %v781
  %v794 = vshrl.u32 920167782, %v782
  %v795 = vor.u32 %v793, %v794
  %v796 = vshll.u32 920167782, %v781
  %v797 = vshrl.u32 1326507024, %v782
  %v798 = vor.u32 %v796, %v797
  %vm799 = vcmp.lt.s32.totalorder %v780, 1
  %vm800 = vcmp.lt.s32.totalorder %v780, 2
  %vm801 = vcmp.lt.s32.totalorder %v780, 3
  %vm802 = vcmp.lt.s32.totalorder %v780, 4
  %v803 = vsel %vm799, %v783, %v786
  %v804 = vsel %vm802, %v792, 2102212464
  %v805 = vsel %vm801, %v789, %v804
  %v806 = vsel %vm800, %v803, %v805
  %v807 = vsel %vm799, %v786, %v789
  %v808 = vsel %vm802, %v795, 920167782
  %v809 = vsel %vm801, %v792, %v808
  %v810 = vsel %vm800, %v807, %v809
  %v811 = vsel %vm799, %v789, %v792
  %v812 = vsel %vm802, %v798, 1326507024
  %v813 = vsel %vm801, %v795, %v812
  %v814 = vsel %vm800, %v811, %v813
  %v815 = vshll.u32 %v775, 8
  %v816 = vmul.u32.u64.compose %v815, %v814
  %v817 = vextract.low.u32 %v816
  %v818 = vextract.high.u32 %v816
  %v819 = vmul.u32.u64.compose %v815, %v810
  %v820 = vextract.low.u32 %v819
  %v821 = vextract.high.u32 %v819
  %v822 = vmul.u32 %v815, %v806
  %v823 = vadd.s32 %v818, %v820
  %vm824 = vc.u32 %v818, %v820
  %v825 = vadd.s32 %v821, 1
  %v826 = vsel %vm824, %v825, %v821
  %v827 = vadd.s32 %v822, %v826
  %v828 = vadd.s32 %v827, 536870912
  %v829 = vshrl.u32 %v828, 30
  %v830 = vshll.u32 %v829, 30
  %v831 = vsub.s32 %v827, %v830
  %vm832 = vcmp.lt.s32.totalorder %v831, 0
  %v833 = vsub.s32 0, %v831
  %v834 = vsel %vm832, %v833, %v831
  %v835 = vclz %v834
  %v836 = vsub.s32 %v835, 2
  %vm837 = vcmp.gt.s32.totalorder 0, %v836
  %v838 = vsel %vm837, 0, %v836
  %v839 = vsub.s32 32, %v838
  %v840 = vshll.u32 %v831, %v838
  %v841 = vshrl.u32 %v823, %v839
  %v842 = vor.u32 %v840, %v841
  %v843 = vsub.s32 4294967266, %v838
  %v844 = vadd.s32 %v843, 127
  %v845 = vshll.u32 %v844, 23
  %v846 = vor.u32 4788187, %v845
  %v847 = vand.u32 2147483647, %v846
  %v849 = vcvt.s32.f32 %v842
  %v850 = vmul.f32 %v849, %v847
  %v851 = vxor.u32 %v850, 2147483648
  %v852 = vsel %vm769, %v851, %v850
  %v853 = vsub.s32 4, %v829
  %v854 = vsel %vm769, %v853, %v829
  %v855 = vsel %vm768, %v735, %v852
  %v856 = vsel %vm768, 0, %v854
  %v857 = vcosq.f32.pop %v855
  %v858 = vsinq.f32.pop %v855
  %vm859 = vweird.f32 %v735
  %v860 = vadd.s32 %v856, 3
  %v861 = vand.u32 %v860, 3
  %vm862 = vcmp.lt.s32.totalorder %v861, 2
  %vm863 = vcmp.eq.s32.totalorder %v861, 0
  %v864 = vxor.u32 %v858, 2147483648
  %v865 = vsel %vm863, %v857, %v864
  %vm866 = vcmp.eq.s32.totalorder %v861, 2
  %v867 = vxor.u32 %v857, 2147483648
  %v868 = vsel %vm866, %v867, %v858
  %v869 = vsel %vm862, %v865, %v868
  %v870 = vsel %vm859, nan, %v869
  %v871 = vand.u32 2147483647, %v736
  %vm872 = vcmp.le.f32.partialorder %v871, 0.7853982
  %vm873 = vcmp.lt.s32.totalorder %v736, 0
  %v874 = vand.u32 %v736, 2139095040
  %v875 = vshrl.u32 %v874, 23
  %v876 = vsub.s32 %v875, 127
  %v877 = vand.u32 2147483647, %v736
  %v878 = vand.u32 %v877, 8388607
  %v879 = vor.u32 %v878, 8388608
  %v880 = vsub.s32 0, %v879
  %v881 = vadd.s32 %v876, 1
  %vm882 = vcmp.gt.s32.totalorder %v881, 0
  %v883 = vsel %vm882, %v881, 0
  %v884 = vshrl.u32 %v883, 5
  %v885 = vand.u32 %v883, 31
  %v886 = vsub.s32 32, %v885
  %v887 = vshrl.u32 683565275, %v886
  %v888 = vshll.u32 683565275, %v885
  %v889 = vshrl.u32 2475754826, %v886
  %v890 = vor.u32 %v888, %v889
  %v891 = vshll.u32 2475754826, %v885
  %v892 = vshrl.u32 2131351028, %v886
  %v893 = vor.u32 %v891, %v892
  %v894 = vshll.u32 2131351028, %v885
  %v895 = vshrl.u32 2102212464, %v886
  %v896 = vor.u32 %v894, %v895
  %v897 = vshll.u32 2102212464, %v885
  %v898 = vshrl.u32 920167782, %v886
  %v899 = vor.u32 %v897, %v898
  %v900 = vshll.u32 920167782, %v885
  %v901 = vshrl.u32 1326507024, %v886
  %v902 = vor.u32 %v900, %v901
  %vm903 = vcmp.lt.s32.totalorder %v884, 1
  %vm904 = vcmp.lt.s32.totalorder %v884, 2
  %vm905 = vcmp.lt.s32.totalorder %v884, 3
  %vm906 = vcmp.lt.s32.totalorder %v884, 4
  %v907 = vsel %vm903, %v887, %v890
  %v908 = vsel %vm906, %v896, 2102212464
  %v909 = vsel %vm905, %v893, %v908
  %v910 = vsel %vm904, %v907, %v909
  %v911 = vsel %vm903, %v890, %v893
  %v912 = vsel %vm906, %v899, 920167782
  %v913 = vsel %vm905, %v896, %v912
  %v914 = vsel %vm904, %v911, %v913
  %v915 = vsel %vm903, %v893, %v896
  %v916 = vsel %vm906, %v902, 1326507024
  %v917 = vsel %vm905, %v899, %v916
  %v918 = vsel %vm904, %v915, %v917
  %v919 = vshll.u32 %v879, 8
  %v920 = vmul.u32.u64.compose %v919, %v918
  %v921 = vextract.low.u32 %v920
  %v922 = vextract.high.u32 %v920
  %v923 = vmul.u32.u64.compose %v919, %v914
  %v924 = vextract.low.u32 %v923
  %v925 = vextract.high.u32 %v923
  %v926 = vmul.u32 %v919, %v910
  %v927 = vadd.s32 %v922, %v924
  %vm928 = vc.u32 %v922, %v924
  %v929 = vadd.s32 %v925, 1
  %v930 = vsel %vm928, %v929, %v925
  %v931 = vadd.s32 %v926, %v930
  %v932 = vadd.s32 %v931, 536870912
  %v933 = vshrl.u32 %v932, 30
  %v934 = vshll.u32 %v933, 30
  %v935 = vsub.s32 %v931, %v934
  %vm936 = vcmp.lt.s32.totalorder %v935, 0
  %v937 = vsub.s32 0, %v935
  %v938 = vsel %vm936, %v937, %v935
  %v939 = vclz %v938
  %v940 = vsub.s32 %v939, 2
  %vm941 = vcmp.gt.s32.totalorder 0, %v940
  %v942 = vsel %vm941, 0, %v940
  %v943 = vsub.s32 32, %v942
  %v944 = vshll.u32 %v935, %v942
  %v945 = vshrl.u32 %v927, %v943
  %v946 = vor.u32 %v944, %v945
  %v947 = vsub.s32 4294967266, %v942
  %v948 = vadd.s32 %v947, 127
  %v949 = vshll.u32 %v948, 23
  %v950 = vor.u32 4788187, %v949
  %v951 = vand.u32 2147483647, %v950
  %v953 = vcvt.s32.f32 %v946
  %v954 = vmul.f32 %v953, %v951
  %v955 = vxor.u32 %v954, 2147483648
  %v956 = vsel %vm873, %v955, %v954
  %v957 = vsub.s32 4, %v933
  %v958 = vsel %vm873, %v957, %v933
  %v959 = vsel %vm872, %v736, %v956
  %v960 = vsel %vm872, 0, %v958
  %v961 = vcosq.f32.pop %v959
  %v962 = vsinq.f32.pop %v959
  %vm963 = vweird.f32 %v736
  %v964 = vadd.s32 %v960, 3
  %v965 = vand.u32 %v964, 3
  %vm966 = vcmp.lt.s32.totalorder %v965, 2
  %vm967 = vcmp.eq.s32.totalorder %v965, 0
  %v968 = vxor.u32 %v962, 2147483648
  %v969 = vsel %vm967, %v961, %v968
  %vm970 = vcmp.eq.s32.totalorder %v965, 2
  %v971 = vxor.u32 %v961, 2147483648
  %v972 = vsel %vm970, %v971, %v962
  %v973 = vsel %vm966, %v969, %v972
  %v974 = vsel %vm963, nan, %v973
  %v975 = vand.u32 2147483647, %v737
  %vm976 = vcmp.le.f32.partialorder %v975, 0.7853982
  %vm977 = vcmp.lt.s32.totalorder %v737, 0
  %v978 = vand.u32 %v737, 2139095040
  %v979 = vshrl.u32 %v978, 23
  %v980 = vsub.s32 %v979, 127
  %v981 = vand.u32 2147483647, %v737
  %v982 = vand.u32 %v981, 8388607
  %v983 = vor.u32 %v982, 8388608
  %v984 = vsub.s32 0, %v983
  %v985 = vadd.s32 %v980, 1
  %vm986 = vcmp.gt.s32.totalorder %v985, 0
  %v987 = vsel %vm986, %v985, 0
  %v988 = vshrl.u32 %v987, 5
  %v989 = vand.u32 %v987, 31
  %v990 = vsub.s32 32, %v989
  %v991 = vshrl.u32 683565275, %v990
  %v992 = vshll.u32 683565275, %v989
  %v993 = vshrl.u32 2475754826, %v990
  %v994 = vor.u32 %v992, %v993
  %v995 = vshll.u32 2475754826, %v989
  %v996 = vshrl.u32 2131351028, %v990
  %v997 = vor.u32 %v995, %v996
  %v998 = vshll.u32 2131351028, %v989
  %v999 = vshrl.u32 2102212464, %v990
  %v1000 = vor.u32 %v998, %v999
  %v1001 = vshll.u32 2102212464, %v989
  %v1002 = vshrl.u32 920167782, %v990
  %v1003 = vor.u32 %v1001, %v1002
  %v1004 = vshll.u32 920167782, %v989
  %v1005 = vshrl.u32 1326507024, %v990
  %v1006 = vor.u32 %v1004, %v1005
  %vm1007 = vcmp.lt.s32.totalorder %v988, 1
  %vm1008 = vcmp.lt.s32.totalorder %v988, 2
  %vm1009 = vcmp.lt.s32.totalorder %v988, 3
  %vm1010 = vcmp.lt.s32.totalorder %v988, 4
  %v1011 = vsel %vm1007, %v991, %v994
  %v1012 = vsel %vm1010, %v1000, 2102212464
  %v1013 = vsel %vm1009, %v997, %v1012
  %v1014 = vsel %vm1008, %v1011, %v1013
  %v1015 = vsel %vm1007, %v994, %v997
  %v1016 = vsel %vm1010, %v1003, 920167782
  %v1017 = vsel %vm1009, %v1000, %v1016
  %v1018 = vsel %vm1008, %v1015, %v1017
  %v1019 = vsel %vm1007, %v997, %v1000
  %v1020 = vsel %vm1010, %v1006, 1326507024
  %v1021 = vsel %vm1009, %v1003, %v1020
  %v1022 = vsel %vm1008, %v1019, %v1021
  %v1023 = vshll.u32 %v983, 8
  %v1024 = vmul.u32.u64.compose %v1023, %v1022
  %v1025 = vextract.low.u32 %v1024
  %v1026 = vextract.high.u32 %v1024
  %v1027 = vmul.u32.u64.compose %v1023, %v1018
  %v1028 = vextract.low.u32 %v1027
  %v1029 = vextract.high.u32 %v1027
  %v1030 = vmul.u32 %v1023, %v1014
  %v1031 = vadd.s32 %v1026, %v1028
  %vm1032 = vc.u32 %v1026, %v1028
  %v1033 = vadd.s32 %v1029, 1
  %v1034 = vsel %vm1032, %v1033, %v1029
  %v1035 = vadd.s32 %v1030, %v1034
  %v1036 = vadd.s32 %v1035, 536870912
  %v1037 = vshrl.u32 %v1036, 30
  %v1038 = vshll.u32 %v1037, 30
  %v1039 = vsub.s32 %v1035, %v1038
  %vm1040 = vcmp.lt.s32.totalorder %v1039, 0
  %v1041 = vsub.s32 0, %v1039
  %v1042 = vsel %vm1040, %v1041, %v1039
  %v1043 = vclz %v1042
  %v1044 = vsub.s32 %v1043, 2
  %vm1045 = vcmp.gt.s32.totalorder 0, %v1044
  %v1046 = vsel %vm1045, 0, %v1044
  %v1047 = vsub.s32 32, %v1046
  %v1048 = vshll.u32 %v1039, %v1046
  %v1049 = vshrl.u32 %v1031, %v1047
  %v1050 = vor.u32 %v1048, %v1049
  %v1051 = vsub.s32 4294967266, %v1046
  %v1052 = vadd.s32 %v1051, 127
  %v1053 = vshll.u32 %v1052, 23
  %v1054 = vor.u32 4788187, %v1053
  %v1055 = vand.u32 2147483647, %v1054
  %v1057 = vcvt.s32.f32 %v1050
  %v1058 = vmul.f32 %v1057, %v1055
  %v1059 = vxor.u32 %v1058, 2147483648
  %v1060 = vsel %vm977, %v1059, %v1058
  %v1061 = vsub.s32 4, %v1037
  %v1062 = vsel %vm977, %v1061, %v1037
  %v1063 = vsel %vm976, %v737, %v1060
  %v1064 = vsel %vm976, 0, %v1062
  %v1065 = vcosq.f32.pop %v1063
  %v1066 = vsinq.f32.pop %v1063
  %vm1067 = vweird.f32 %v737
  %v1068 = vadd.s32 %v1064, 3
  %v1069 = vand.u32 %v1068, 3
  %vm1070 = vcmp.lt.s32.totalorder %v1069, 2
  %vm1071 = vcmp.eq.s32.totalorder %v1069, 0
  %v1072 = vxor.u32 %v1066, 2147483648
  %v1073 = vsel %vm1071, %v1065, %v1072
  %vm1074 = vcmp.eq.s32.totalorder %v1069, 2
  %v1075 = vxor.u32 %v1065, 2147483648
  %v1076 = vsel %vm1074, %v1075, %v1066
  %v1077 = vsel %vm1070, %v1073, %v1076
  %v1078 = vsel %vm1067, nan, %v1077
  %v1079 = vand.u32 2147483647, %v738
  %vm1080 = vcmp.le.f32.partialorder %v1079, 0.7853982
  %vm1081 = vcmp.lt.s32.totalorder %v738, 0
  %v1082 = vand.u32 %v738, 2139095040
  %v1083 = vshrl.u32 %v1082, 23
  %v1084 = vsub.s32 %v1083, 127
  %v1085 = vand.u32 2147483647, %v738
  %v1086 = vand.u32 %v1085, 8388607
  %v1087 = vor.u32 %v1086, 8388608
  %v1088 = vsub.s32 0, %v1087
  %v1089 = vadd.s32 %v1084, 1
  %vm1090 = vcmp.gt.s32.totalorder %v1089, 0
  %v1091 = vsel %vm1090, %v1089, 0
  %v1092 = vshrl.u32 %v1091, 5
  %v1093 = vand.u32 %v1091, 31
  %v1094 = vsub.s32 32, %v1093
  %v1095 = vshrl.u32 683565275, %v1094
  %v1096 = vshll.u32 683565275, %v1093
  %v1097 = vshrl.u32 2475754826, %v1094
  %v1098 = vor.u32 %v1096, %v1097
  %v1099 = vshll.u32 2475754826, %v1093
  %v1100 = vshrl.u32 2131351028, %v1094
  %v1101 = vor.u32 %v1099, %v1100
  %v1102 = vshll.u32 2131351028, %v1093
  %v1103 = vshrl.u32 2102212464, %v1094
  %v1104 = vor.u32 %v1102, %v1103
  %v1105 = vshll.u32 2102212464, %v1093
  %v1106 = vshrl.u32 920167782, %v1094
  %v1107 = vor.u32 %v1105, %v1106
  %v1108 = vshll.u32 920167782, %v1093
  %v1109 = vshrl.u32 1326507024, %v1094
  %v1110 = vor.u32 %v1108, %v1109
  %vm1111 = vcmp.lt.s32.totalorder %v1092, 1
  %vm1112 = vcmp.lt.s32.totalorder %v1092, 2
  %vm1113 = vcmp.lt.s32.totalorder %v1092, 3
  %vm1114 = vcmp.lt.s32.totalorder %v1092, 4
  %v1115 = vsel %vm1111, %v1095, %v1098
  %v1116 = vsel %vm1114, %v1104, 2102212464
  %v1117 = vsel %vm1113, %v1101, %v1116
  %v1118 = vsel %vm1112, %v1115, %v1117
  %v1119 = vsel %vm1111, %v1098, %v1101
  %v1120 = vsel %vm1114, %v1107, 920167782
  %v1121 = vsel %vm1113, %v1104, %v1120
  %v1122 = vsel %vm1112, %v1119, %v1121
  %v1123 = vsel %vm1111, %v1101, %v1104
  %v1124 = vsel %vm1114, %v1110, 1326507024
  %v1125 = vsel %vm1113, %v1107, %v1124
  %v1126 = vsel %vm1112, %v1123, %v1125
  %v1127 = vshll.u32 %v1087, 8
  %v1128 = vmul.u32.u64.compose %v1127, %v1126
  %v1129 = vextract.low.u32 %v1128
  %v1130 = vextract.high.u32 %v1128
  %v1131 = vmul.u32.u64.compose %v1127, %v1122
  %v1132 = vextract.low.u32 %v1131
  %v1133 = vextract.high.u32 %v1131
  %v1134 = vmul.u32 %v1127, %v1118
  %v1135 = vadd.s32 %v1130, %v1132
  %vm1136 = vc.u32 %v1130, %v1132
  %v1137 = vadd.s32 %v1133, 1
  %v1138 = vsel %vm1136, %v1137, %v1133
  %v1139 = vadd.s32 %v1134, %v1138
  %v1140 = vadd.s32 %v1139, 536870912
  %v1141 = vshrl.u32 %v1140, 30
  %v1142 = vshll.u32 %v1141, 30
  %v1143 = vsub.s32 %v1139, %v1142
  %vm1144 = vcmp.lt.s32.totalorder %v1143, 0
  %v1145 = vsub.s32 0, %v1143
  %v1146 = vsel %vm1144, %v1145, %v1143
  %v1147 = vclz %v1146
  %v1148 = vsub.s32 %v1147, 2
  %vm1149 = vcmp.gt.s32.totalorder 0, %v1148
  %v1150 = vsel %vm1149, 0, %v1148
  %v1151 = vsub.s32 32, %v1150
  %v1152 = vshll.u32 %v1143, %v1150
  %v1153 = vshrl.u32 %v1135, %v1151
  %v1154 = vor.u32 %v1152, %v1153
  %v1155 = vsub.s32 4294967266, %v1150
  %v1156 = vadd.s32 %v1155, 127
  %v1157 = vshll.u32 %v1156, 23
  %v1158 = vor.u32 4788187, %v1157
  %v1159 = vand.u32 2147483647, %v1158
  %v1161 = vcvt.s32.f32 %v1154
  %v1162 = vmul.f32 %v1161, %v1159
  %v1163 = vxor.u32 %v1162, 2147483648
  %v1164 = vsel %vm1081, %v1163, %v1162
  %v1165 = vsub.s32 4, %v1141
  %v1166 = vsel %vm1081, %v1165, %v1141
  %v1167 = vsel %vm1080, %v738, %v1164
  %v1168 = vsel %vm1080, 0, %v1166
  %v1169 = vcosq.f32.pop %v1167
  %v1170 = vsinq.f32.pop %v1167
  %vm1171 = vweird.f32 %v738
  %v1172 = vadd.s32 %v1168, 3
  %v1173 = vand.u32 %v1172, 3
  %vm1174 = vcmp.lt.s32.totalorder %v1173, 2
  %vm1175 = vcmp.eq.s32.totalorder %v1173, 0
  %v1176 = vxor.u32 %v1170, 2147483648
  %v1177 = vsel %vm1175, %v1169, %v1176
  %vm1178 = vcmp.eq.s32.totalorder %v1173, 2
  %v1179 = vxor.u32 %v1169, 2147483648
  %v1180 = vsel %vm1178, %v1179, %v1170
  %v1181 = vsel %vm1174, %v1177, %v1180
  %v1182 = vsel %vm1171, nan, %v1181
  %v1183 = vand.u32 2147483647, %v739
  %vm1184 = vcmp.le.f32.partialorder %v1183, 0.7853982
  %vm1185 = vcmp.lt.s32.totalorder %v739, 0
  %v1186 = vand.u32 %v739, 2139095040
  %v1187 = vshrl.u32 %v1186, 23
  %v1188 = vsub.s32 %v1187, 127
  %v1189 = vand.u32 2147483647, %v739
  %v1190 = vand.u32 %v1189, 8388607
  %v1191 = vor.u32 %v1190, 8388608
  %v1192 = vsub.s32 0, %v1191
  %v1193 = vadd.s32 %v1188, 1
  %vm1194 = vcmp.gt.s32.totalorder %v1193, 0
  %v1195 = vsel %vm1194, %v1193, 0
  %v1196 = vshrl.u32 %v1195, 5
  %v1197 = vand.u32 %v1195, 31
  %v1198 = vsub.s32 32, %v1197
  %v1199 = vshrl.u32 683565275, %v1198
  %v1200 = vshll.u32 683565275, %v1197
  %v1201 = vshrl.u32 2475754826, %v1198
  %v1202 = vor.u32 %v1200, %v1201
  %v1203 = vshll.u32 2475754826, %v1197
  %v1204 = vshrl.u32 2131351028, %v1198
  %v1205 = vor.u32 %v1203, %v1204
  %v1206 = vshll.u32 2131351028, %v1197
  %v1207 = vshrl.u32 2102212464, %v1198
  %v1208 = vor.u32 %v1206, %v1207
  %v1209 = vshll.u32 2102212464, %v1197
  %v1210 = vshrl.u32 920167782, %v1198
  %v1211 = vor.u32 %v1209, %v1210
  %v1212 = vshll.u32 920167782, %v1197
  %v1213 = vshrl.u32 1326507024, %v1198
  %v1214 = vor.u32 %v1212, %v1213
  %vm1215 = vcmp.lt.s32.totalorder %v1196, 1
  %vm1216 = vcmp.lt.s32.totalorder %v1196, 2
  %vm1217 = vcmp.lt.s32.totalorder %v1196, 3
  %vm1218 = vcmp.lt.s32.totalorder %v1196, 4
  %v1219 = vsel %vm1215, %v1199, %v1202
  %v1220 = vsel %vm1218, %v1208, 2102212464
  %v1221 = vsel %vm1217, %v1205, %v1220
  %v1222 = vsel %vm1216, %v1219, %v1221
  %v1223 = vsel %vm1215, %v1202, %v1205
  %v1224 = vsel %vm1218, %v1211, 920167782
  %v1225 = vsel %vm1217, %v1208, %v1224
  %v1226 = vsel %vm1216, %v1223, %v1225
  %v1227 = vsel %vm1215, %v1205, %v1208
  %v1228 = vsel %vm1218, %v1214, 1326507024
  %v1229 = vsel %vm1217, %v1211, %v1228
  %v1230 = vsel %vm1216, %v1227, %v1229
  %v1231 = vshll.u32 %v1191, 8
  %v1232 = vmul.u32.u64.compose %v1231, %v1230
  %v1233 = vextract.low.u32 %v1232
  %v1234 = vextract.high.u32 %v1232
  %v1235 = vmul.u32.u64.compose %v1231, %v1226
  %v1236 = vextract.low.u32 %v1235
  %v1237 = vextract.high.u32 %v1235
  %v1238 = vmul.u32 %v1231, %v1222
  %v1239 = vadd.s32 %v1234, %v1236
  %vm1240 = vc.u32 %v1234, %v1236
  %v1241 = vadd.s32 %v1237, 1
  %v1242 = vsel %vm1240, %v1241, %v1237
  %v1243 = vadd.s32 %v1238, %v1242
  %v1244 = vadd.s32 %v1243, 536870912
  %v1245 = vshrl.u32 %v1244, 30
  %v1246 = vshll.u32 %v1245, 30
  %v1247 = vsub.s32 %v1243, %v1246
  %vm1248 = vcmp.lt.s32.totalorder %v1247, 0
  %v1249 = vsub.s32 0, %v1247
  %v1250 = vsel %vm1248, %v1249, %v1247
  %v1251 = vclz %v1250
  %v1252 = vsub.s32 %v1251, 2
  %vm1253 = vcmp.gt.s32.totalorder 0, %v1252
  %v1254 = vsel %vm1253, 0, %v1252
  %v1255 = vsub.s32 32, %v1254
  %v1256 = vshll.u32 %v1247, %v1254
  %v1257 = vshrl.u32 %v1239, %v1255
  %v1258 = vor.u32 %v1256, %v1257
  %v1259 = vsub.s32 4294967266, %v1254
  %v1260 = vadd.s32 %v1259, 127
  %v1261 = vshll.u32 %v1260, 23
  %v1262 = vor.u32 4788187, %v1261
  %v1263 = vand.u32 2147483647, %v1262
  %v1265 = vcvt.s32.f32 %v1258
  %v1266 = vmul.f32 %v1265, %v1263
  %v1267 = vxor.u32 %v1266, 2147483648
  %v1268 = vsel %vm1185, %v1267, %v1266
  %v1269 = vsub.s32 4, %v1245
  %v1270 = vsel %vm1185, %v1269, %v1245
  %v1271 = vsel %vm1184, %v739, %v1268
  %v1272 = vsel %vm1184, 0, %v1270
  %v1273 = vcosq.f32.pop %v1271
  %v1274 = vsinq.f32.pop %v1271
  %vm1275 = vweird.f32 %v739
  %v1276 = vadd.s32 %v1272, 3
  %v1277 = vand.u32 %v1276, 3
  %vm1278 = vcmp.lt.s32.totalorder %v1277, 2
  %vm1279 = vcmp.eq.s32.totalorder %v1277, 0
  %v1280 = vxor.u32 %v1274, 2147483648
  %v1281 = vsel %vm1279, %v1273, %v1280
  %vm1282 = vcmp.eq.s32.totalorder %v1277, 2
  %v1283 = vxor.u32 %v1273, 2147483648
  %v1284 = vsel %vm1282, %v1283, %v1274
  %v1285 = vsel %vm1278, %v1281, %v1284
  %v1286 = vsel %vm1275, nan, %v1285
  %v1287 = vand.u32 2147483647, %v740
  %vm1288 = vcmp.le.f32.partialorder %v1287, 0.7853982
  %vm1289 = vcmp.lt.s32.totalorder %v740, 0
  %v1290 = vand.u32 %v740, 2139095040
  %v1291 = vshrl.u32 %v1290, 23
  %v1292 = vsub.s32 %v1291, 127
  %v1293 = vand.u32 2147483647, %v740
  %v1294 = vand.u32 %v1293, 8388607
  %v1295 = vor.u32 %v1294, 8388608
  %v1296 = vsub.s32 0, %v1295
  %v1297 = vadd.s32 %v1292, 1
  %vm1298 = vcmp.gt.s32.totalorder %v1297, 0
  %v1299 = vsel %vm1298, %v1297, 0
  %v1300 = vshrl.u32 %v1299, 5
  %v1301 = vand.u32 %v1299, 31
  %v1302 = vsub.s32 32, %v1301
  %v1303 = vshrl.u32 683565275, %v1302
  %v1304 = vshll.u32 683565275, %v1301
  %v1305 = vshrl.u32 2475754826, %v1302
  %v1306 = vor.u32 %v1304, %v1305
  %v1307 = vshll.u32 2475754826, %v1301
  %v1308 = vshrl.u32 2131351028, %v1302
  %v1309 = vor.u32 %v1307, %v1308
  %v1310 = vshll.u32 2131351028, %v1301
  %v1311 = vshrl.u32 2102212464, %v1302
  %v1312 = vor.u32 %v1310, %v1311
  %v1313 = vshll.u32 2102212464, %v1301
  %v1314 = vshrl.u32 920167782, %v1302
  %v1315 = vor.u32 %v1313, %v1314
  %v1316 = vshll.u32 920167782, %v1301
  %v1317 = vshrl.u32 1326507024, %v1302
  %v1318 = vor.u32 %v1316, %v1317
  %vm1319 = vcmp.lt.s32.totalorder %v1300, 1
  %vm1320 = vcmp.lt.s32.totalorder %v1300, 2
  %vm1321 = vcmp.lt.s32.totalorder %v1300, 3
  %vm1322 = vcmp.lt.s32.totalorder %v1300, 4
  %v1323 = vsel %vm1319, %v1303, %v1306
  %v1324 = vsel %vm1322, %v1312, 2102212464
  %v1325 = vsel %vm1321, %v1309, %v1324
  %v1326 = vsel %vm1320, %v1323, %v1325
  %v1327 = vsel %vm1319, %v1306, %v1309
  %v1328 = vsel %vm1322, %v1315, 920167782
  %v1329 = vsel %vm1321, %v1312, %v1328
  %v1330 = vsel %vm1320, %v1327, %v1329
  %v1331 = vsel %vm1319, %v1309, %v1312
  %v1332 = vsel %vm1322, %v1318, 1326507024
  %v1333 = vsel %vm1321, %v1315, %v1332
  %v1334 = vsel %vm1320, %v1331, %v1333
  %v1335 = vshll.u32 %v1295, 8
  %v1336 = vmul.u32.u64.compose %v1335, %v1334
  %v1337 = vextract.low.u32 %v1336
  %v1338 = vextract.high.u32 %v1336
  %v1339 = vmul.u32.u64.compose %v1335, %v1330
  %v1340 = vextract.low.u32 %v1339
  %v1341 = vextract.high.u32 %v1339
  %v1342 = vmul.u32 %v1335, %v1326
  %v1343 = vadd.s32 %v1338, %v1340
  %vm1344 = vc.u32 %v1338, %v1340
  %v1345 = vadd.s32 %v1341, 1
  %v1346 = vsel %vm1344, %v1345, %v1341
  %v1347 = vadd.s32 %v1342, %v1346
  %v1348 = vadd.s32 %v1347, 536870912
  %v1349 = vshrl.u32 %v1348, 30
  %v1350 = vshll.u32 %v1349, 30
  %v1351 = vsub.s32 %v1347, %v1350
  %vm1352 = vcmp.lt.s32.totalorder %v1351, 0
  %v1353 = vsub.s32 0, %v1351
  %v1354 = vsel %vm1352, %v1353, %v1351
  %v1355 = vclz %v1354
  %v1356 = vsub.s32 %v1355, 2
  %vm1357 = vcmp.gt.s32.totalorder 0, %v1356
  %v1358 = vsel %vm1357, 0, %v1356
  %v1359 = vsub.s32 32, %v1358
  %v1360 = vshll.u32 %v1351, %v1358
  %v1361 = vshrl.u32 %v1343, %v1359
  %v1362 = vor.u32 %v1360, %v1361
  %v1363 = vsub.s32 4294967266, %v1358
  %v1364 = vadd.s32 %v1363, 127
  %v1365 = vshll.u32 %v1364, 23
  %v1366 = vor.u32 4788187, %v1365
  %v1367 = vand.u32 2147483647, %v1366
  %v1369 = vcvt.s32.f32 %v1362
  %v1370 = vmul.f32 %v1369, %v1367
  %v1371 = vxor.u32 %v1370, 2147483648
  %v1372 = vsel %vm1289, %v1371, %v1370
  %v1373 = vsub.s32 4, %v1349
  %v1374 = vsel %vm1289, %v1373, %v1349
  %v1375 = vsel %vm1288, %v740, %v1372
  %v1376 = vsel %vm1288, 0, %v1374
  %v1377 = vcosq.f32.pop %v1375
  %v1378 = vsinq.f32.pop %v1375
  %vm1379 = vweird.f32 %v740
  %v1380 = vadd.s32 %v1376, 3
  %v1381 = vand.u32 %v1380, 3
  %vm1382 = vcmp.lt.s32.totalorder %v1381, 2
  %vm1383 = vcmp.eq.s32.totalorder %v1381, 0
  %v1384 = vxor.u32 %v1378, 2147483648
  %v1385 = vsel %vm1383, %v1377, %v1384
  %vm1386 = vcmp.eq.s32.totalorder %v1381, 2
  %v1387 = vxor.u32 %v1377, 2147483648
  %v1388 = vsel %vm1386, %v1387, %v1378
  %v1389 = vsel %vm1382, %v1385, %v1388
  %v1390 = vsel %vm1379, nan, %v1389
  %v1391 = vand.u32 2147483647, %v741
  %vm1392 = vcmp.le.f32.partialorder %v1391, 0.7853982
  %vm1393 = vcmp.lt.s32.totalorder %v741, 0
  %v1394 = vand.u32 %v741, 2139095040
  %v1395 = vshrl.u32 %v1394, 23
  %v1396 = vsub.s32 %v1395, 127
  %v1397 = vand.u32 2147483647, %v741
  %v1398 = vand.u32 %v1397, 8388607
  %v1399 = vor.u32 %v1398, 8388608
  %v1400 = vsub.s32 0, %v1399
  %v1401 = vadd.s32 %v1396, 1
  %vm1402 = vcmp.gt.s32.totalorder %v1401, 0
  %v1403 = vsel %vm1402, %v1401, 0
  %v1404 = vshrl.u32 %v1403, 5
  %v1405 = vand.u32 %v1403, 31
  %v1406 = vsub.s32 32, %v1405
  %v1407 = vshrl.u32 683565275, %v1406
  %v1408 = vshll.u32 683565275, %v1405
  %v1409 = vshrl.u32 2475754826, %v1406
  %v1410 = vor.u32 %v1408, %v1409
  %v1411 = vshll.u32 2475754826, %v1405
  %v1412 = vshrl.u32 2131351028, %v1406
  %v1413 = vor.u32 %v1411, %v1412
  %v1414 = vshll.u32 2131351028, %v1405
  %v1415 = vshrl.u32 2102212464, %v1406
  %v1416 = vor.u32 %v1414, %v1415
  %v1417 = vshll.u32 2102212464, %v1405
  %v1418 = vshrl.u32 920167782, %v1406
  %v1419 = vor.u32 %v1417, %v1418
  %v1420 = vshll.u32 920167782, %v1405
  %v1421 = vshrl.u32 1326507024, %v1406
  %v1422 = vor.u32 %v1420, %v1421
  %vm1423 = vcmp.lt.s32.totalorder %v1404, 1
  %vm1424 = vcmp.lt.s32.totalorder %v1404, 2
  %vm1425 = vcmp.lt.s32.totalorder %v1404, 3
  %vm1426 = vcmp.lt.s32.totalorder %v1404, 4
  %v1427 = vsel %vm1423, %v1407, %v1410
  %v1428 = vsel %vm1426, %v1416, 2102212464
  %v1429 = vsel %vm1425, %v1413, %v1428
  %v1430 = vsel %vm1424, %v1427, %v1429
  %v1431 = vsel %vm1423, %v1410, %v1413
  %v1432 = vsel %vm1426, %v1419, 920167782
  %v1433 = vsel %vm1425, %v1416, %v1432
  %v1434 = vsel %vm1424, %v1431, %v1433
  %v1435 = vsel %vm1423, %v1413, %v1416
  %v1436 = vsel %vm1426, %v1422, 1326507024
  %v1437 = vsel %vm1425, %v1419, %v1436
  %v1438 = vsel %vm1424, %v1435, %v1437
  %v1439 = vshll.u32 %v1399, 8
  %v1440 = vmul.u32.u64.compose %v1439, %v1438
  %v1441 = vextract.low.u32 %v1440
  %v1442 = vextract.high.u32 %v1440
  %v1443 = vmul.u32.u64.compose %v1439, %v1434
  %v1444 = vextract.low.u32 %v1443
  %v1445 = vextract.high.u32 %v1443
  %v1446 = vmul.u32 %v1439, %v1430
  %v1447 = vadd.s32 %v1442, %v1444
  %vm1448 = vc.u32 %v1442, %v1444
  %v1449 = vadd.s32 %v1445, 1
  %v1450 = vsel %vm1448, %v1449, %v1445
  %v1451 = vadd.s32 %v1446, %v1450
  %v1452 = vadd.s32 %v1451, 536870912
  %v1453 = vshrl.u32 %v1452, 30
  %v1454 = vshll.u32 %v1453, 30
  %v1455 = vsub.s32 %v1451, %v1454
  %vm1456 = vcmp.lt.s32.totalorder %v1455, 0
  %v1457 = vsub.s32 0, %v1455
  %v1458 = vsel %vm1456, %v1457, %v1455
  %v1459 = vclz %v1458
  %v1460 = vsub.s32 %v1459, 2
  %vm1461 = vcmp.gt.s32.totalorder 0, %v1460
  %v1462 = vsel %vm1461, 0, %v1460
  %v1463 = vsub.s32 32, %v1462
  %v1464 = vshll.u32 %v1455, %v1462
  %v1465 = vshrl.u32 %v1447, %v1463
  %v1466 = vor.u32 %v1464, %v1465
  %v1467 = vsub.s32 4294967266, %v1462
  %v1468 = vadd.s32 %v1467, 127
  %v1469 = vshll.u32 %v1468, 23
  %v1470 = vor.u32 4788187, %v1469
  %v1471 = vand.u32 2147483647, %v1470
  %v1473 = vcvt.s32.f32 %v1466
  %v1474 = vmul.f32 %v1473, %v1471
  %v1475 = vxor.u32 %v1474, 2147483648
  %v1476 = vsel %vm1393, %v1475, %v1474
  %v1477 = vsub.s32 4, %v1453
  %v1478 = vsel %vm1393, %v1477, %v1453
  %v1479 = vsel %vm1392, %v741, %v1476
  %v1480 = vsel %vm1392, 0, %v1478
  %v1481 = vcosq.f32.pop %v1479
  %v1482 = vsinq.f32.pop %v1479
  %vm1483 = vweird.f32 %v741
  %v1484 = vadd.s32 %v1480, 3
  %v1485 = vand.u32 %v1484, 3
  %vm1486 = vcmp.lt.s32.totalorder %v1485, 2
  %vm1487 = vcmp.eq.s32.totalorder %v1485, 0
  %v1488 = vxor.u32 %v1482, 2147483648
  %v1489 = vsel %vm1487, %v1481, %v1488
  %vm1490 = vcmp.eq.s32.totalorder %v1485, 2
  %v1491 = vxor.u32 %v1481, 2147483648
  %v1492 = vsel %vm1490, %v1491, %v1482
  %v1493 = vsel %vm1486, %v1489, %v1492
  %v1494 = vsel %vm1483, nan, %v1493
  %v1495 = vand.u32 2147483647, %v742
  %vm1496 = vcmp.le.f32.partialorder %v1495, 0.7853982
  %vm1497 = vcmp.lt.s32.totalorder %v742, 0
  %v1498 = vand.u32 %v742, 2139095040
  %v1499 = vshrl.u32 %v1498, 23
  %v1500 = vsub.s32 %v1499, 127
  %v1501 = vand.u32 2147483647, %v742
  %v1502 = vand.u32 %v1501, 8388607
  %v1503 = vor.u32 %v1502, 8388608
  %v1504 = vsub.s32 0, %v1503
  %v1505 = vadd.s32 %v1500, 1
  %vm1506 = vcmp.gt.s32.totalorder %v1505, 0
  %v1507 = vsel %vm1506, %v1505, 0
  %v1508 = vshrl.u32 %v1507, 5
  %v1509 = vand.u32 %v1507, 31
  %v1510 = vsub.s32 32, %v1509
  %v1511 = vshrl.u32 683565275, %v1510
  %v1512 = vshll.u32 683565275, %v1509
  %v1513 = vshrl.u32 2475754826, %v1510
  %v1514 = vor.u32 %v1512, %v1513
  %v1515 = vshll.u32 2475754826, %v1509
  %v1516 = vshrl.u32 2131351028, %v1510
  %v1517 = vor.u32 %v1515, %v1516
  %v1518 = vshll.u32 2131351028, %v1509
  %v1519 = vshrl.u32 2102212464, %v1510
  %v1520 = vor.u32 %v1518, %v1519
  %v1521 = vshll.u32 2102212464, %v1509
  %v1522 = vshrl.u32 920167782, %v1510
  %v1523 = vor.u32 %v1521, %v1522
  %v1524 = vshll.u32 920167782, %v1509
  %v1525 = vshrl.u32 1326507024, %v1510
  %v1526 = vor.u32 %v1524, %v1525
  %vm1527 = vcmp.lt.s32.totalorder %v1508, 1
  %vm1528 = vcmp.lt.s32.totalorder %v1508, 2
  %vm1529 = vcmp.lt.s32.totalorder %v1508, 3
  %vm1530 = vcmp.lt.s32.totalorder %v1508, 4
  %v1531 = vsel %vm1527, %v1511, %v1514
  %v1532 = vsel %vm1530, %v1520, 2102212464
  %v1533 = vsel %vm1529, %v1517, %v1532
  %v1534 = vsel %vm1528, %v1531, %v1533
  %v1535 = vsel %vm1527, %v1514, %v1517
  %v1536 = vsel %vm1530, %v1523, 920167782
  %v1537 = vsel %vm1529, %v1520, %v1536
  %v1538 = vsel %vm1528, %v1535, %v1537
  %v1539 = vsel %vm1527, %v1517, %v1520
  %v1540 = vsel %vm1530, %v1526, 1326507024
  %v1541 = vsel %vm1529, %v1523, %v1540
  %v1542 = vsel %vm1528, %v1539, %v1541
  %v1543 = vshll.u32 %v1503, 8
  %v1544 = vmul.u32.u64.compose %v1543, %v1542
  %v1545 = vextract.low.u32 %v1544
  %v1546 = vextract.high.u32 %v1544
  %v1547 = vmul.u32.u64.compose %v1543, %v1538
  %v1548 = vextract.low.u32 %v1547
  %v1549 = vextract.high.u32 %v1547
  %v1550 = vmul.u32 %v1543, %v1534
  %v1551 = vadd.s32 %v1546, %v1548
  %vm1552 = vc.u32 %v1546, %v1548
  %v1553 = vadd.s32 %v1549, 1
  %v1554 = vsel %vm1552, %v1553, %v1549
  %v1555 = vadd.s32 %v1550, %v1554
  %v1556 = vadd.s32 %v1555, 536870912
  %v1557 = vshrl.u32 %v1556, 30
  %v1558 = vshll.u32 %v1557, 30
  %v1559 = vsub.s32 %v1555, %v1558
  %vm1560 = vcmp.lt.s32.totalorder %v1559, 0
  %v1561 = vsub.s32 0, %v1559
  %v1562 = vsel %vm1560, %v1561, %v1559
  %v1563 = vclz %v1562
  %v1564 = vsub.s32 %v1563, 2
  %vm1565 = vcmp.gt.s32.totalorder 0, %v1564
  %v1566 = vsel %vm1565, 0, %v1564
  %v1567 = vsub.s32 32, %v1566
  %v1568 = vshll.u32 %v1559, %v1566
  %v1569 = vshrl.u32 %v1551, %v1567
  %v1570 = vor.u32 %v1568, %v1569
  %v1571 = vsub.s32 4294967266, %v1566
  %v1572 = vadd.s32 %v1571, 127
  %v1573 = vshll.u32 %v1572, 23
  %v1574 = vor.u32 4788187, %v1573
  %v1575 = vand.u32 2147483647, %v1574
  %v1577 = vcvt.s32.f32 %v1570
  %v1578 = vmul.f32 %v1577, %v1575
  %v1579 = vxor.u32 %v1578, 2147483648
  %v1580 = vsel %vm1497, %v1579, %v1578
  %v1581 = vsub.s32 4, %v1557
  %v1582 = vsel %vm1497, %v1581, %v1557
  %v1583 = vsel %vm1496, %v742, %v1580
  %v1584 = vsel %vm1496, 0, %v1582
  %v1585 = vcosq.f32.pop %v1583
  %v1586 = vsinq.f32.pop %v1583
  %vm1587 = vweird.f32 %v742
  %v1588 = vadd.s32 %v1584, 3
  %v1589 = vand.u32 %v1588, 3
  %vm1590 = vcmp.lt.s32.totalorder %v1589, 2
  %vm1591 = vcmp.eq.s32.totalorder %v1589, 0
  %v1592 = vxor.u32 %v1586, 2147483648
  %v1593 = vsel %vm1591, %v1585, %v1592
  %vm1594 = vcmp.eq.s32.totalorder %v1589, 2
  %v1595 = vxor.u32 %v1585, 2147483648
  %v1596 = vsel %vm1594, %v1595, %v1586
  %v1597 = vsel %vm1590, %v1593, %v1596
  %v1598 = vsel %vm1587, nan, %v1597
  %v1599 = vand.u32 2147483647, %v743
  %vm1600 = vcmp.le.f32.partialorder %v1599, 0.7853982
  %vm1601 = vcmp.lt.s32.totalorder %v743, 0
  %v1602 = vand.u32 %v743, 2139095040
  %v1603 = vshrl.u32 %v1602, 23
  %v1604 = vsub.s32 %v1603, 127
  %v1605 = vand.u32 2147483647, %v743
  %v1606 = vand.u32 %v1605, 8388607
  %v1607 = vor.u32 %v1606, 8388608
  %v1608 = vsub.s32 0, %v1607
  %v1609 = vadd.s32 %v1604, 1
  %vm1610 = vcmp.gt.s32.totalorder %v1609, 0
  %v1611 = vsel %vm1610, %v1609, 0
  %v1612 = vshrl.u32 %v1611, 5
  %v1613 = vand.u32 %v1611, 31
  %v1614 = vsub.s32 32, %v1613
  %v1615 = vshrl.u32 683565275, %v1614
  %v1616 = vshll.u32 683565275, %v1613
  %v1617 = vshrl.u32 2475754826, %v1614
  %v1618 = vor.u32 %v1616, %v1617
  %v1619 = vshll.u32 2475754826, %v1613
  %v1620 = vshrl.u32 2131351028, %v1614
  %v1621 = vor.u32 %v1619, %v1620
  %v1622 = vshll.u32 2131351028, %v1613
  %v1623 = vshrl.u32 2102212464, %v1614
  %v1624 = vor.u32 %v1622, %v1623
  %v1625 = vshll.u32 2102212464, %v1613
  %v1626 = vshrl.u32 920167782, %v1614
  %v1627 = vor.u32 %v1625, %v1626
  %v1628 = vshll.u32 920167782, %v1613
  %v1629 = vshrl.u32 1326507024, %v1614
  %v1630 = vor.u32 %v1628, %v1629
  %vm1631 = vcmp.lt.s32.totalorder %v1612, 1
  %vm1632 = vcmp.lt.s32.totalorder %v1612, 2
  %vm1633 = vcmp.lt.s32.totalorder %v1612, 3
  %vm1634 = vcmp.lt.s32.totalorder %v1612, 4
  %v1635 = vsel %vm1631, %v1615, %v1618
  %v1636 = vsel %vm1634, %v1624, 2102212464
  %v1637 = vsel %vm1633, %v1621, %v1636
  %v1638 = vsel %vm1632, %v1635, %v1637
  %v1639 = vsel %vm1631, %v1618, %v1621
  %v1640 = vsel %vm1634, %v1627, 920167782
  %v1641 = vsel %vm1633, %v1624, %v1640
  %v1642 = vsel %vm1632, %v1639, %v1641
  %v1643 = vsel %vm1631, %v1621, %v1624
  %v1644 = vsel %vm1634, %v1630, 1326507024
  %v1645 = vsel %vm1633, %v1627, %v1644
  %v1646 = vsel %vm1632, %v1643, %v1645
  %v1647 = vshll.u32 %v1607, 8
  %v1648 = vmul.u32.u64.compose %v1647, %v1646
  %v1649 = vextract.low.u32 %v1648
  %v1650 = vextract.high.u32 %v1648
  %v1651 = vmul.u32.u64.compose %v1647, %v1642
  %v1652 = vextract.low.u32 %v1651
  %v1653 = vextract.high.u32 %v1651
  %v1654 = vmul.u32 %v1647, %v1638
  %v1655 = vadd.s32 %v1650, %v1652
  %vm1656 = vc.u32 %v1650, %v1652
  %v1657 = vadd.s32 %v1653, 1
  %v1658 = vsel %vm1656, %v1657, %v1653
  %v1659 = vadd.s32 %v1654, %v1658
  %v1660 = vadd.s32 %v1659, 536870912
  %v1661 = vshrl.u32 %v1660, 30
  %v1662 = vshll.u32 %v1661, 30
  %v1663 = vsub.s32 %v1659, %v1662
  %vm1664 = vcmp.lt.s32.totalorder %v1663, 0
  %v1665 = vsub.s32 0, %v1663
  %v1666 = vsel %vm1664, %v1665, %v1663
  %v1667 = vclz %v1666
  %v1668 = vsub.s32 %v1667, 2
  %vm1669 = vcmp.gt.s32.totalorder 0, %v1668
  %v1670 = vsel %vm1669, 0, %v1668
  %v1671 = vsub.s32 32, %v1670
  %v1672 = vshll.u32 %v1663, %v1670
  %v1673 = vshrl.u32 %v1655, %v1671
  %v1674 = vor.u32 %v1672, %v1673
  %v1675 = vsub.s32 4294967266, %v1670
  %v1676 = vadd.s32 %v1675, 127
  %v1677 = vshll.u32 %v1676, 23
  %v1678 = vor.u32 4788187, %v1677
  %v1679 = vand.u32 2147483647, %v1678
  %v1681 = vcvt.s32.f32 %v1674
  %v1682 = vmul.f32 %v1681, %v1679
  %v1683 = vxor.u32 %v1682, 2147483648
  %v1684 = vsel %vm1601, %v1683, %v1682
  %v1685 = vsub.s32 4, %v1661
  %v1686 = vsel %vm1601, %v1685, %v1661
  %v1687 = vsel %vm1600, %v743, %v1684
  %v1688 = vsel %vm1600, 0, %v1686
  %v1689 = vcosq.f32.pop %v1687
  %v1690 = vsinq.f32.pop %v1687
  %vm1691 = vweird.f32 %v743
  %v1692 = vadd.s32 %v1688, 3
  %v1693 = vand.u32 %v1692, 3
  %vm1694 = vcmp.lt.s32.totalorder %v1693, 2
  %vm1695 = vcmp.eq.s32.totalorder %v1693, 0
  %v1696 = vxor.u32 %v1690, 2147483648
  %v1697 = vsel %vm1695, %v1689, %v1696
  %vm1698 = vcmp.eq.s32.totalorder %v1693, 2
  %v1699 = vxor.u32 %v1689, 2147483648
  %v1700 = vsel %vm1698, %v1699, %v1690
  %v1701 = vsel %vm1694, %v1697, %v1700
  %v1702 = vsel %vm1691, nan, %v1701
  %v1703 = vand.u32 2147483647, %v744
  %vm1704 = vcmp.le.f32.partialorder %v1703, 0.7853982
  %vm1705 = vcmp.lt.s32.totalorder %v744, 0
  %v1706 = vand.u32 %v744, 2139095040
  %v1707 = vshrl.u32 %v1706, 23
  %v1708 = vsub.s32 %v1707, 127
  %v1709 = vand.u32 2147483647, %v744
  %v1710 = vand.u32 %v1709, 8388607
  %v1711 = vor.u32 %v1710, 8388608
  %v1712 = vsub.s32 0, %v1711
  %v1713 = vadd.s32 %v1708, 1
  %vm1714 = vcmp.gt.s32.totalorder %v1713, 0
  %v1715 = vsel %vm1714, %v1713, 0
  %v1716 = vshrl.u32 %v1715, 5
  %v1717 = vand.u32 %v1715, 31
  %v1718 = vsub.s32 32, %v1717
  %v1719 = vshrl.u32 683565275, %v1718
  %v1720 = vshll.u32 683565275, %v1717
  %v1721 = vshrl.u32 2475754826, %v1718
  %v1722 = vor.u32 %v1720, %v1721
  %v1723 = vshll.u32 2475754826, %v1717
  %v1724 = vshrl.u32 2131351028, %v1718
  %v1725 = vor.u32 %v1723, %v1724
  %v1726 = vshll.u32 2131351028, %v1717
  %v1727 = vshrl.u32 2102212464, %v1718
  %v1728 = vor.u32 %v1726, %v1727
  %v1729 = vshll.u32 2102212464, %v1717
  %v1730 = vshrl.u32 920167782, %v1718
  %v1731 = vor.u32 %v1729, %v1730
  %v1732 = vshll.u32 920167782, %v1717
  %v1733 = vshrl.u32 1326507024, %v1718
  %v1734 = vor.u32 %v1732, %v1733
  %vm1735 = vcmp.lt.s32.totalorder %v1716, 1
  %vm1736 = vcmp.lt.s32.totalorder %v1716, 2
  %vm1737 = vcmp.lt.s32.totalorder %v1716, 3
  %vm1738 = vcmp.lt.s32.totalorder %v1716, 4
  %v1739 = vsel %vm1735, %v1719, %v1722
  %v1740 = vsel %vm1738, %v1728, 2102212464
  %v1741 = vsel %vm1737, %v1725, %v1740
  %v1742 = vsel %vm1736, %v1739, %v1741
  %v1743 = vsel %vm1735, %v1722, %v1725
  %v1744 = vsel %vm1738, %v1731, 920167782
  %v1745 = vsel %vm1737, %v1728, %v1744
  %v1746 = vsel %vm1736, %v1743, %v1745
  %v1747 = vsel %vm1735, %v1725, %v1728
  %v1748 = vsel %vm1738, %v1734, 1326507024
  %v1749 = vsel %vm1737, %v1731, %v1748
  %v1750 = vsel %vm1736, %v1747, %v1749
  %v1751 = vshll.u32 %v1711, 8
  %v1752 = vmul.u32.u64.compose %v1751, %v1750
  %v1753 = vextract.low.u32 %v1752
  %v1754 = vextract.high.u32 %v1752
  %v1755 = vmul.u32.u64.compose %v1751, %v1746
  %v1756 = vextract.low.u32 %v1755
  %v1757 = vextract.high.u32 %v1755
  %v1758 = vmul.u32 %v1751, %v1742
  %v1759 = vadd.s32 %v1754, %v1756
  %vm1760 = vc.u32 %v1754, %v1756
  %v1761 = vadd.s32 %v1757, 1
  %v1762 = vsel %vm1760, %v1761, %v1757
  %v1763 = vadd.s32 %v1758, %v1762
  %v1764 = vadd.s32 %v1763, 536870912
  %v1765 = vshrl.u32 %v1764, 30
  %v1766 = vshll.u32 %v1765, 30
  %v1767 = vsub.s32 %v1763, %v1766
  %vm1768 = vcmp.lt.s32.totalorder %v1767, 0
  %v1769 = vsub.s32 0, %v1767
  %v1770 = vsel %vm1768, %v1769, %v1767
  %v1771 = vclz %v1770
  %v1772 = vsub.s32 %v1771, 2
  %vm1773 = vcmp.gt.s32.totalorder 0, %v1772
  %v1774 = vsel %vm1773, 0, %v1772
  %v1775 = vsub.s32 32, %v1774
  %v1776 = vshll.u32 %v1767, %v1774
  %v1777 = vshrl.u32 %v1759, %v1775
  %v1778 = vor.u32 %v1776, %v1777
  %v1779 = vsub.s32 4294967266, %v1774
  %v1780 = vadd.s32 %v1779, 127
  %v1781 = vshll.u32 %v1780, 23
  %v1782 = vor.u32 4788187, %v1781
  %v1783 = vand.u32 2147483647, %v1782
  %v1785 = vcvt.s32.f32 %v1778
  %v1786 = vmul.f32 %v1785, %v1783
  %v1787 = vxor.u32 %v1786, 2147483648
  %v1788 = vsel %vm1705, %v1787, %v1786
  %v1789 = vsub.s32 4, %v1765
  %v1790 = vsel %vm1705, %v1789, %v1765
  %v1791 = vsel %vm1704, %v744, %v1788
  %v1792 = vsel %vm1704, 0, %v1790
  %v1793 = vcosq.f32.pop %v1791
  %v1794 = vsinq.f32.pop %v1791
  %vm1795 = vweird.f32 %v744
  %v1796 = vadd.s32 %v1792, 3
  %v1797 = vand.u32 %v1796, 3
  %vm1798 = vcmp.lt.s32.totalorder %v1797, 2
  %vm1799 = vcmp.eq.s32.totalorder %v1797, 0
  %v1800 = vxor.u32 %v1794, 2147483648
  %v1801 = vsel %vm1799, %v1793, %v1800
  %vm1802 = vcmp.eq.s32.totalorder %v1797, 2
  %v1803 = vxor.u32 %v1793, 2147483648
  %v1804 = vsel %vm1802, %v1803, %v1794
  %v1805 = vsel %vm1798, %v1801, %v1804
  %v1806 = vsel %vm1795, nan, %v1805
  %v1807 = vand.u32 2147483647, %v745
  %vm1808 = vcmp.le.f32.partialorder %v1807, 0.7853982
  %vm1809 = vcmp.lt.s32.totalorder %v745, 0
  %v1810 = vand.u32 %v745, 2139095040
  %v1811 = vshrl.u32 %v1810, 23
  %v1812 = vsub.s32 %v1811, 127
  %v1813 = vand.u32 2147483647, %v745
  %v1814 = vand.u32 %v1813, 8388607
  %v1815 = vor.u32 %v1814, 8388608
  %v1816 = vsub.s32 0, %v1815
  %v1817 = vadd.s32 %v1812, 1
  %vm1818 = vcmp.gt.s32.totalorder %v1817, 0
  %v1819 = vsel %vm1818, %v1817, 0
  %v1820 = vshrl.u32 %v1819, 5
  %v1821 = vand.u32 %v1819, 31
  %v1822 = vsub.s32 32, %v1821
  %v1823 = vshrl.u32 683565275, %v1822
  %v1824 = vshll.u32 683565275, %v1821
  %v1825 = vshrl.u32 2475754826, %v1822
  %v1826 = vor.u32 %v1824, %v1825
  %v1827 = vshll.u32 2475754826, %v1821
  %v1828 = vshrl.u32 2131351028, %v1822
  %v1829 = vor.u32 %v1827, %v1828
  %v1830 = vshll.u32 2131351028, %v1821
  %v1831 = vshrl.u32 2102212464, %v1822
  %v1832 = vor.u32 %v1830, %v1831
  %v1833 = vshll.u32 2102212464, %v1821
  %v1834 = vshrl.u32 920167782, %v1822
  %v1835 = vor.u32 %v1833, %v1834
  %v1836 = vshll.u32 920167782, %v1821
  %v1837 = vshrl.u32 1326507024, %v1822
  %v1838 = vor.u32 %v1836, %v1837
  %vm1839 = vcmp.lt.s32.totalorder %v1820, 1
  %vm1840 = vcmp.lt.s32.totalorder %v1820, 2
  %vm1841 = vcmp.lt.s32.totalorder %v1820, 3
  %vm1842 = vcmp.lt.s32.totalorder %v1820, 4
  %v1843 = vsel %vm1839, %v1823, %v1826
  %v1844 = vsel %vm1842, %v1832, 2102212464
  %v1845 = vsel %vm1841, %v1829, %v1844
  %v1846 = vsel %vm1840, %v1843, %v1845
  %v1847 = vsel %vm1839, %v1826, %v1829
  %v1848 = vsel %vm1842, %v1835, 920167782
  %v1849 = vsel %vm1841, %v1832, %v1848
  %v1850 = vsel %vm1840, %v1847, %v1849
  %v1851 = vsel %vm1839, %v1829, %v1832
  %v1852 = vsel %vm1842, %v1838, 1326507024
  %v1853 = vsel %vm1841, %v1835, %v1852
  %v1854 = vsel %vm1840, %v1851, %v1853
  %v1855 = vshll.u32 %v1815, 8
  %v1856 = vmul.u32.u64.compose %v1855, %v1854
  %v1857 = vextract.low.u32 %v1856
  %v1858 = vextract.high.u32 %v1856
  %v1859 = vmul.u32.u64.compose %v1855, %v1850
  %v1860 = vextract.low.u32 %v1859
  %v1861 = vextract.high.u32 %v1859
  %v1862 = vmul.u32 %v1855, %v1846
  %v1863 = vadd.s32 %v1858, %v1860
  %vm1864 = vc.u32 %v1858, %v1860
  %v1865 = vadd.s32 %v1861, 1
  %v1866 = vsel %vm1864, %v1865, %v1861
  %v1867 = vadd.s32 %v1862, %v1866
  %v1868 = vadd.s32 %v1867, 536870912
  %v1869 = vshrl.u32 %v1868, 30
  %v1870 = vshll.u32 %v1869, 30
  %v1871 = vsub.s32 %v1867, %v1870
  %vm1872 = vcmp.lt.s32.totalorder %v1871, 0
  %v1873 = vsub.s32 0, %v1871
  %v1874 = vsel %vm1872, %v1873, %v1871
  %v1875 = vclz %v1874
  %v1876 = vsub.s32 %v1875, 2
  %vm1877 = vcmp.gt.s32.totalorder 0, %v1876
  %v1878 = vsel %vm1877, 0, %v1876
  %v1879 = vsub.s32 32, %v1878
  %v1880 = vshll.u32 %v1871, %v1878
  %v1881 = vshrl.u32 %v1863, %v1879
  %v1882 = vor.u32 %v1880, %v1881
  %v1883 = vsub.s32 4294967266, %v1878
  %v1884 = vadd.s32 %v1883, 127
  %v1885 = vshll.u32 %v1884, 23
  %v1886 = vor.u32 4788187, %v1885
  %v1887 = vand.u32 2147483647, %v1886
  %v1889 = vcvt.s32.f32 %v1882
  %v1890 = vmul.f32 %v1889, %v1887
  %v1891 = vxor.u32 %v1890, 2147483648
  %v1892 = vsel %vm1809, %v1891, %v1890
  %v1893 = vsub.s32 4, %v1869
  %v1894 = vsel %vm1809, %v1893, %v1869
  %v1895 = vsel %vm1808, %v745, %v1892
  %v1896 = vsel %vm1808, 0, %v1894
  %v1897 = vcosq.f32.pop %v1895
  %v1898 = vsinq.f32.pop %v1895
  %vm1899 = vweird.f32 %v745
  %v1900 = vadd.s32 %v1896, 3
  %v1901 = vand.u32 %v1900, 3
  %vm1902 = vcmp.lt.s32.totalorder %v1901, 2
  %vm1903 = vcmp.eq.s32.totalorder %v1901, 0
  %v1904 = vxor.u32 %v1898, 2147483648
  %v1905 = vsel %vm1903, %v1897, %v1904
  %vm1906 = vcmp.eq.s32.totalorder %v1901, 2
  %v1907 = vxor.u32 %v1897, 2147483648
  %v1908 = vsel %vm1906, %v1907, %v1898
  %v1909 = vsel %vm1902, %v1905, %v1908
  %v1910 = vsel %vm1899, nan, %v1909
  %v1911 = vand.u32 2147483647, %v746
  %vm1912 = vcmp.le.f32.partialorder %v1911, 0.7853982
  %vm1913 = vcmp.lt.s32.totalorder %v746, 0
  %v1914 = vand.u32 %v746, 2139095040
  %v1915 = vshrl.u32 %v1914, 23
  %v1916 = vsub.s32 %v1915, 127
  %v1917 = vand.u32 2147483647, %v746
  %v1918 = vand.u32 %v1917, 8388607
  %v1919 = vor.u32 %v1918, 8388608
  %v1920 = vsub.s32 0, %v1919
  %v1921 = vadd.s32 %v1916, 1
  %vm1922 = vcmp.gt.s32.totalorder %v1921, 0
  %v1923 = vsel %vm1922, %v1921, 0
  %v1924 = vshrl.u32 %v1923, 5
  %v1925 = vand.u32 %v1923, 31
  %v1926 = vsub.s32 32, %v1925
  %v1927 = vshrl.u32 683565275, %v1926
  %v1928 = vshll.u32 683565275, %v1925
  %v1929 = vshrl.u32 2475754826, %v1926
  %v1930 = vor.u32 %v1928, %v1929
  %v1931 = vshll.u32 2475754826, %v1925
  %v1932 = vshrl.u32 2131351028, %v1926
  %v1933 = vor.u32 %v1931, %v1932
  %v1934 = vshll.u32 2131351028, %v1925
  %v1935 = vshrl.u32 2102212464, %v1926
  %v1936 = vor.u32 %v1934, %v1935
  %v1937 = vshll.u32 2102212464, %v1925
  %v1938 = vshrl.u32 920167782, %v1926
  %v1939 = vor.u32 %v1937, %v1938
  %v1940 = vshll.u32 920167782, %v1925
  %v1941 = vshrl.u32 1326507024, %v1926
  %v1942 = vor.u32 %v1940, %v1941
  %vm1943 = vcmp.lt.s32.totalorder %v1924, 1
  %vm1944 = vcmp.lt.s32.totalorder %v1924, 2
  %vm1945 = vcmp.lt.s32.totalorder %v1924, 3
  %vm1946 = vcmp.lt.s32.totalorder %v1924, 4
  %v1947 = vsel %vm1943, %v1927, %v1930
  %v1948 = vsel %vm1946, %v1936, 2102212464
  %v1949 = vsel %vm1945, %v1933, %v1948
  %v1950 = vsel %vm1944, %v1947, %v1949
  %v1951 = vsel %vm1943, %v1930, %v1933
  %v1952 = vsel %vm1946, %v1939, 920167782
  %v1953 = vsel %vm1945, %v1936, %v1952
  %v1954 = vsel %vm1944, %v1951, %v1953
  %v1955 = vsel %vm1943, %v1933, %v1936
  %v1956 = vsel %vm1946, %v1942, 1326507024
  %v1957 = vsel %vm1945, %v1939, %v1956
  %v1958 = vsel %vm1944, %v1955, %v1957
  %v1959 = vshll.u32 %v1919, 8
  %v1960 = vmul.u32.u64.compose %v1959, %v1958
  %v1961 = vextract.low.u32 %v1960
  %v1962 = vextract.high.u32 %v1960
  %v1963 = vmul.u32.u64.compose %v1959, %v1954
  %v1964 = vextract.low.u32 %v1963
  %v1965 = vextract.high.u32 %v1963
  %v1966 = vmul.u32 %v1959, %v1950
  %v1967 = vadd.s32 %v1962, %v1964
  %vm1968 = vc.u32 %v1962, %v1964
  %v1969 = vadd.s32 %v1965, 1
  %v1970 = vsel %vm1968, %v1969, %v1965
  %v1971 = vadd.s32 %v1966, %v1970
  %v1972 = vadd.s32 %v1971, 536870912
  %v1973 = vshrl.u32 %v1972, 30
  %v1974 = vshll.u32 %v1973, 30
  %v1975 = vsub.s32 %v1971, %v1974
  %vm1976 = vcmp.lt.s32.totalorder %v1975, 0
  %v1977 = vsub.s32 0, %v1975
  %v1978 = vsel %vm1976, %v1977, %v1975
  %v1979 = vclz %v1978
  %v1980 = vsub.s32 %v1979, 2
  %vm1981 = vcmp.gt.s32.totalorder 0, %v1980
  %v1982 = vsel %vm1981, 0, %v1980
  %v1983 = vsub.s32 32, %v1982
  %v1984 = vshll.u32 %v1975, %v1982
  %v1985 = vshrl.u32 %v1967, %v1983
  %v1986 = vor.u32 %v1984, %v1985
  %v1987 = vsub.s32 4294967266, %v1982
  %v1988 = vadd.s32 %v1987, 127
  %v1989 = vshll.u32 %v1988, 23
  %v1990 = vor.u32 4788187, %v1989
  %v1991 = vand.u32 2147483647, %v1990
  %v1993 = vcvt.s32.f32 %v1986
  %v1994 = vmul.f32 %v1993, %v1991
  %v1995 = vxor.u32 %v1994, 2147483648
  %v1996 = vsel %vm1913, %v1995, %v1994
  %v1997 = vsub.s32 4, %v1973
  %v1998 = vsel %vm1913, %v1997, %v1973
  %v1999 = vsel %vm1912, %v746, %v1996
  %v2000 = vsel %vm1912, 0, %v1998
  %v2001 = vcosq.f32.pop %v1999
  %v2002 = vsinq.f32.pop %v1999
  %vm2003 = vweird.f32 %v746
  %v2004 = vadd.s32 %v2000, 3
  %v2005 = vand.u32 %v2004, 3
  %vm2006 = vcmp.lt.s32.totalorder %v2005, 2
  %vm2007 = vcmp.eq.s32.totalorder %v2005, 0
  %v2008 = vxor.u32 %v2002, 2147483648
  %v2009 = vsel %vm2007, %v2001, %v2008
  %vm2010 = vcmp.eq.s32.totalorder %v2005, 2
  %v2011 = vxor.u32 %v2001, 2147483648
  %v2012 = vsel %vm2010, %v2011, %v2002
  %v2013 = vsel %vm2006, %v2009, %v2012
  %v2014 = vsel %vm2003, nan, %v2013
  %v2015 = vand.u32 2147483647, %v747
  %vm2016 = vcmp.le.f32.partialorder %v2015, 0.7853982
  %vm2017 = vcmp.lt.s32.totalorder %v747, 0
  %v2018 = vand.u32 %v747, 2139095040
  %v2019 = vshrl.u32 %v2018, 23
  %v2020 = vsub.s32 %v2019, 127
  %v2021 = vand.u32 2147483647, %v747
  %v2022 = vand.u32 %v2021, 8388607
  %v2023 = vor.u32 %v2022, 8388608
  %v2024 = vsub.s32 0, %v2023
  %v2025 = vadd.s32 %v2020, 1
  %vm2026 = vcmp.gt.s32.totalorder %v2025, 0
  %v2027 = vsel %vm2026, %v2025, 0
  %v2028 = vshrl.u32 %v2027, 5
  %v2029 = vand.u32 %v2027, 31
  %v2030 = vsub.s32 32, %v2029
  %v2031 = vshrl.u32 683565275, %v2030
  %v2032 = vshll.u32 683565275, %v2029
  %v2033 = vshrl.u32 2475754826, %v2030
  %v2034 = vor.u32 %v2032, %v2033
  %v2035 = vshll.u32 2475754826, %v2029
  %v2036 = vshrl.u32 2131351028, %v2030
  %v2037 = vor.u32 %v2035, %v2036
  %v2038 = vshll.u32 2131351028, %v2029
  %v2039 = vshrl.u32 2102212464, %v2030
  %v2040 = vor.u32 %v2038, %v2039
  %v2041 = vshll.u32 2102212464, %v2029
  %v2042 = vshrl.u32 920167782, %v2030
  %v2043 = vor.u32 %v2041, %v2042
  %v2044 = vshll.u32 920167782, %v2029
  %v2045 = vshrl.u32 1326507024, %v2030
  %v2046 = vor.u32 %v2044, %v2045
  %vm2047 = vcmp.lt.s32.totalorder %v2028, 1
  %vm2048 = vcmp.lt.s32.totalorder %v2028, 2
  %vm2049 = vcmp.lt.s32.totalorder %v2028, 3
  %vm2050 = vcmp.lt.s32.totalorder %v2028, 4
  %v2051 = vsel %vm2047, %v2031, %v2034
  %v2052 = vsel %vm2050, %v2040, 2102212464
  %v2053 = vsel %vm2049, %v2037, %v2052
  %v2054 = vsel %vm2048, %v2051, %v2053
  %v2055 = vsel %vm2047, %v2034, %v2037
  %v2056 = vsel %vm2050, %v2043, 920167782
  %v2057 = vsel %vm2049, %v2040, %v2056
  %v2058 = vsel %vm2048, %v2055, %v2057
  %v2059 = vsel %vm2047, %v2037, %v2040
  %v2060 = vsel %vm2050, %v2046, 1326507024
  %v2061 = vsel %vm2049, %v2043, %v2060
  %v2062 = vsel %vm2048, %v2059, %v2061
  %v2063 = vshll.u32 %v2023, 8
  %v2064 = vmul.u32.u64.compose %v2063, %v2062
  %v2065 = vextract.low.u32 %v2064
  %v2066 = vextract.high.u32 %v2064
  %v2067 = vmul.u32.u64.compose %v2063, %v2058
  %v2068 = vextract.low.u32 %v2067
  %v2069 = vextract.high.u32 %v2067
  %v2070 = vmul.u32 %v2063, %v2054
  %v2071 = vadd.s32 %v2066, %v2068
  %vm2072 = vc.u32 %v2066, %v2068
  %v2073 = vadd.s32 %v2069, 1
  %v2074 = vsel %vm2072, %v2073, %v2069
  %v2075 = vadd.s32 %v2070, %v2074
  %v2076 = vadd.s32 %v2075, 536870912
  %v2077 = vshrl.u32 %v2076, 30
  %v2078 = vshll.u32 %v2077, 30
  %v2079 = vsub.s32 %v2075, %v2078
  %vm2080 = vcmp.lt.s32.totalorder %v2079, 0
  %v2081 = vsub.s32 0, %v2079
  %v2082 = vsel %vm2080, %v2081, %v2079
  %v2083 = vclz %v2082
  %v2084 = vsub.s32 %v2083, 2
  %vm2085 = vcmp.gt.s32.totalorder 0, %v2084
  %v2086 = vsel %vm2085, 0, %v2084
  %v2087 = vsub.s32 32, %v2086
  %v2088 = vshll.u32 %v2079, %v2086
  %v2089 = vshrl.u32 %v2071, %v2087
  %v2090 = vor.u32 %v2088, %v2089
  %v2091 = vsub.s32 4294967266, %v2086
  %v2092 = vadd.s32 %v2091, 127
  %v2093 = vshll.u32 %v2092, 23
  %v2094 = vor.u32 4788187, %v2093
  %v2095 = vand.u32 2147483647, %v2094
  %v2097 = vcvt.s32.f32 %v2090
  %v2098 = vmul.f32 %v2097, %v2095
  %v2099 = vxor.u32 %v2098, 2147483648
  %v2100 = vsel %vm2017, %v2099, %v2098
  %v2101 = vsub.s32 4, %v2077
  %v2102 = vsel %vm2017, %v2101, %v2077
  %v2103 = vsel %vm2016, %v747, %v2100
  %v2104 = vsel %vm2016, 0, %v2102
  %v2105 = vcosq.f32.pop %v2103
  %v2106 = vsinq.f32.pop %v2103
  %vm2107 = vweird.f32 %v747
  %v2108 = vadd.s32 %v2104, 3
  %v2109 = vand.u32 %v2108, 3
  %vm2110 = vcmp.lt.s32.totalorder %v2109, 2
  %vm2111 = vcmp.eq.s32.totalorder %v2109, 0
  %v2112 = vxor.u32 %v2106, 2147483648
  %v2113 = vsel %vm2111, %v2105, %v2112
  %vm2114 = vcmp.eq.s32.totalorder %v2109, 2
  %v2115 = vxor.u32 %v2105, 2147483648
  %v2116 = vsel %vm2114, %v2115, %v2106
  %v2117 = vsel %vm2110, %v2113, %v2116
  %v2118 = vsel %vm2107, nan, %v2117
  %v2119 = vand.u32 2147483647, %v748
  %vm2120 = vcmp.le.f32.partialorder %v2119, 0.7853982
  %vm2121 = vcmp.lt.s32.totalorder %v748, 0
  %v2122 = vand.u32 %v748, 2139095040
  %v2123 = vshrl.u32 %v2122, 23
  %v2124 = vsub.s32 %v2123, 127
  %v2125 = vand.u32 2147483647, %v748
  %v2126 = vand.u32 %v2125, 8388607
  %v2127 = vor.u32 %v2126, 8388608
  %v2128 = vsub.s32 0, %v2127
  %v2129 = vadd.s32 %v2124, 1
  %vm2130 = vcmp.gt.s32.totalorder %v2129, 0
  %v2131 = vsel %vm2130, %v2129, 0
  %v2132 = vshrl.u32 %v2131, 5
  %v2133 = vand.u32 %v2131, 31
  %v2134 = vsub.s32 32, %v2133
  %v2135 = vshrl.u32 683565275, %v2134
  %v2136 = vshll.u32 683565275, %v2133
  %v2137 = vshrl.u32 2475754826, %v2134
  %v2138 = vor.u32 %v2136, %v2137
  %v2139 = vshll.u32 2475754826, %v2133
  %v2140 = vshrl.u32 2131351028, %v2134
  %v2141 = vor.u32 %v2139, %v2140
  %v2142 = vshll.u32 2131351028, %v2133
  %v2143 = vshrl.u32 2102212464, %v2134
  %v2144 = vor.u32 %v2142, %v2143
  %v2145 = vshll.u32 2102212464, %v2133
  %v2146 = vshrl.u32 920167782, %v2134
  %v2147 = vor.u32 %v2145, %v2146
  %v2148 = vshll.u32 920167782, %v2133
  %v2149 = vshrl.u32 1326507024, %v2134
  %v2150 = vor.u32 %v2148, %v2149
  %vm2151 = vcmp.lt.s32.totalorder %v2132, 1
  %vm2152 = vcmp.lt.s32.totalorder %v2132, 2
  %vm2153 = vcmp.lt.s32.totalorder %v2132, 3
  %vm2154 = vcmp.lt.s32.totalorder %v2132, 4
  %v2155 = vsel %vm2151, %v2135, %v2138
  %v2156 = vsel %vm2154, %v2144, 2102212464
  %v2157 = vsel %vm2153, %v2141, %v2156
  %v2158 = vsel %vm2152, %v2155, %v2157
  %v2159 = vsel %vm2151, %v2138, %v2141
  %v2160 = vsel %vm2154, %v2147, 920167782
  %v2161 = vsel %vm2153, %v2144, %v2160
  %v2162 = vsel %vm2152, %v2159, %v2161
  %v2163 = vsel %vm2151, %v2141, %v2144
  %v2164 = vsel %vm2154, %v2150, 1326507024
  %v2165 = vsel %vm2153, %v2147, %v2164
  %v2166 = vsel %vm2152, %v2163, %v2165
  %v2167 = vshll.u32 %v2127, 8
  %v2168 = vmul.u32.u64.compose %v2167, %v2166
  %v2169 = vextract.low.u32 %v2168
  %v2170 = vextract.high.u32 %v2168
  %v2171 = vmul.u32.u64.compose %v2167, %v2162
  %v2172 = vextract.low.u32 %v2171
  %v2173 = vextract.high.u32 %v2171
  %v2174 = vmul.u32 %v2167, %v2158
  %v2175 = vadd.s32 %v2170, %v2172
  %vm2176 = vc.u32 %v2170, %v2172
  %v2177 = vadd.s32 %v2173, 1
  %v2178 = vsel %vm2176, %v2177, %v2173
  %v2179 = vadd.s32 %v2174, %v2178
  %v2180 = vadd.s32 %v2179, 536870912
  %v2181 = vshrl.u32 %v2180, 30
  %v2182 = vshll.u32 %v2181, 30
  %v2183 = vsub.s32 %v2179, %v2182
  %vm2184 = vcmp.lt.s32.totalorder %v2183, 0
  %v2185 = vsub.s32 0, %v2183
  %v2186 = vsel %vm2184, %v2185, %v2183
  %v2187 = vclz %v2186
  %v2188 = vsub.s32 %v2187, 2
  %vm2189 = vcmp.gt.s32.totalorder 0, %v2188
  %v2190 = vsel %vm2189, 0, %v2188
  %v2191 = vsub.s32 32, %v2190
  %v2192 = vshll.u32 %v2183, %v2190
  %v2193 = vshrl.u32 %v2175, %v2191
  %v2194 = vor.u32 %v2192, %v2193
  %v2195 = vsub.s32 4294967266, %v2190
  %v2196 = vadd.s32 %v2195, 127
  %v2197 = vshll.u32 %v2196, 23
  %v2198 = vor.u32 4788187, %v2197
  %v2199 = vand.u32 2147483647, %v2198
  %v2201 = vcvt.s32.f32 %v2194
  %v2202 = vmul.f32 %v2201, %v2199
  %v2203 = vxor.u32 %v2202, 2147483648
  %v2204 = vsel %vm2121, %v2203, %v2202
  %v2205 = vsub.s32 4, %v2181
  %v2206 = vsel %vm2121, %v2205, %v2181
  %v2207 = vsel %vm2120, %v748, %v2204
  %v2208 = vsel %vm2120, 0, %v2206
  %v2209 = vcosq.f32.pop %v2207
  %v2210 = vsinq.f32.pop %v2207
  %vm2211 = vweird.f32 %v748
  %v2212 = vadd.s32 %v2208, 3
  %v2213 = vand.u32 %v2212, 3
  %vm2214 = vcmp.lt.s32.totalorder %v2213, 2
  %vm2215 = vcmp.eq.s32.totalorder %v2213, 0
  %v2216 = vxor.u32 %v2210, 2147483648
  %v2217 = vsel %vm2215, %v2209, %v2216
  %vm2218 = vcmp.eq.s32.totalorder %v2213, 2
  %v2219 = vxor.u32 %v2209, 2147483648
  %v2220 = vsel %vm2218, %v2219, %v2210
  %v2221 = vsel %vm2214, %v2217, %v2220
  %v2222 = vsel %vm2211, nan, %v2221
  %v2223 = vand.u32 2147483647, %v749
  %vm2224 = vcmp.le.f32.partialorder %v2223, 0.7853982
  %vm2225 = vcmp.lt.s32.totalorder %v749, 0
  %v2226 = vand.u32 %v749, 2139095040
  %v2227 = vshrl.u32 %v2226, 23
  %v2228 = vsub.s32 %v2227, 127
  %v2229 = vand.u32 2147483647, %v749
  %v2230 = vand.u32 %v2229, 8388607
  %v2231 = vor.u32 %v2230, 8388608
  %v2232 = vsub.s32 0, %v2231
  %v2233 = vadd.s32 %v2228, 1
  %vm2234 = vcmp.gt.s32.totalorder %v2233, 0
  %v2235 = vsel %vm2234, %v2233, 0
  %v2236 = vshrl.u32 %v2235, 5
  %v2237 = vand.u32 %v2235, 31
  %v2238 = vsub.s32 32, %v2237
  %v2239 = vshrl.u32 683565275, %v2238
  %v2240 = vshll.u32 683565275, %v2237
  %v2241 = vshrl.u32 2475754826, %v2238
  %v2242 = vor.u32 %v2240, %v2241
  %v2243 = vshll.u32 2475754826, %v2237
  %v2244 = vshrl.u32 2131351028, %v2238
  %v2245 = vor.u32 %v2243, %v2244
  %v2246 = vshll.u32 2131351028, %v2237
  %v2247 = vshrl.u32 2102212464, %v2238
  %v2248 = vor.u32 %v2246, %v2247
  %v2249 = vshll.u32 2102212464, %v2237
  %v2250 = vshrl.u32 920167782, %v2238
  %v2251 = vor.u32 %v2249, %v2250
  %v2252 = vshll.u32 920167782, %v2237
  %v2253 = vshrl.u32 1326507024, %v2238
  %v2254 = vor.u32 %v2252, %v2253
  %vm2255 = vcmp.lt.s32.totalorder %v2236, 1
  %vm2256 = vcmp.lt.s32.totalorder %v2236, 2
  %vm2257 = vcmp.lt.s32.totalorder %v2236, 3
  %vm2258 = vcmp.lt.s32.totalorder %v2236, 4
  %v2259 = vsel %vm2255, %v2239, %v2242
  %v2260 = vsel %vm2258, %v2248, 2102212464
  %v2261 = vsel %vm2257, %v2245, %v2260
  %v2262 = vsel %vm2256, %v2259, %v2261
  %v2263 = vsel %vm2255, %v2242, %v2245
  %v2264 = vsel %vm2258, %v2251, 920167782
  %v2265 = vsel %vm2257, %v2248, %v2264
  %v2266 = vsel %vm2256, %v2263, %v2265
  %v2267 = vsel %vm2255, %v2245, %v2248
  %v2268 = vsel %vm2258, %v2254, 1326507024
  %v2269 = vsel %vm2257, %v2251, %v2268
  %v2270 = vsel %vm2256, %v2267, %v2269
  %v2271 = vshll.u32 %v2231, 8
  %v2272 = vmul.u32.u64.compose %v2271, %v2270
  %v2273 = vextract.low.u32 %v2272
  %v2274 = vextract.high.u32 %v2272
  %v2275 = vmul.u32.u64.compose %v2271, %v2266
  %v2276 = vextract.low.u32 %v2275
  %v2277 = vextract.high.u32 %v2275
  %v2278 = vmul.u32 %v2271, %v2262
  %v2279 = vadd.s32 %v2274, %v2276
  %vm2280 = vc.u32 %v2274, %v2276
  %v2281 = vadd.s32 %v2277, 1
  %v2282 = vsel %vm2280, %v2281, %v2277
  %v2283 = vadd.s32 %v2278, %v2282
  %v2284 = vadd.s32 %v2283, 536870912
  %v2285 = vshrl.u32 %v2284, 30
  %v2286 = vshll.u32 %v2285, 30
  %v2287 = vsub.s32 %v2283, %v2286
  %vm2288 = vcmp.lt.s32.totalorder %v2287, 0
  %v2289 = vsub.s32 0, %v2287
  %v2290 = vsel %vm2288, %v2289, %v2287
  %v2291 = vclz %v2290
  %v2292 = vsub.s32 %v2291, 2
  %vm2293 = vcmp.gt.s32.totalorder 0, %v2292
  %v2294 = vsel %vm2293, 0, %v2292
  %v2295 = vsub.s32 32, %v2294
  %v2296 = vshll.u32 %v2287, %v2294
  %v2297 = vshrl.u32 %v2279, %v2295
  %v2298 = vor.u32 %v2296, %v2297
  %v2299 = vsub.s32 4294967266, %v2294
  %v2300 = vadd.s32 %v2299, 127
  %v2301 = vshll.u32 %v2300, 23
  %v2302 = vor.u32 4788187, %v2301
  %v2303 = vand.u32 2147483647, %v2302
  %v2305 = vcvt.s32.f32 %v2298
  %v2306 = vmul.f32 %v2305, %v2303
  %v2307 = vxor.u32 %v2306, 2147483648
  %v2308 = vsel %vm2225, %v2307, %v2306
  %v2309 = vsub.s32 4, %v2285
  %v2310 = vsel %vm2225, %v2309, %v2285
  %v2311 = vsel %vm2224, %v749, %v2308
  %v2312 = vsel %vm2224, 0, %v2310
  %v2313 = vcosq.f32.pop %v2311
  %v2314 = vsinq.f32.pop %v2311
  %vm2315 = vweird.f32 %v749
  %v2316 = vadd.s32 %v2312, 3
  %v2317 = vand.u32 %v2316, 3
  %vm2318 = vcmp.lt.s32.totalorder %v2317, 2
  %vm2319 = vcmp.eq.s32.totalorder %v2317, 0
  %v2320 = vxor.u32 %v2314, 2147483648
  %v2321 = vsel %vm2319, %v2313, %v2320
  %vm2322 = vcmp.eq.s32.totalorder %v2317, 2
  %v2323 = vxor.u32 %v2313, 2147483648
  %v2324 = vsel %vm2322, %v2323, %v2314
  %v2325 = vsel %vm2318, %v2321, %v2324
  %v2326 = vsel %vm2315, nan, %v2325
  %v2327 = vand.u32 2147483647, %v750
  %vm2328 = vcmp.le.f32.partialorder %v2327, 0.7853982
  %vm2329 = vcmp.lt.s32.totalorder %v750, 0
  %v2330 = vand.u32 %v750, 2139095040
  %v2331 = vshrl.u32 %v2330, 23
  %v2332 = vsub.s32 %v2331, 127
  %v2333 = vand.u32 2147483647, %v750
  %v2334 = vand.u32 %v2333, 8388607
  %v2335 = vor.u32 %v2334, 8388608
  %v2336 = vsub.s32 0, %v2335
  %v2337 = vadd.s32 %v2332, 1
  %vm2338 = vcmp.gt.s32.totalorder %v2337, 0
  %v2339 = vsel %vm2338, %v2337, 0
  %v2340 = vshrl.u32 %v2339, 5
  %v2341 = vand.u32 %v2339, 31
  %v2342 = vsub.s32 32, %v2341
  %v2343 = vshrl.u32 683565275, %v2342
  %v2344 = vshll.u32 683565275, %v2341
  %v2345 = vshrl.u32 2475754826, %v2342
  %v2346 = vor.u32 %v2344, %v2345
  %v2347 = vshll.u32 2475754826, %v2341
  %v2348 = vshrl.u32 2131351028, %v2342
  %v2349 = vor.u32 %v2347, %v2348
  %v2350 = vshll.u32 2131351028, %v2341
  %v2351 = vshrl.u32 2102212464, %v2342
  %v2352 = vor.u32 %v2350, %v2351
  %v2353 = vshll.u32 2102212464, %v2341
  %v2354 = vshrl.u32 920167782, %v2342
  %v2355 = vor.u32 %v2353, %v2354
  %v2356 = vshll.u32 920167782, %v2341
  %v2357 = vshrl.u32 1326507024, %v2342
  %v2358 = vor.u32 %v2356, %v2357
  %vm2359 = vcmp.lt.s32.totalorder %v2340, 1
  %vm2360 = vcmp.lt.s32.totalorder %v2340, 2
  %vm2361 = vcmp.lt.s32.totalorder %v2340, 3
  %vm2362 = vcmp.lt.s32.totalorder %v2340, 4
  %v2363 = vsel %vm2359, %v2343, %v2346
  %v2364 = vsel %vm2362, %v2352, 2102212464
  %v2365 = vsel %vm2361, %v2349, %v2364
  %v2366 = vsel %vm2360, %v2363, %v2365
  %v2367 = vsel %vm2359, %v2346, %v2349
  %v2368 = vsel %vm2362, %v2355, 920167782
  %v2369 = vsel %vm2361, %v2352, %v2368
  %v2370 = vsel %vm2360, %v2367, %v2369
  %v2371 = vsel %vm2359, %v2349, %v2352
  %v2372 = vsel %vm2362, %v2358, 1326507024
  %v2373 = vsel %vm2361, %v2355, %v2372
  %v2374 = vsel %vm2360, %v2371, %v2373
  %v2375 = vshll.u32 %v2335, 8
  %v2376 = vmul.u32.u64.compose %v2375, %v2374
  %v2377 = vextract.low.u32 %v2376
  %v2378 = vextract.high.u32 %v2376
  %v2379 = vmul.u32.u64.compose %v2375, %v2370
  %v2380 = vextract.low.u32 %v2379
  %v2381 = vextract.high.u32 %v2379
  %v2382 = vmul.u32 %v2375, %v2366
  %v2383 = vadd.s32 %v2378, %v2380
  %vm2384 = vc.u32 %v2378, %v2380
  %v2385 = vadd.s32 %v2381, 1
  %v2386 = vsel %vm2384, %v2385, %v2381
  %v2387 = vadd.s32 %v2382, %v2386
  %v2388 = vadd.s32 %v2387, 536870912
  %v2389 = vshrl.u32 %v2388, 30
  %v2390 = vshll.u32 %v2389, 30
  %v2391 = vsub.s32 %v2387, %v2390
  %vm2392 = vcmp.lt.s32.totalorder %v2391, 0
  %v2393 = vsub.s32 0, %v2391
  %v2394 = vsel %vm2392, %v2393, %v2391
  %v2395 = vclz %v2394
  %v2396 = vsub.s32 %v2395, 2
  %vm2397 = vcmp.gt.s32.totalorder 0, %v2396
  %v2398 = vsel %vm2397, 0, %v2396
  %v2399 = vsub.s32 32, %v2398
  %v2400 = vshll.u32 %v2391, %v2398
  %v2401 = vshrl.u32 %v2383, %v2399
  %v2402 = vor.u32 %v2400, %v2401
  %v2403 = vsub.s32 4294967266, %v2398
  %v2404 = vadd.s32 %v2403, 127
  %v2405 = vshll.u32 %v2404, 23
  %v2406 = vor.u32 4788187, %v2405
  %v2407 = vand.u32 2147483647, %v2406
  %v2409 = vcvt.s32.f32 %v2402
  %v2410 = vmul.f32 %v2409, %v2407
  %v2411 = vxor.u32 %v2410, 2147483648
  %v2412 = vsel %vm2329, %v2411, %v2410
  %v2413 = vsub.s32 4, %v2389
  %v2414 = vsel %vm2329, %v2413, %v2389
  %v2415 = vsel %vm2328, %v750, %v2412
  %v2416 = vsel %vm2328, 0, %v2414
  %v2417 = vcosq.f32.pop %v2415
  %v2418 = vsinq.f32.pop %v2415
  %vm2419 = vweird.f32 %v750
  %v2420 = vadd.s32 %v2416, 3
  %v2421 = vand.u32 %v2420, 3
  %vm2422 = vcmp.lt.s32.totalorder %v2421, 2
  %vm2423 = vcmp.eq.s32.totalorder %v2421, 0
  %v2424 = vxor.u32 %v2418, 2147483648
  %v2425 = vsel %vm2423, %v2417, %v2424
  %vm2426 = vcmp.eq.s32.totalorder %v2421, 2
  %v2427 = vxor.u32 %v2417, 2147483648
  %v2428 = vsel %vm2426, %v2427, %v2418
  %v2429 = vsel %vm2422, %v2425, %v2428
  %v2430 = vsel %vm2419, nan, %v2429
  %v2431 = vand.u32 2147483647, %v751
  %vm2432 = vcmp.le.f32.partialorder %v2431, 0.7853982
  %vm2433 = vcmp.lt.s32.totalorder %v751, 0
  %v2434 = vand.u32 %v751, 2139095040
  %v2435 = vshrl.u32 %v2434, 23
  %v2436 = vsub.s32 %v2435, 127
  %v2437 = vand.u32 2147483647, %v751
  %v2438 = vand.u32 %v2437, 8388607
  %v2439 = vor.u32 %v2438, 8388608
  %v2440 = vsub.s32 0, %v2439
  %v2441 = vadd.s32 %v2436, 1
  %vm2442 = vcmp.gt.s32.totalorder %v2441, 0
  %v2443 = vsel %vm2442, %v2441, 0
  %v2444 = vshrl.u32 %v2443, 5
  %v2445 = vand.u32 %v2443, 31
  %v2446 = vsub.s32 32, %v2445
  %v2447 = vshrl.u32 683565275, %v2446
  %v2448 = vshll.u32 683565275, %v2445
  %v2449 = vshrl.u32 2475754826, %v2446
  %v2450 = vor.u32 %v2448, %v2449
  %v2451 = vshll.u32 2475754826, %v2445
  %v2452 = vshrl.u32 2131351028, %v2446
  %v2453 = vor.u32 %v2451, %v2452
  %v2454 = vshll.u32 2131351028, %v2445
  %v2455 = vshrl.u32 2102212464, %v2446
  %v2456 = vor.u32 %v2454, %v2455
  %v2457 = vshll.u32 2102212464, %v2445
  %v2458 = vshrl.u32 920167782, %v2446
  %v2459 = vor.u32 %v2457, %v2458
  %v2460 = vshll.u32 920167782, %v2445
  %v2461 = vshrl.u32 1326507024, %v2446
  %v2462 = vor.u32 %v2460, %v2461
  %vm2463 = vcmp.lt.s32.totalorder %v2444, 1
  %vm2464 = vcmp.lt.s32.totalorder %v2444, 2
  %vm2465 = vcmp.lt.s32.totalorder %v2444, 3
  %vm2466 = vcmp.lt.s32.totalorder %v2444, 4
  %v2467 = vsel %vm2463, %v2447, %v2450
  %v2468 = vsel %vm2466, %v2456, 2102212464
  %v2469 = vsel %vm2465, %v2453, %v2468
  %v2470 = vsel %vm2464, %v2467, %v2469
  %v2471 = vsel %vm2463, %v2450, %v2453
  %v2472 = vsel %vm2466, %v2459, 920167782
  %v2473 = vsel %vm2465, %v2456, %v2472
  %v2474 = vsel %vm2464, %v2471, %v2473
  %v2475 = vsel %vm2463, %v2453, %v2456
  %v2476 = vsel %vm2466, %v2462, 1326507024
  %v2477 = vsel %vm2465, %v2459, %v2476
  %v2478 = vsel %vm2464, %v2475, %v2477
  %v2479 = vshll.u32 %v2439, 8
  %v2480 = vmul.u32.u64.compose %v2479, %v2478
  %v2481 = vextract.low.u32 %v2480
  %v2482 = vextract.high.u32 %v2480
  %v2483 = vmul.u32.u64.compose %v2479, %v2474
  %v2484 = vextract.low.u32 %v2483
  %v2485 = vextract.high.u32 %v2483
  %v2486 = vmul.u32 %v2479, %v2470
  %v2487 = vadd.s32 %v2482, %v2484
  %vm2488 = vc.u32 %v2482, %v2484
  %v2489 = vadd.s32 %v2485, 1
  %v2490 = vsel %vm2488, %v2489, %v2485
  %v2491 = vadd.s32 %v2486, %v2490
  %v2492 = vadd.s32 %v2491, 536870912
  %v2493 = vshrl.u32 %v2492, 30
  %v2494 = vshll.u32 %v2493, 30
  %v2495 = vsub.s32 %v2491, %v2494
  %vm2496 = vcmp.lt.s32.totalorder %v2495, 0
  %v2497 = vsub.s32 0, %v2495
  %v2498 = vsel %vm2496, %v2497, %v2495
  %v2499 = vclz %v2498
  %v2500 = vsub.s32 %v2499, 2
  %vm2501 = vcmp.gt.s32.totalorder 0, %v2500
  %v2502 = vsel %vm2501, 0, %v2500
  %v2503 = vsub.s32 32, %v2502
  %v2504 = vshll.u32 %v2495, %v2502
  %v2505 = vshrl.u32 %v2487, %v2503
  %v2506 = vor.u32 %v2504, %v2505
  %v2507 = vsub.s32 4294967266, %v2502
  %v2508 = vadd.s32 %v2507, 127
  %v2509 = vshll.u32 %v2508, 23
  %v2510 = vor.u32 4788187, %v2509
  %v2511 = vand.u32 2147483647, %v2510
  %v2513 = vcvt.s32.f32 %v2506
  %v2514 = vmul.f32 %v2513, %v2511
  %v2515 = vxor.u32 %v2514, 2147483648
  %v2516 = vsel %vm2433, %v2515, %v2514
  %v2517 = vsub.s32 4, %v2493
  %v2518 = vsel %vm2433, %v2517, %v2493
  %v2519 = vsel %vm2432, %v751, %v2516
  %v2520 = vsel %vm2432, 0, %v2518
  %v2521 = vcosq.f32.pop %v2519
  %v2522 = vsinq.f32.pop %v2519
  %vm2523 = vweird.f32 %v751
  %v2524 = vadd.s32 %v2520, 3
  %v2525 = vand.u32 %v2524, 3
  %vm2526 = vcmp.lt.s32.totalorder %v2525, 2
  %vm2527 = vcmp.eq.s32.totalorder %v2525, 0
  %v2528 = vxor.u32 %v2522, 2147483648
  %v2529 = vsel %vm2527, %v2521, %v2528
  %vm2530 = vcmp.eq.s32.totalorder %v2525, 2
  %v2531 = vxor.u32 %v2521, 2147483648
  %v2532 = vsel %vm2530, %v2531, %v2522
  %v2533 = vsel %vm2526, %v2529, %v2532
  %v2534 = vsel %vm2523, nan, %v2533
  %v2535 = vand.u32 2147483647, %v752
  %vm2536 = vcmp.le.f32.partialorder %v2535, 0.7853982
  %vm2537 = vcmp.lt.s32.totalorder %v752, 0
  %v2538 = vand.u32 %v752, 2139095040
  %v2539 = vshrl.u32 %v2538, 23
  %v2540 = vsub.s32 %v2539, 127
  %v2541 = vand.u32 2147483647, %v752
  %v2542 = vand.u32 %v2541, 8388607
  %v2543 = vor.u32 %v2542, 8388608
  %v2544 = vsub.s32 0, %v2543
  %v2545 = vadd.s32 %v2540, 1
  %vm2546 = vcmp.gt.s32.totalorder %v2545, 0
  %v2547 = vsel %vm2546, %v2545, 0
  %v2548 = vshrl.u32 %v2547, 5
  %v2549 = vand.u32 %v2547, 31
  %v2550 = vsub.s32 32, %v2549
  %v2551 = vshrl.u32 683565275, %v2550
  %v2552 = vshll.u32 683565275, %v2549
  %v2553 = vshrl.u32 2475754826, %v2550
  %v2554 = vor.u32 %v2552, %v2553
  %v2555 = vshll.u32 2475754826, %v2549
  %v2556 = vshrl.u32 2131351028, %v2550
  %v2557 = vor.u32 %v2555, %v2556
  %v2558 = vshll.u32 2131351028, %v2549
  %v2559 = vshrl.u32 2102212464, %v2550
  %v2560 = vor.u32 %v2558, %v2559
  %v2561 = vshll.u32 2102212464, %v2549
  %v2562 = vshrl.u32 920167782, %v2550
  %v2563 = vor.u32 %v2561, %v2562
  %v2564 = vshll.u32 920167782, %v2549
  %v2565 = vshrl.u32 1326507024, %v2550
  %v2566 = vor.u32 %v2564, %v2565
  %vm2567 = vcmp.lt.s32.totalorder %v2548, 1
  %vm2568 = vcmp.lt.s32.totalorder %v2548, 2
  %vm2569 = vcmp.lt.s32.totalorder %v2548, 3
  %vm2570 = vcmp.lt.s32.totalorder %v2548, 4
  %v2571 = vsel %vm2567, %v2551, %v2554
  %v2572 = vsel %vm2570, %v2560, 2102212464
  %v2573 = vsel %vm2569, %v2557, %v2572
  %v2574 = vsel %vm2568, %v2571, %v2573
  %v2575 = vsel %vm2567, %v2554, %v2557
  %v2576 = vsel %vm2570, %v2563, 920167782
  %v2577 = vsel %vm2569, %v2560, %v2576
  %v2578 = vsel %vm2568, %v2575, %v2577
  %v2579 = vsel %vm2567, %v2557, %v2560
  %v2580 = vsel %vm2570, %v2566, 1326507024
  %v2581 = vsel %vm2569, %v2563, %v2580
  %v2582 = vsel %vm2568, %v2579, %v2581
  %v2583 = vshll.u32 %v2543, 8
  %v2584 = vmul.u32.u64.compose %v2583, %v2582
  %v2585 = vextract.low.u32 %v2584
  %v2586 = vextract.high.u32 %v2584
  %v2587 = vmul.u32.u64.compose %v2583, %v2578
  %v2588 = vextract.low.u32 %v2587
  %v2589 = vextract.high.u32 %v2587
  %v2590 = vmul.u32 %v2583, %v2574
  %v2591 = vadd.s32 %v2586, %v2588
  %vm2592 = vc.u32 %v2586, %v2588
  %v2593 = vadd.s32 %v2589, 1
  %v2594 = vsel %vm2592, %v2593, %v2589
  %v2595 = vadd.s32 %v2590, %v2594
  %v2596 = vadd.s32 %v2595, 536870912
  %v2597 = vshrl.u32 %v2596, 30
  %v2598 = vshll.u32 %v2597, 30
  %v2599 = vsub.s32 %v2595, %v2598
  %vm2600 = vcmp.lt.s32.totalorder %v2599, 0
  %v2601 = vsub.s32 0, %v2599
  %v2602 = vsel %vm2600, %v2601, %v2599
  %v2603 = vclz %v2602
  %v2604 = vsub.s32 %v2603, 2
  %vm2605 = vcmp.gt.s32.totalorder 0, %v2604
  %v2606 = vsel %vm2605, 0, %v2604
  %v2607 = vsub.s32 32, %v2606
  %v2608 = vshll.u32 %v2599, %v2606
  %v2609 = vshrl.u32 %v2591, %v2607
  %v2610 = vor.u32 %v2608, %v2609
  %v2611 = vsub.s32 4294967266, %v2606
  %v2612 = vadd.s32 %v2611, 127
  %v2613 = vshll.u32 %v2612, 23
  %v2614 = vor.u32 4788187, %v2613
  %v2615 = vand.u32 2147483647, %v2614
  %v2617 = vcvt.s32.f32 %v2610
  %v2618 = vmul.f32 %v2617, %v2615
  %v2619 = vxor.u32 %v2618, 2147483648
  %v2620 = vsel %vm2537, %v2619, %v2618
  %v2621 = vsub.s32 4, %v2597
  %v2622 = vsel %vm2537, %v2621, %v2597
  %v2623 = vsel %vm2536, %v752, %v2620
  %v2624 = vsel %vm2536, 0, %v2622
  %v2625 = vcosq.f32.pop %v2623
  %v2626 = vsinq.f32.pop %v2623
  %vm2627 = vweird.f32 %v752
  %v2628 = vadd.s32 %v2624, 3
  %v2629 = vand.u32 %v2628, 3
  %vm2630 = vcmp.lt.s32.totalorder %v2629, 2
  %vm2631 = vcmp.eq.s32.totalorder %v2629, 0
  %v2632 = vxor.u32 %v2626, 2147483648
  %v2633 = vsel %vm2631, %v2625, %v2632
  %vm2634 = vcmp.eq.s32.totalorder %v2629, 2
  %v2635 = vxor.u32 %v2625, 2147483648
  %v2636 = vsel %vm2634, %v2635, %v2626
  %v2637 = vsel %vm2630, %v2633, %v2636
  %v2638 = vsel %vm2627, nan, %v2637
  %v2639 = vand.u32 2147483647, %v753
  %vm2640 = vcmp.le.f32.partialorder %v2639, 0.7853982
  %vm2641 = vcmp.lt.s32.totalorder %v753, 0
  %v2642 = vand.u32 %v753, 2139095040
  %v2643 = vshrl.u32 %v2642, 23
  %v2644 = vsub.s32 %v2643, 127
  %v2645 = vand.u32 2147483647, %v753
  %v2646 = vand.u32 %v2645, 8388607
  %v2647 = vor.u32 %v2646, 8388608
  %v2648 = vsub.s32 0, %v2647
  %v2649 = vadd.s32 %v2644, 1
  %vm2650 = vcmp.gt.s32.totalorder %v2649, 0
  %v2651 = vsel %vm2650, %v2649, 0
  %v2652 = vshrl.u32 %v2651, 5
  %v2653 = vand.u32 %v2651, 31
  %v2654 = vsub.s32 32, %v2653
  %v2655 = vshrl.u32 683565275, %v2654
  %v2656 = vshll.u32 683565275, %v2653
  %v2657 = vshrl.u32 2475754826, %v2654
  %v2658 = vor.u32 %v2656, %v2657
  %v2659 = vshll.u32 2475754826, %v2653
  %v2660 = vshrl.u32 2131351028, %v2654
  %v2661 = vor.u32 %v2659, %v2660
  %v2662 = vshll.u32 2131351028, %v2653
  %v2663 = vshrl.u32 2102212464, %v2654
  %v2664 = vor.u32 %v2662, %v2663
  %v2665 = vshll.u32 2102212464, %v2653
  %v2666 = vshrl.u32 920167782, %v2654
  %v2667 = vor.u32 %v2665, %v2666
  %v2668 = vshll.u32 920167782, %v2653
  %v2669 = vshrl.u32 1326507024, %v2654
  %v2670 = vor.u32 %v2668, %v2669
  %vm2671 = vcmp.lt.s32.totalorder %v2652, 1
  %vm2672 = vcmp.lt.s32.totalorder %v2652, 2
  %vm2673 = vcmp.lt.s32.totalorder %v2652, 3
  %vm2674 = vcmp.lt.s32.totalorder %v2652, 4
  %v2675 = vsel %vm2671, %v2655, %v2658
  %v2676 = vsel %vm2674, %v2664, 2102212464
  %v2677 = vsel %vm2673, %v2661, %v2676
  %v2678 = vsel %vm2672, %v2675, %v2677
  %v2679 = vsel %vm2671, %v2658, %v2661
  %v2680 = vsel %vm2674, %v2667, 920167782
  %v2681 = vsel %vm2673, %v2664, %v2680
  %v2682 = vsel %vm2672, %v2679, %v2681
  %v2683 = vsel %vm2671, %v2661, %v2664
  %v2684 = vsel %vm2674, %v2670, 1326507024
  %v2685 = vsel %vm2673, %v2667, %v2684
  %v2686 = vsel %vm2672, %v2683, %v2685
  %v2687 = vshll.u32 %v2647, 8
  %v2688 = vmul.u32.u64.compose %v2687, %v2686
  %v2689 = vextract.low.u32 %v2688
  %v2690 = vextract.high.u32 %v2688
  %v2691 = vmul.u32.u64.compose %v2687, %v2682
  %v2692 = vextract.low.u32 %v2691
  %v2693 = vextract.high.u32 %v2691
  %v2694 = vmul.u32 %v2687, %v2678
  %v2695 = vadd.s32 %v2690, %v2692
  %vm2696 = vc.u32 %v2690, %v2692
  %v2697 = vadd.s32 %v2693, 1
  %v2698 = vsel %vm2696, %v2697, %v2693
  %v2699 = vadd.s32 %v2694, %v2698
  %v2700 = vadd.s32 %v2699, 536870912
  %v2701 = vshrl.u32 %v2700, 30
  %v2702 = vshll.u32 %v2701, 30
  %v2703 = vsub.s32 %v2699, %v2702
  %vm2704 = vcmp.lt.s32.totalorder %v2703, 0
  %v2705 = vsub.s32 0, %v2703
  %v2706 = vsel %vm2704, %v2705, %v2703
  %v2707 = vclz %v2706
  %v2708 = vsub.s32 %v2707, 2
  %vm2709 = vcmp.gt.s32.totalorder 0, %v2708
  %v2710 = vsel %vm2709, 0, %v2708
  %v2711 = vsub.s32 32, %v2710
  %v2712 = vshll.u32 %v2703, %v2710
  %v2713 = vshrl.u32 %v2695, %v2711
  %v2714 = vor.u32 %v2712, %v2713
  %v2715 = vsub.s32 4294967266, %v2710
  %v2716 = vadd.s32 %v2715, 127
  %v2717 = vshll.u32 %v2716, 23
  %v2718 = vor.u32 4788187, %v2717
  %v2719 = vand.u32 2147483647, %v2718
  %v2721 = vcvt.s32.f32 %v2714
  %v2722 = vmul.f32 %v2721, %v2719
  %v2723 = vxor.u32 %v2722, 2147483648
  %v2724 = vsel %vm2641, %v2723, %v2722
  %v2725 = vsub.s32 4, %v2701
  %v2726 = vsel %vm2641, %v2725, %v2701
  %v2727 = vsel %vm2640, %v753, %v2724
  %v2728 = vsel %vm2640, 0, %v2726
  %v2729 = vcosq.f32.pop %v2727
  %v2730 = vsinq.f32.pop %v2727
  %vm2731 = vweird.f32 %v753
  %v2732 = vadd.s32 %v2728, 3
  %v2733 = vand.u32 %v2732, 3
  %vm2734 = vcmp.lt.s32.totalorder %v2733, 2
  %vm2735 = vcmp.eq.s32.totalorder %v2733, 0
  %v2736 = vxor.u32 %v2730, 2147483648
  %v2737 = vsel %vm2735, %v2729, %v2736
  %vm2738 = vcmp.eq.s32.totalorder %v2733, 2
  %v2739 = vxor.u32 %v2729, 2147483648
  %v2740 = vsel %vm2738, %v2739, %v2730
  %v2741 = vsel %vm2734, %v2737, %v2740
  %v2742 = vsel %vm2731, nan, %v2741
  %v2743 = vand.u32 2147483647, %v754
  %vm2744 = vcmp.le.f32.partialorder %v2743, 0.7853982
  %vm2745 = vcmp.lt.s32.totalorder %v754, 0
  %v2746 = vand.u32 %v754, 2139095040
  %v2747 = vshrl.u32 %v2746, 23
  %v2748 = vsub.s32 %v2747, 127
  %v2749 = vand.u32 2147483647, %v754
  %v2750 = vand.u32 %v2749, 8388607
  %v2751 = vor.u32 %v2750, 8388608
  %v2752 = vsub.s32 0, %v2751
  %v2753 = vadd.s32 %v2748, 1
  %vm2754 = vcmp.gt.s32.totalorder %v2753, 0
  %v2755 = vsel %vm2754, %v2753, 0
  %v2756 = vshrl.u32 %v2755, 5
  %v2757 = vand.u32 %v2755, 31
  %v2758 = vsub.s32 32, %v2757
  %v2759 = vshrl.u32 683565275, %v2758
  %v2760 = vshll.u32 683565275, %v2757
  %v2761 = vshrl.u32 2475754826, %v2758
  %v2762 = vor.u32 %v2760, %v2761
  %v2763 = vshll.u32 2475754826, %v2757
  %v2764 = vshrl.u32 2131351028, %v2758
  %v2765 = vor.u32 %v2763, %v2764
  %v2766 = vshll.u32 2131351028, %v2757
  %v2767 = vshrl.u32 2102212464, %v2758
  %v2768 = vor.u32 %v2766, %v2767
  %v2769 = vshll.u32 2102212464, %v2757
  %v2770 = vshrl.u32 920167782, %v2758
  %v2771 = vor.u32 %v2769, %v2770
  %v2772 = vshll.u32 920167782, %v2757
  %v2773 = vshrl.u32 1326507024, %v2758
  %v2774 = vor.u32 %v2772, %v2773
  %vm2775 = vcmp.lt.s32.totalorder %v2756, 1
  %vm2776 = vcmp.lt.s32.totalorder %v2756, 2
  %vm2777 = vcmp.lt.s32.totalorder %v2756, 3
  %vm2778 = vcmp.lt.s32.totalorder %v2756, 4
  %v2779 = vsel %vm2775, %v2759, %v2762
  %v2780 = vsel %vm2778, %v2768, 2102212464
  %v2781 = vsel %vm2777, %v2765, %v2780
  %v2782 = vsel %vm2776, %v2779, %v2781
  %v2783 = vsel %vm2775, %v2762, %v2765
  %v2784 = vsel %vm2778, %v2771, 920167782
  %v2785 = vsel %vm2777, %v2768, %v2784
  %v2786 = vsel %vm2776, %v2783, %v2785
  %v2787 = vsel %vm2775, %v2765, %v2768
  %v2788 = vsel %vm2778, %v2774, 1326507024
  %v2789 = vsel %vm2777, %v2771, %v2788
  %v2790 = vsel %vm2776, %v2787, %v2789
  %v2791 = vshll.u32 %v2751, 8
  %v2792 = vmul.u32.u64.compose %v2791, %v2790
  %v2793 = vextract.low.u32 %v2792
  %v2794 = vextract.high.u32 %v2792
  %v2795 = vmul.u32.u64.compose %v2791, %v2786
  %v2796 = vextract.low.u32 %v2795
  %v2797 = vextract.high.u32 %v2795
  %v2798 = vmul.u32 %v2791, %v2782
  %v2799 = vadd.s32 %v2794, %v2796
  %vm2800 = vc.u32 %v2794, %v2796
  %v2801 = vadd.s32 %v2797, 1
  %v2802 = vsel %vm2800, %v2801, %v2797
  %v2803 = vadd.s32 %v2798, %v2802
  %v2804 = vadd.s32 %v2803, 536870912
  %v2805 = vshrl.u32 %v2804, 30
  %v2806 = vshll.u32 %v2805, 30
  %v2807 = vsub.s32 %v2803, %v2806
  %vm2808 = vcmp.lt.s32.totalorder %v2807, 0
  %v2809 = vsub.s32 0, %v2807
  %v2810 = vsel %vm2808, %v2809, %v2807
  %v2811 = vclz %v2810
  %v2812 = vsub.s32 %v2811, 2
  %vm2813 = vcmp.gt.s32.totalorder 0, %v2812
  %v2814 = vsel %vm2813, 0, %v2812
  %v2815 = vsub.s32 32, %v2814
  %v2816 = vshll.u32 %v2807, %v2814
  %v2817 = vshrl.u32 %v2799, %v2815
  %v2818 = vor.u32 %v2816, %v2817
  %v2819 = vsub.s32 4294967266, %v2814
  %v2820 = vadd.s32 %v2819, 127
  %v2821 = vshll.u32 %v2820, 23
  %v2822 = vor.u32 4788187, %v2821
  %v2823 = vand.u32 2147483647, %v2822
  %v2825 = vcvt.s32.f32 %v2818
  %v2826 = vmul.f32 %v2825, %v2823
  %v2827 = vxor.u32 %v2826, 2147483648
  %v2828 = vsel %vm2745, %v2827, %v2826
  %v2829 = vsub.s32 4, %v2805
  %v2830 = vsel %vm2745, %v2829, %v2805
  %v2831 = vsel %vm2744, %v754, %v2828
  %v2832 = vsel %vm2744, 0, %v2830
  %v2833 = vcosq.f32.pop %v2831
  %v2834 = vsinq.f32.pop %v2831
  %vm2835 = vweird.f32 %v754
  %v2836 = vadd.s32 %v2832, 3
  %v2837 = vand.u32 %v2836, 3
  %vm2838 = vcmp.lt.s32.totalorder %v2837, 2
  %vm2839 = vcmp.eq.s32.totalorder %v2837, 0
  %v2840 = vxor.u32 %v2834, 2147483648
  %v2841 = vsel %vm2839, %v2833, %v2840
  %vm2842 = vcmp.eq.s32.totalorder %v2837, 2
  %v2843 = vxor.u32 %v2833, 2147483648
  %v2844 = vsel %vm2842, %v2843, %v2834
  %v2845 = vsel %vm2838, %v2841, %v2844
  %v2846 = vsel %vm2835, nan, %v2845
  %v2847 = vand.u32 2147483647, %v755
  %vm2848 = vcmp.le.f32.partialorder %v2847, 0.7853982
  %vm2849 = vcmp.lt.s32.totalorder %v755, 0
  %v2850 = vand.u32 %v755, 2139095040
  %v2851 = vshrl.u32 %v2850, 23
  %v2852 = vsub.s32 %v2851, 127
  %v2853 = vand.u32 2147483647, %v755
  %v2854 = vand.u32 %v2853, 8388607
  %v2855 = vor.u32 %v2854, 8388608
  %v2856 = vsub.s32 0, %v2855
  %v2857 = vadd.s32 %v2852, 1
  %vm2858 = vcmp.gt.s32.totalorder %v2857, 0
  %v2859 = vsel %vm2858, %v2857, 0
  %v2860 = vshrl.u32 %v2859, 5
  %v2861 = vand.u32 %v2859, 31
  %v2862 = vsub.s32 32, %v2861
  %v2863 = vshrl.u32 683565275, %v2862
  %v2864 = vshll.u32 683565275, %v2861
  %v2865 = vshrl.u32 2475754826, %v2862
  %v2866 = vor.u32 %v2864, %v2865
  %v2867 = vshll.u32 2475754826, %v2861
  %v2868 = vshrl.u32 2131351028, %v2862
  %v2869 = vor.u32 %v2867, %v2868
  %v2870 = vshll.u32 2131351028, %v2861
  %v2871 = vshrl.u32 2102212464, %v2862
  %v2872 = vor.u32 %v2870, %v2871
  %v2873 = vshll.u32 2102212464, %v2861
  %v2874 = vshrl.u32 920167782, %v2862
  %v2875 = vor.u32 %v2873, %v2874
  %v2876 = vshll.u32 920167782, %v2861
  %v2877 = vshrl.u32 1326507024, %v2862
  %v2878 = vor.u32 %v2876, %v2877
  %vm2879 = vcmp.lt.s32.totalorder %v2860, 1
  %vm2880 = vcmp.lt.s32.totalorder %v2860, 2
  %vm2881 = vcmp.lt.s32.totalorder %v2860, 3
  %vm2882 = vcmp.lt.s32.totalorder %v2860, 4
  %v2883 = vsel %vm2879, %v2863, %v2866
  %v2884 = vsel %vm2882, %v2872, 2102212464
  %v2885 = vsel %vm2881, %v2869, %v2884
  %v2886 = vsel %vm2880, %v2883, %v2885
  %v2887 = vsel %vm2879, %v2866, %v2869
  %v2888 = vsel %vm2882, %v2875, 920167782
  %v2889 = vsel %vm2881, %v2872, %v2888
  %v2890 = vsel %vm2880, %v2887, %v2889
  %v2891 = vsel %vm2879, %v2869, %v2872
  %v2892 = vsel %vm2882, %v2878, 1326507024
  %v2893 = vsel %vm2881, %v2875, %v2892
  %v2894 = vsel %vm2880, %v2891, %v2893
  %v2895 = vshll.u32 %v2855, 8
  %v2896 = vmul.u32.u64.compose %v2895, %v2894
  %v2897 = vextract.low.u32 %v2896
  %v2898 = vextract.high.u32 %v2896
  %v2899 = vmul.u32.u64.compose %v2895, %v2890
  %v2900 = vextract.low.u32 %v2899
  %v2901 = vextract.high.u32 %v2899
  %v2902 = vmul.u32 %v2895, %v2886
  %v2903 = vadd.s32 %v2898, %v2900
  %vm2904 = vc.u32 %v2898, %v2900
  %v2905 = vadd.s32 %v2901, 1
  %v2906 = vsel %vm2904, %v2905, %v2901
  %v2907 = vadd.s32 %v2902, %v2906
  %v2908 = vadd.s32 %v2907, 536870912
  %v2909 = vshrl.u32 %v2908, 30
  %v2910 = vshll.u32 %v2909, 30
  %v2911 = vsub.s32 %v2907, %v2910
  %vm2912 = vcmp.lt.s32.totalorder %v2911, 0
  %v2913 = vsub.s32 0, %v2911
  %v2914 = vsel %vm2912, %v2913, %v2911
  %v2915 = vclz %v2914
  %v2916 = vsub.s32 %v2915, 2
  %vm2917 = vcmp.gt.s32.totalorder 0, %v2916
  %v2918 = vsel %vm2917, 0, %v2916
  %v2919 = vsub.s32 32, %v2918
  %v2920 = vshll.u32 %v2911, %v2918
  %v2921 = vshrl.u32 %v2903, %v2919
  %v2922 = vor.u32 %v2920, %v2921
  %v2923 = vsub.s32 4294967266, %v2918
  %v2924 = vadd.s32 %v2923, 127
  %v2925 = vshll.u32 %v2924, 23
  %v2926 = vor.u32 4788187, %v2925
  %v2927 = vand.u32 2147483647, %v2926
  %v2929 = vcvt.s32.f32 %v2922
  %v2930 = vmul.f32 %v2929, %v2927
  %v2931 = vxor.u32 %v2930, 2147483648
  %v2932 = vsel %vm2849, %v2931, %v2930
  %v2933 = vsub.s32 4, %v2909
  %v2934 = vsel %vm2849, %v2933, %v2909
  %v2935 = vsel %vm2848, %v755, %v2932
  %v2936 = vsel %vm2848, 0, %v2934
  %v2937 = vcosq.f32.pop %v2935
  %v2938 = vsinq.f32.pop %v2935
  %vm2939 = vweird.f32 %v755
  %v2940 = vadd.s32 %v2936, 3
  %v2941 = vand.u32 %v2940, 3
  %vm2942 = vcmp.lt.s32.totalorder %v2941, 2
  %vm2943 = vcmp.eq.s32.totalorder %v2941, 0
  %v2944 = vxor.u32 %v2938, 2147483648
  %v2945 = vsel %vm2943, %v2937, %v2944
  %vm2946 = vcmp.eq.s32.totalorder %v2941, 2
  %v2947 = vxor.u32 %v2937, 2147483648
  %v2948 = vsel %vm2946, %v2947, %v2938
  %v2949 = vsel %vm2942, %v2945, %v2948
  %v2950 = vsel %vm2939, nan, %v2949
  %v2951 = vand.u32 2147483647, %v756
  %vm2952 = vcmp.le.f32.partialorder %v2951, 0.7853982
  %vm2953 = vcmp.lt.s32.totalorder %v756, 0
  %v2954 = vand.u32 %v756, 2139095040
  %v2955 = vshrl.u32 %v2954, 23
  %v2956 = vsub.s32 %v2955, 127
  %v2957 = vand.u32 2147483647, %v756
  %v2958 = vand.u32 %v2957, 8388607
  %v2959 = vor.u32 %v2958, 8388608
  %v2960 = vsub.s32 0, %v2959
  %v2961 = vadd.s32 %v2956, 1
  %vm2962 = vcmp.gt.s32.totalorder %v2961, 0
  %v2963 = vsel %vm2962, %v2961, 0
  %v2964 = vshrl.u32 %v2963, 5
  %v2965 = vand.u32 %v2963, 31
  %v2966 = vsub.s32 32, %v2965
  %v2967 = vshrl.u32 683565275, %v2966
  %v2968 = vshll.u32 683565275, %v2965
  %v2969 = vshrl.u32 2475754826, %v2966
  %v2970 = vor.u32 %v2968, %v2969
  %v2971 = vshll.u32 2475754826, %v2965
  %v2972 = vshrl.u32 2131351028, %v2966
  %v2973 = vor.u32 %v2971, %v2972
  %v2974 = vshll.u32 2131351028, %v2965
  %v2975 = vshrl.u32 2102212464, %v2966
  %v2976 = vor.u32 %v2974, %v2975
  %v2977 = vshll.u32 2102212464, %v2965
  %v2978 = vshrl.u32 920167782, %v2966
  %v2979 = vor.u32 %v2977, %v2978
  %v2980 = vshll.u32 920167782, %v2965
  %v2981 = vshrl.u32 1326507024, %v2966
  %v2982 = vor.u32 %v2980, %v2981
  %vm2983 = vcmp.lt.s32.totalorder %v2964, 1
  %vm2984 = vcmp.lt.s32.totalorder %v2964, 2
  %vm2985 = vcmp.lt.s32.totalorder %v2964, 3
  %vm2986 = vcmp.lt.s32.totalorder %v2964, 4
  %v2987 = vsel %vm2983, %v2967, %v2970
  %v2988 = vsel %vm2986, %v2976, 2102212464
  %v2989 = vsel %vm2985, %v2973, %v2988
  %v2990 = vsel %vm2984, %v2987, %v2989
  %v2991 = vsel %vm2983, %v2970, %v2973
  %v2992 = vsel %vm2986, %v2979, 920167782
  %v2993 = vsel %vm2985, %v2976, %v2992
  %v2994 = vsel %vm2984, %v2991, %v2993
  %v2995 = vsel %vm2983, %v2973, %v2976
  %v2996 = vsel %vm2986, %v2982, 1326507024
  %v2997 = vsel %vm2985, %v2979, %v2996
  %v2998 = vsel %vm2984, %v2995, %v2997
  %v2999 = vshll.u32 %v2959, 8
  %v3000 = vmul.u32.u64.compose %v2999, %v2998
  %v3001 = vextract.low.u32 %v3000
  %v3002 = vextract.high.u32 %v3000
  %v3003 = vmul.u32.u64.compose %v2999, %v2994
  %v3004 = vextract.low.u32 %v3003
  %v3005 = vextract.high.u32 %v3003
  %v3006 = vmul.u32 %v2999, %v2990
  %v3007 = vadd.s32 %v3002, %v3004
  %vm3008 = vc.u32 %v3002, %v3004
  %v3009 = vadd.s32 %v3005, 1
  %v3010 = vsel %vm3008, %v3009, %v3005
  %v3011 = vadd.s32 %v3006, %v3010
  %v3012 = vadd.s32 %v3011, 536870912
  %v3013 = vshrl.u32 %v3012, 30
  %v3014 = vshll.u32 %v3013, 30
  %v3015 = vsub.s32 %v3011, %v3014
  %vm3016 = vcmp.lt.s32.totalorder %v3015, 0
  %v3017 = vsub.s32 0, %v3015
  %v3018 = vsel %vm3016, %v3017, %v3015
  %v3019 = vclz %v3018
  %v3020 = vsub.s32 %v3019, 2
  %vm3021 = vcmp.gt.s32.totalorder 0, %v3020
  %v3022 = vsel %vm3021, 0, %v3020
  %v3023 = vsub.s32 32, %v3022
  %v3024 = vshll.u32 %v3015, %v3022
  %v3025 = vshrl.u32 %v3007, %v3023
  %v3026 = vor.u32 %v3024, %v3025
  %v3027 = vsub.s32 4294967266, %v3022
  %v3028 = vadd.s32 %v3027, 127
  %v3029 = vshll.u32 %v3028, 23
  %v3030 = vor.u32 4788187, %v3029
  %v3031 = vand.u32 2147483647, %v3030
  %v3033 = vcvt.s32.f32 %v3026
  %v3034 = vmul.f32 %v3033, %v3031
  %v3035 = vxor.u32 %v3034, 2147483648
  %v3036 = vsel %vm2953, %v3035, %v3034
  %v3037 = vsub.s32 4, %v3013
  %v3038 = vsel %vm2953, %v3037, %v3013
  %v3039 = vsel %vm2952, %v756, %v3036
  %v3040 = vsel %vm2952, 0, %v3038
  %v3041 = vcosq.f32.pop %v3039
  %v3042 = vsinq.f32.pop %v3039
  %vm3043 = vweird.f32 %v756
  %v3044 = vadd.s32 %v3040, 3
  %v3045 = vand.u32 %v3044, 3
  %vm3046 = vcmp.lt.s32.totalorder %v3045, 2
  %vm3047 = vcmp.eq.s32.totalorder %v3045, 0
  %v3048 = vxor.u32 %v3042, 2147483648
  %v3049 = vsel %vm3047, %v3041, %v3048
  %vm3050 = vcmp.eq.s32.totalorder %v3045, 2
  %v3051 = vxor.u32 %v3041, 2147483648
  %v3052 = vsel %vm3050, %v3051, %v3042
  %v3053 = vsel %vm3046, %v3049, %v3052
  %v3054 = vsel %vm3043, nan, %v3053
  %v3055 = vand.u32 2147483647, %v757
  %vm3056 = vcmp.le.f32.partialorder %v3055, 0.7853982
  %vm3057 = vcmp.lt.s32.totalorder %v757, 0
  %v3058 = vand.u32 %v757, 2139095040
  %v3059 = vshrl.u32 %v3058, 23
  %v3060 = vsub.s32 %v3059, 127
  %v3061 = vand.u32 2147483647, %v757
  %v3062 = vand.u32 %v3061, 8388607
  %v3063 = vor.u32 %v3062, 8388608
  %v3064 = vsub.s32 0, %v3063
  %v3065 = vadd.s32 %v3060, 1
  %vm3066 = vcmp.gt.s32.totalorder %v3065, 0
  %v3067 = vsel %vm3066, %v3065, 0
  %v3068 = vshrl.u32 %v3067, 5
  %v3069 = vand.u32 %v3067, 31
  %v3070 = vsub.s32 32, %v3069
  %v3071 = vshrl.u32 683565275, %v3070
  %v3072 = vshll.u32 683565275, %v3069
  %v3073 = vshrl.u32 2475754826, %v3070
  %v3074 = vor.u32 %v3072, %v3073
  %v3075 = vshll.u32 2475754826, %v3069
  %v3076 = vshrl.u32 2131351028, %v3070
  %v3077 = vor.u32 %v3075, %v3076
  %v3078 = vshll.u32 2131351028, %v3069
  %v3079 = vshrl.u32 2102212464, %v3070
  %v3080 = vor.u32 %v3078, %v3079
  %v3081 = vshll.u32 2102212464, %v3069
  %v3082 = vshrl.u32 920167782, %v3070
  %v3083 = vor.u32 %v3081, %v3082
  %v3084 = vshll.u32 920167782, %v3069
  %v3085 = vshrl.u32 1326507024, %v3070
  %v3086 = vor.u32 %v3084, %v3085
  %vm3087 = vcmp.lt.s32.totalorder %v3068, 1
  %vm3088 = vcmp.lt.s32.totalorder %v3068, 2
  %vm3089 = vcmp.lt.s32.totalorder %v3068, 3
  %vm3090 = vcmp.lt.s32.totalorder %v3068, 4
  %v3091 = vsel %vm3087, %v3071, %v3074
  %v3092 = vsel %vm3090, %v3080, 2102212464
  %v3093 = vsel %vm3089, %v3077, %v3092
  %v3094 = vsel %vm3088, %v3091, %v3093
  %v3095 = vsel %vm3087, %v3074, %v3077
  %v3096 = vsel %vm3090, %v3083, 920167782
  %v3097 = vsel %vm3089, %v3080, %v3096
  %v3098 = vsel %vm3088, %v3095, %v3097
  %v3099 = vsel %vm3087, %v3077, %v3080
  %v3100 = vsel %vm3090, %v3086, 1326507024
  %v3101 = vsel %vm3089, %v3083, %v3100
  %v3102 = vsel %vm3088, %v3099, %v3101
  %v3103 = vshll.u32 %v3063, 8
  %v3104 = vmul.u32.u64.compose %v3103, %v3102
  %v3105 = vextract.low.u32 %v3104
  %v3106 = vextract.high.u32 %v3104
  %v3107 = vmul.u32.u64.compose %v3103, %v3098
  %v3108 = vextract.low.u32 %v3107
  %v3109 = vextract.high.u32 %v3107
  %v3110 = vmul.u32 %v3103, %v3094
  %v3111 = vadd.s32 %v3106, %v3108
  %vm3112 = vc.u32 %v3106, %v3108
  %v3113 = vadd.s32 %v3109, 1
  %v3114 = vsel %vm3112, %v3113, %v3109
  %v3115 = vadd.s32 %v3110, %v3114
  %v3116 = vadd.s32 %v3115, 536870912
  %v3117 = vshrl.u32 %v3116, 30
  %v3118 = vshll.u32 %v3117, 30
  %v3119 = vsub.s32 %v3115, %v3118
  %vm3120 = vcmp.lt.s32.totalorder %v3119, 0
  %v3121 = vsub.s32 0, %v3119
  %v3122 = vsel %vm3120, %v3121, %v3119
  %v3123 = vclz %v3122
  %v3124 = vsub.s32 %v3123, 2
  %vm3125 = vcmp.gt.s32.totalorder 0, %v3124
  %v3126 = vsel %vm3125, 0, %v3124
  %v3127 = vsub.s32 32, %v3126
  %v3128 = vshll.u32 %v3119, %v3126
  %v3129 = vshrl.u32 %v3111, %v3127
  %v3130 = vor.u32 %v3128, %v3129
  %v3131 = vsub.s32 4294967266, %v3126
  %v3132 = vadd.s32 %v3131, 127
  %v3133 = vshll.u32 %v3132, 23
  %v3134 = vor.u32 4788187, %v3133
  %v3135 = vand.u32 2147483647, %v3134
  %v3137 = vcvt.s32.f32 %v3130
  %v3138 = vmul.f32 %v3137, %v3135
  %v3139 = vxor.u32 %v3138, 2147483648
  %v3140 = vsel %vm3057, %v3139, %v3138
  %v3141 = vsub.s32 4, %v3117
  %v3142 = vsel %vm3057, %v3141, %v3117
  %v3143 = vsel %vm3056, %v757, %v3140
  %v3144 = vsel %vm3056, 0, %v3142
  %v3145 = vcosq.f32.pop %v3143
  %v3146 = vsinq.f32.pop %v3143
  %vm3147 = vweird.f32 %v757
  %v3148 = vadd.s32 %v3144, 3
  %v3149 = vand.u32 %v3148, 3
  %vm3150 = vcmp.lt.s32.totalorder %v3149, 2
  %vm3151 = vcmp.eq.s32.totalorder %v3149, 0
  %v3152 = vxor.u32 %v3146, 2147483648
  %v3153 = vsel %vm3151, %v3145, %v3152
  %vm3154 = vcmp.eq.s32.totalorder %v3149, 2
  %v3155 = vxor.u32 %v3145, 2147483648
  %v3156 = vsel %vm3154, %v3155, %v3146
  %v3157 = vsel %vm3150, %v3153, %v3156
  %v3158 = vsel %vm3147, nan, %v3157
  %v3159 = vand.u32 2147483647, %v758
  %vm3160 = vcmp.le.f32.partialorder %v3159, 0.7853982
  %vm3161 = vcmp.lt.s32.totalorder %v758, 0
  %v3162 = vand.u32 %v758, 2139095040
  %v3163 = vshrl.u32 %v3162, 23
  %v3164 = vsub.s32 %v3163, 127
  %v3165 = vand.u32 2147483647, %v758
  %v3166 = vand.u32 %v3165, 8388607
  %v3167 = vor.u32 %v3166, 8388608
  %v3168 = vsub.s32 0, %v3167
  %v3169 = vadd.s32 %v3164, 1
  %vm3170 = vcmp.gt.s32.totalorder %v3169, 0
  %v3171 = vsel %vm3170, %v3169, 0
  %v3172 = vshrl.u32 %v3171, 5
  %v3173 = vand.u32 %v3171, 31
  %v3174 = vsub.s32 32, %v3173
  %v3175 = vshrl.u32 683565275, %v3174
  %v3176 = vshll.u32 683565275, %v3173
  %v3177 = vshrl.u32 2475754826, %v3174
  %v3178 = vor.u32 %v3176, %v3177
  %v3179 = vshll.u32 2475754826, %v3173
  %v3180 = vshrl.u32 2131351028, %v3174
  %v3181 = vor.u32 %v3179, %v3180
  %v3182 = vshll.u32 2131351028, %v3173
  %v3183 = vshrl.u32 2102212464, %v3174
  %v3184 = vor.u32 %v3182, %v3183
  %v3185 = vshll.u32 2102212464, %v3173
  %v3186 = vshrl.u32 920167782, %v3174
  %v3187 = vor.u32 %v3185, %v3186
  %v3188 = vshll.u32 920167782, %v3173
  %v3189 = vshrl.u32 1326507024, %v3174
  %v3190 = vor.u32 %v3188, %v3189
  %vm3191 = vcmp.lt.s32.totalorder %v3172, 1
  %vm3192 = vcmp.lt.s32.totalorder %v3172, 2
  %vm3193 = vcmp.lt.s32.totalorder %v3172, 3
  %vm3194 = vcmp.lt.s32.totalorder %v3172, 4
  %v3195 = vsel %vm3191, %v3175, %v3178
  %v3196 = vsel %vm3194, %v3184, 2102212464
  %v3197 = vsel %vm3193, %v3181, %v3196
  %v3198 = vsel %vm3192, %v3195, %v3197
  %v3199 = vsel %vm3191, %v3178, %v3181
  %v3200 = vsel %vm3194, %v3187, 920167782
  %v3201 = vsel %vm3193, %v3184, %v3200
  %v3202 = vsel %vm3192, %v3199, %v3201
  %v3203 = vsel %vm3191, %v3181, %v3184
  %v3204 = vsel %vm3194, %v3190, 1326507024
  %v3205 = vsel %vm3193, %v3187, %v3204
  %v3206 = vsel %vm3192, %v3203, %v3205
  %v3207 = vshll.u32 %v3167, 8
  %v3208 = vmul.u32.u64.compose %v3207, %v3206
  %v3209 = vextract.low.u32 %v3208
  %v3210 = vextract.high.u32 %v3208
  %v3211 = vmul.u32.u64.compose %v3207, %v3202
  %v3212 = vextract.low.u32 %v3211
  %v3213 = vextract.high.u32 %v3211
  %v3214 = vmul.u32 %v3207, %v3198
  %v3215 = vadd.s32 %v3210, %v3212
  %vm3216 = vc.u32 %v3210, %v3212
  %v3217 = vadd.s32 %v3213, 1
  %v3218 = vsel %vm3216, %v3217, %v3213
  %v3219 = vadd.s32 %v3214, %v3218
  %v3220 = vadd.s32 %v3219, 536870912
  %v3221 = vshrl.u32 %v3220, 30
  %v3222 = vshll.u32 %v3221, 30
  %v3223 = vsub.s32 %v3219, %v3222
  %vm3224 = vcmp.lt.s32.totalorder %v3223, 0
  %v3225 = vsub.s32 0, %v3223
  %v3226 = vsel %vm3224, %v3225, %v3223
  %v3227 = vclz %v3226
  %v3228 = vsub.s32 %v3227, 2
  %vm3229 = vcmp.gt.s32.totalorder 0, %v3228
  %v3230 = vsel %vm3229, 0, %v3228
  %v3231 = vsub.s32 32, %v3230
  %v3232 = vshll.u32 %v3223, %v3230
  %v3233 = vshrl.u32 %v3215, %v3231
  %v3234 = vor.u32 %v3232, %v3233
  %v3235 = vsub.s32 4294967266, %v3230
  %v3236 = vadd.s32 %v3235, 127
  %v3237 = vshll.u32 %v3236, 23
  %v3238 = vor.u32 4788187, %v3237
  %v3239 = vand.u32 2147483647, %v3238
  %v3241 = vcvt.s32.f32 %v3234
  %v3242 = vmul.f32 %v3241, %v3239
  %v3243 = vxor.u32 %v3242, 2147483648
  %v3244 = vsel %vm3161, %v3243, %v3242
  %v3245 = vsub.s32 4, %v3221
  %v3246 = vsel %vm3161, %v3245, %v3221
  %v3247 = vsel %vm3160, %v758, %v3244
  %v3248 = vsel %vm3160, 0, %v3246
  %v3249 = vcosq.f32.pop %v3247
  %v3250 = vsinq.f32.pop %v3247
  %vm3251 = vweird.f32 %v758
  %v3252 = vadd.s32 %v3248, 3
  %v3253 = vand.u32 %v3252, 3
  %vm3254 = vcmp.lt.s32.totalorder %v3253, 2
  %vm3255 = vcmp.eq.s32.totalorder %v3253, 0
  %v3256 = vxor.u32 %v3250, 2147483648
  %v3257 = vsel %vm3255, %v3249, %v3256
  %vm3258 = vcmp.eq.s32.totalorder %v3253, 2
  %v3259 = vxor.u32 %v3249, 2147483648
  %v3260 = vsel %vm3258, %v3259, %v3250
  %v3261 = vsel %vm3254, %v3257, %v3260
  %v3262 = vsel %vm3251, nan, %v3261
  %v3263 = vand.u32 2147483647, %v759
  %vm3264 = vcmp.le.f32.partialorder %v3263, 0.7853982
  %vm3265 = vcmp.lt.s32.totalorder %v759, 0
  %v3266 = vand.u32 %v759, 2139095040
  %v3267 = vshrl.u32 %v3266, 23
  %v3268 = vsub.s32 %v3267, 127
  %v3269 = vand.u32 2147483647, %v759
  %v3270 = vand.u32 %v3269, 8388607
  %v3271 = vor.u32 %v3270, 8388608
  %v3272 = vsub.s32 0, %v3271
  %v3273 = vadd.s32 %v3268, 1
  %vm3274 = vcmp.gt.s32.totalorder %v3273, 0
  %v3275 = vsel %vm3274, %v3273, 0
  %v3276 = vshrl.u32 %v3275, 5
  %v3277 = vand.u32 %v3275, 31
  %v3278 = vsub.s32 32, %v3277
  %v3279 = vshrl.u32 683565275, %v3278
  %v3280 = vshll.u32 683565275, %v3277
  %v3281 = vshrl.u32 2475754826, %v3278
  %v3282 = vor.u32 %v3280, %v3281
  %v3283 = vshll.u32 2475754826, %v3277
  %v3284 = vshrl.u32 2131351028, %v3278
  %v3285 = vor.u32 %v3283, %v3284
  %v3286 = vshll.u32 2131351028, %v3277
  %v3287 = vshrl.u32 2102212464, %v3278
  %v3288 = vor.u32 %v3286, %v3287
  %v3289 = vshll.u32 2102212464, %v3277
  %v3290 = vshrl.u32 920167782, %v3278
  %v3291 = vor.u32 %v3289, %v3290
  %v3292 = vshll.u32 920167782, %v3277
  %v3293 = vshrl.u32 1326507024, %v3278
  %v3294 = vor.u32 %v3292, %v3293
  %vm3295 = vcmp.lt.s32.totalorder %v3276, 1
  %vm3296 = vcmp.lt.s32.totalorder %v3276, 2
  %vm3297 = vcmp.lt.s32.totalorder %v3276, 3
  %vm3298 = vcmp.lt.s32.totalorder %v3276, 4
  %v3299 = vsel %vm3295, %v3279, %v3282
  %v3300 = vsel %vm3298, %v3288, 2102212464
  %v3301 = vsel %vm3297, %v3285, %v3300
  %v3302 = vsel %vm3296, %v3299, %v3301
  %v3303 = vsel %vm3295, %v3282, %v3285
  %v3304 = vsel %vm3298, %v3291, 920167782
  %v3305 = vsel %vm3297, %v3288, %v3304
  %v3306 = vsel %vm3296, %v3303, %v3305
  %v3307 = vsel %vm3295, %v3285, %v3288
  %v3308 = vsel %vm3298, %v3294, 1326507024
  %v3309 = vsel %vm3297, %v3291, %v3308
  %v3310 = vsel %vm3296, %v3307, %v3309
  %v3311 = vshll.u32 %v3271, 8
  %v3312 = vmul.u32.u64.compose %v3311, %v3310
  %v3313 = vextract.low.u32 %v3312
  %v3314 = vextract.high.u32 %v3312
  %v3315 = vmul.u32.u64.compose %v3311, %v3306
  %v3316 = vextract.low.u32 %v3315
  %v3317 = vextract.high.u32 %v3315
  %v3318 = vmul.u32 %v3311, %v3302
  %v3319 = vadd.s32 %v3314, %v3316
  %vm3320 = vc.u32 %v3314, %v3316
  %v3321 = vadd.s32 %v3317, 1
  %v3322 = vsel %vm3320, %v3321, %v3317
  %v3323 = vadd.s32 %v3318, %v3322
  %v3324 = vadd.s32 %v3323, 536870912
  %v3325 = vshrl.u32 %v3324, 30
  %v3326 = vshll.u32 %v3325, 30
  %v3327 = vsub.s32 %v3323, %v3326
  %vm3328 = vcmp.lt.s32.totalorder %v3327, 0
  %v3329 = vsub.s32 0, %v3327
  %v3330 = vsel %vm3328, %v3329, %v3327
  %v3331 = vclz %v3330
  %v3332 = vsub.s32 %v3331, 2
  %vm3333 = vcmp.gt.s32.totalorder 0, %v3332
  %v3334 = vsel %vm3333, 0, %v3332
  %v3335 = vsub.s32 32, %v3334
  %v3336 = vshll.u32 %v3327, %v3334
  %v3337 = vshrl.u32 %v3319, %v3335
  %v3338 = vor.u32 %v3336, %v3337
  %v3339 = vsub.s32 4294967266, %v3334
  %v3340 = vadd.s32 %v3339, 127
  %v3341 = vshll.u32 %v3340, 23
  %v3342 = vor.u32 4788187, %v3341
  %v3343 = vand.u32 2147483647, %v3342
  %v3345 = vcvt.s32.f32 %v3338
  %v3346 = vmul.f32 %v3345, %v3343
  %v3347 = vxor.u32 %v3346, 2147483648
  %v3348 = vsel %vm3265, %v3347, %v3346
  %v3349 = vsub.s32 4, %v3325
  %v3350 = vsel %vm3265, %v3349, %v3325
  %v3351 = vsel %vm3264, %v759, %v3348
  %v3352 = vsel %vm3264, 0, %v3350
  %v3353 = vcosq.f32.pop %v3351
  %v3354 = vsinq.f32.pop %v3351
  %vm3355 = vweird.f32 %v759
  %v3356 = vadd.s32 %v3352, 3
  %v3357 = vand.u32 %v3356, 3
  %vm3358 = vcmp.lt.s32.totalorder %v3357, 2
  %vm3359 = vcmp.eq.s32.totalorder %v3357, 0
  %v3360 = vxor.u32 %v3354, 2147483648
  %v3361 = vsel %vm3359, %v3353, %v3360
  %vm3362 = vcmp.eq.s32.totalorder %v3357, 2
  %v3363 = vxor.u32 %v3353, 2147483648
  %v3364 = vsel %vm3362, %v3363, %v3354
  %v3365 = vsel %vm3358, %v3361, %v3364
  %v3366 = vsel %vm3355, nan, %v3365
  %v3367 = vand.u32 2147483647, %v760
  %vm3368 = vcmp.le.f32.partialorder %v3367, 0.7853982
  %vm3369 = vcmp.lt.s32.totalorder %v760, 0
  %v3370 = vand.u32 %v760, 2139095040
  %v3371 = vshrl.u32 %v3370, 23
  %v3372 = vsub.s32 %v3371, 127
  %v3373 = vand.u32 2147483647, %v760
  %v3374 = vand.u32 %v3373, 8388607
  %v3375 = vor.u32 %v3374, 8388608
  %v3376 = vsub.s32 0, %v3375
  %v3377 = vadd.s32 %v3372, 1
  %vm3378 = vcmp.gt.s32.totalorder %v3377, 0
  %v3379 = vsel %vm3378, %v3377, 0
  %v3380 = vshrl.u32 %v3379, 5
  %v3381 = vand.u32 %v3379, 31
  %v3382 = vsub.s32 32, %v3381
  %v3383 = vshrl.u32 683565275, %v3382
  %v3384 = vshll.u32 683565275, %v3381
  %v3385 = vshrl.u32 2475754826, %v3382
  %v3386 = vor.u32 %v3384, %v3385
  %v3387 = vshll.u32 2475754826, %v3381
  %v3388 = vshrl.u32 2131351028, %v3382
  %v3389 = vor.u32 %v3387, %v3388
  %v3390 = vshll.u32 2131351028, %v3381
  %v3391 = vshrl.u32 2102212464, %v3382
  %v3392 = vor.u32 %v3390, %v3391
  %v3393 = vshll.u32 2102212464, %v3381
  %v3394 = vshrl.u32 920167782, %v3382
  %v3395 = vor.u32 %v3393, %v3394
  %v3396 = vshll.u32 920167782, %v3381
  %v3397 = vshrl.u32 1326507024, %v3382
  %v3398 = vor.u32 %v3396, %v3397
  %vm3399 = vcmp.lt.s32.totalorder %v3380, 1
  %vm3400 = vcmp.lt.s32.totalorder %v3380, 2
  %vm3401 = vcmp.lt.s32.totalorder %v3380, 3
  %vm3402 = vcmp.lt.s32.totalorder %v3380, 4
  %v3403 = vsel %vm3399, %v3383, %v3386
  %v3404 = vsel %vm3402, %v3392, 2102212464
  %v3405 = vsel %vm3401, %v3389, %v3404
  %v3406 = vsel %vm3400, %v3403, %v3405
  %v3407 = vsel %vm3399, %v3386, %v3389
  %v3408 = vsel %vm3402, %v3395, 920167782
  %v3409 = vsel %vm3401, %v3392, %v3408
  %v3410 = vsel %vm3400, %v3407, %v3409
  %v3411 = vsel %vm3399, %v3389, %v3392
  %v3412 = vsel %vm3402, %v3398, 1326507024
  %v3413 = vsel %vm3401, %v3395, %v3412
  %v3414 = vsel %vm3400, %v3411, %v3413
  %v3415 = vshll.u32 %v3375, 8
  %v3416 = vmul.u32.u64.compose %v3415, %v3414
  %v3417 = vextract.low.u32 %v3416
  %v3418 = vextract.high.u32 %v3416
  %v3419 = vmul.u32.u64.compose %v3415, %v3410
  %v3420 = vextract.low.u32 %v3419
  %v3421 = vextract.high.u32 %v3419
  %v3422 = vmul.u32 %v3415, %v3406
  %v3423 = vadd.s32 %v3418, %v3420
  %vm3424 = vc.u32 %v3418, %v3420
  %v3425 = vadd.s32 %v3421, 1
  %v3426 = vsel %vm3424, %v3425, %v3421
  %v3427 = vadd.s32 %v3422, %v3426
  %v3428 = vadd.s32 %v3427, 536870912
  %v3429 = vshrl.u32 %v3428, 30
  %v3430 = vshll.u32 %v3429, 30
  %v3431 = vsub.s32 %v3427, %v3430
  %vm3432 = vcmp.lt.s32.totalorder %v3431, 0
  %v3433 = vsub.s32 0, %v3431
  %v3434 = vsel %vm3432, %v3433, %v3431
  %v3435 = vclz %v3434
  %v3436 = vsub.s32 %v3435, 2
  %vm3437 = vcmp.gt.s32.totalorder 0, %v3436
  %v3438 = vsel %vm3437, 0, %v3436
  %v3439 = vsub.s32 32, %v3438
  %v3440 = vshll.u32 %v3431, %v3438
  %v3441 = vshrl.u32 %v3423, %v3439
  %v3442 = vor.u32 %v3440, %v3441
  %v3443 = vsub.s32 4294967266, %v3438
  %v3444 = vadd.s32 %v3443, 127
  %v3445 = vshll.u32 %v3444, 23
  %v3446 = vor.u32 4788187, %v3445
  %v3447 = vand.u32 2147483647, %v3446
  %v3449 = vcvt.s32.f32 %v3442
  %v3450 = vmul.f32 %v3449, %v3447
  %v3451 = vxor.u32 %v3450, 2147483648
  %v3452 = vsel %vm3369, %v3451, %v3450
  %v3453 = vsub.s32 4, %v3429
  %v3454 = vsel %vm3369, %v3453, %v3429
  %v3455 = vsel %vm3368, %v760, %v3452
  %v3456 = vsel %vm3368, 0, %v3454
  %v3457 = vcosq.f32.pop %v3455
  %v3458 = vsinq.f32.pop %v3455
  %vm3459 = vweird.f32 %v760
  %v3460 = vadd.s32 %v3456, 3
  %v3461 = vand.u32 %v3460, 3
  %vm3462 = vcmp.lt.s32.totalorder %v3461, 2
  %vm3463 = vcmp.eq.s32.totalorder %v3461, 0
  %v3464 = vxor.u32 %v3458, 2147483648
  %v3465 = vsel %vm3463, %v3457, %v3464
  %vm3466 = vcmp.eq.s32.totalorder %v3461, 2
  %v3467 = vxor.u32 %v3457, 2147483648
  %v3468 = vsel %vm3466, %v3467, %v3458
  %v3469 = vsel %vm3462, %v3465, %v3468
  %v3470 = vsel %vm3459, nan, %v3469
  %v3471 = vand.u32 2147483647, %v761
  %vm3472 = vcmp.le.f32.partialorder %v3471, 0.7853982
  %vm3473 = vcmp.lt.s32.totalorder %v761, 0
  %v3474 = vand.u32 %v761, 2139095040
  %v3475 = vshrl.u32 %v3474, 23
  %v3476 = vsub.s32 %v3475, 127
  %v3477 = vand.u32 2147483647, %v761
  %v3478 = vand.u32 %v3477, 8388607
  %v3479 = vor.u32 %v3478, 8388608
  %v3480 = vsub.s32 0, %v3479
  %v3481 = vadd.s32 %v3476, 1
  %vm3482 = vcmp.gt.s32.totalorder %v3481, 0
  %v3483 = vsel %vm3482, %v3481, 0
  %v3484 = vshrl.u32 %v3483, 5
  %v3485 = vand.u32 %v3483, 31
  %v3486 = vsub.s32 32, %v3485
  %v3487 = vshrl.u32 683565275, %v3486
  %v3488 = vshll.u32 683565275, %v3485
  %v3489 = vshrl.u32 2475754826, %v3486
  %v3490 = vor.u32 %v3488, %v3489
  %v3491 = vshll.u32 2475754826, %v3485
  %v3492 = vshrl.u32 2131351028, %v3486
  %v3493 = vor.u32 %v3491, %v3492
  %v3494 = vshll.u32 2131351028, %v3485
  %v3495 = vshrl.u32 2102212464, %v3486
  %v3496 = vor.u32 %v3494, %v3495
  %v3497 = vshll.u32 2102212464, %v3485
  %v3498 = vshrl.u32 920167782, %v3486
  %v3499 = vor.u32 %v3497, %v3498
  %v3500 = vshll.u32 920167782, %v3485
  %v3501 = vshrl.u32 1326507024, %v3486
  %v3502 = vor.u32 %v3500, %v3501
  %vm3503 = vcmp.lt.s32.totalorder %v3484, 1
  %vm3504 = vcmp.lt.s32.totalorder %v3484, 2
  %vm3505 = vcmp.lt.s32.totalorder %v3484, 3
  %vm3506 = vcmp.lt.s32.totalorder %v3484, 4
  %v3507 = vsel %vm3503, %v3487, %v3490
  %v3508 = vsel %vm3506, %v3496, 2102212464
  %v3509 = vsel %vm3505, %v3493, %v3508
  %v3510 = vsel %vm3504, %v3507, %v3509
  %v3511 = vsel %vm3503, %v3490, %v3493
  %v3512 = vsel %vm3506, %v3499, 920167782
  %v3513 = vsel %vm3505, %v3496, %v3512
  %v3514 = vsel %vm3504, %v3511, %v3513
  %v3515 = vsel %vm3503, %v3493, %v3496
  %v3516 = vsel %vm3506, %v3502, 1326507024
  %v3517 = vsel %vm3505, %v3499, %v3516
  %v3518 = vsel %vm3504, %v3515, %v3517
  %v3519 = vshll.u32 %v3479, 8
  %v3520 = vmul.u32.u64.compose %v3519, %v3518
  %v3521 = vextract.low.u32 %v3520
  %v3522 = vextract.high.u32 %v3520
  %v3523 = vmul.u32.u64.compose %v3519, %v3514
  %v3524 = vextract.low.u32 %v3523
  %v3525 = vextract.high.u32 %v3523
  %v3526 = vmul.u32 %v3519, %v3510
  %v3527 = vadd.s32 %v3522, %v3524
  %vm3528 = vc.u32 %v3522, %v3524
  %v3529 = vadd.s32 %v3525, 1
  %v3530 = vsel %vm3528, %v3529, %v3525
  %v3531 = vadd.s32 %v3526, %v3530
  %v3532 = vadd.s32 %v3531, 536870912
  %v3533 = vshrl.u32 %v3532, 30
  %v3534 = vshll.u32 %v3533, 30
  %v3535 = vsub.s32 %v3531, %v3534
  %vm3536 = vcmp.lt.s32.totalorder %v3535, 0
  %v3537 = vsub.s32 0, %v3535
  %v3538 = vsel %vm3536, %v3537, %v3535
  %v3539 = vclz %v3538
  %v3540 = vsub.s32 %v3539, 2
  %vm3541 = vcmp.gt.s32.totalorder 0, %v3540
  %v3542 = vsel %vm3541, 0, %v3540
  %v3543 = vsub.s32 32, %v3542
  %v3544 = vshll.u32 %v3535, %v3542
  %v3545 = vshrl.u32 %v3527, %v3543
  %v3546 = vor.u32 %v3544, %v3545
  %v3547 = vsub.s32 4294967266, %v3542
  %v3548 = vadd.s32 %v3547, 127
  %v3549 = vshll.u32 %v3548, 23
  %v3550 = vor.u32 4788187, %v3549
  %v3551 = vand.u32 2147483647, %v3550
  %v3553 = vcvt.s32.f32 %v3546
  %v3554 = vmul.f32 %v3553, %v3551
  %v3555 = vxor.u32 %v3554, 2147483648
  %v3556 = vsel %vm3473, %v3555, %v3554
  %v3557 = vsub.s32 4, %v3533
  %v3558 = vsel %vm3473, %v3557, %v3533
  %v3559 = vsel %vm3472, %v761, %v3556
  %v3560 = vsel %vm3472, 0, %v3558
  %v3561 = vcosq.f32.pop %v3559
  %v3562 = vsinq.f32.pop %v3559
  %vm3563 = vweird.f32 %v761
  %v3564 = vadd.s32 %v3560, 3
  %v3565 = vand.u32 %v3564, 3
  %vm3566 = vcmp.lt.s32.totalorder %v3565, 2
  %vm3567 = vcmp.eq.s32.totalorder %v3565, 0
  %v3568 = vxor.u32 %v3562, 2147483648
  %v3569 = vsel %vm3567, %v3561, %v3568
  %vm3570 = vcmp.eq.s32.totalorder %v3565, 2
  %v3571 = vxor.u32 %v3561, 2147483648
  %v3572 = vsel %vm3570, %v3571, %v3562
  %v3573 = vsel %vm3566, %v3569, %v3572
  %v3574 = vsel %vm3563, nan, %v3573
  %v3575 = vand.u32 2147483647, %v762
  %vm3576 = vcmp.le.f32.partialorder %v3575, 0.7853982
  %vm3577 = vcmp.lt.s32.totalorder %v762, 0
  %v3578 = vand.u32 %v762, 2139095040
  %v3579 = vshrl.u32 %v3578, 23
  %v3580 = vsub.s32 %v3579, 127
  %v3581 = vand.u32 2147483647, %v762
  %v3582 = vand.u32 %v3581, 8388607
  %v3583 = vor.u32 %v3582, 8388608
  %v3584 = vsub.s32 0, %v3583
  %v3585 = vadd.s32 %v3580, 1
  %vm3586 = vcmp.gt.s32.totalorder %v3585, 0
  %v3587 = vsel %vm3586, %v3585, 0
  %v3588 = vshrl.u32 %v3587, 5
  %v3589 = vand.u32 %v3587, 31
  %v3590 = vsub.s32 32, %v3589
  %v3591 = vshrl.u32 683565275, %v3590
  %v3592 = vshll.u32 683565275, %v3589
  %v3593 = vshrl.u32 2475754826, %v3590
  %v3594 = vor.u32 %v3592, %v3593
  %v3595 = vshll.u32 2475754826, %v3589
  %v3596 = vshrl.u32 2131351028, %v3590
  %v3597 = vor.u32 %v3595, %v3596
  %v3598 = vshll.u32 2131351028, %v3589
  %v3599 = vshrl.u32 2102212464, %v3590
  %v3600 = vor.u32 %v3598, %v3599
  %v3601 = vshll.u32 2102212464, %v3589
  %v3602 = vshrl.u32 920167782, %v3590
  %v3603 = vor.u32 %v3601, %v3602
  %v3604 = vshll.u32 920167782, %v3589
  %v3605 = vshrl.u32 1326507024, %v3590
  %v3606 = vor.u32 %v3604, %v3605
  %vm3607 = vcmp.lt.s32.totalorder %v3588, 1
  %vm3608 = vcmp.lt.s32.totalorder %v3588, 2
  %vm3609 = vcmp.lt.s32.totalorder %v3588, 3
  %vm3610 = vcmp.lt.s32.totalorder %v3588, 4
  %v3611 = vsel %vm3607, %v3591, %v3594
  %v3612 = vsel %vm3610, %v3600, 2102212464
  %v3613 = vsel %vm3609, %v3597, %v3612
  %v3614 = vsel %vm3608, %v3611, %v3613
  %v3615 = vsel %vm3607, %v3594, %v3597
  %v3616 = vsel %vm3610, %v3603, 920167782
  %v3617 = vsel %vm3609, %v3600, %v3616
  %v3618 = vsel %vm3608, %v3615, %v3617
  %v3619 = vsel %vm3607, %v3597, %v3600
  %v3620 = vsel %vm3610, %v3606, 1326507024
  %v3621 = vsel %vm3609, %v3603, %v3620
  %v3622 = vsel %vm3608, %v3619, %v3621
  %v3623 = vshll.u32 %v3583, 8
  %v3624 = vmul.u32.u64.compose %v3623, %v3622
  %v3625 = vextract.low.u32 %v3624
  %v3626 = vextract.high.u32 %v3624
  %v3627 = vmul.u32.u64.compose %v3623, %v3618
  %v3628 = vextract.low.u32 %v3627
  %v3629 = vextract.high.u32 %v3627
  %v3630 = vmul.u32 %v3623, %v3614
  %v3631 = vadd.s32 %v3626, %v3628
  %vm3632 = vc.u32 %v3626, %v3628
  %v3633 = vadd.s32 %v3629, 1
  %v3634 = vsel %vm3632, %v3633, %v3629
  %v3635 = vadd.s32 %v3630, %v3634
  %v3636 = vadd.s32 %v3635, 536870912
  %v3637 = vshrl.u32 %v3636, 30
  %v3638 = vshll.u32 %v3637, 30
  %v3639 = vsub.s32 %v3635, %v3638
  %vm3640 = vcmp.lt.s32.totalorder %v3639, 0
  %v3641 = vsub.s32 0, %v3639
  %v3642 = vsel %vm3640, %v3641, %v3639
  %v3643 = vclz %v3642
  %v3644 = vsub.s32 %v3643, 2
  %vm3645 = vcmp.gt.s32.totalorder 0, %v3644
  %v3646 = vsel %vm3645, 0, %v3644
  %v3647 = vsub.s32 32, %v3646
  %v3648 = vshll.u32 %v3639, %v3646
  %v3649 = vshrl.u32 %v3631, %v3647
  %v3650 = vor.u32 %v3648, %v3649
  %v3651 = vsub.s32 4294967266, %v3646
  %v3652 = vadd.s32 %v3651, 127
  %v3653 = vshll.u32 %v3652, 23
  %v3654 = vor.u32 4788187, %v3653
  %v3655 = vand.u32 2147483647, %v3654
  %v3657 = vcvt.s32.f32 %v3650
  %v3658 = vmul.f32 %v3657, %v3655
  %v3659 = vxor.u32 %v3658, 2147483648
  %v3660 = vsel %vm3577, %v3659, %v3658
  %v3661 = vsub.s32 4, %v3637
  %v3662 = vsel %vm3577, %v3661, %v3637
  %v3663 = vsel %vm3576, %v762, %v3660
  %v3664 = vsel %vm3576, 0, %v3662
  %v3665 = vcosq.f32.pop %v3663
  %v3666 = vsinq.f32.pop %v3663
  %vm3667 = vweird.f32 %v762
  %v3668 = vadd.s32 %v3664, 3
  %v3669 = vand.u32 %v3668, 3
  %vm3670 = vcmp.lt.s32.totalorder %v3669, 2
  %vm3671 = vcmp.eq.s32.totalorder %v3669, 0
  %v3672 = vxor.u32 %v3666, 2147483648
  %v3673 = vsel %vm3671, %v3665, %v3672
  %vm3674 = vcmp.eq.s32.totalorder %v3669, 2
  %v3675 = vxor.u32 %v3665, 2147483648
  %v3676 = vsel %vm3674, %v3675, %v3666
  %v3677 = vsel %vm3670, %v3673, %v3676
  %v3678 = vsel %vm3667, nan, %v3677
  %v3679 = vand.u32 2147483647, %v763
  %vm3680 = vcmp.le.f32.partialorder %v3679, 0.7853982
  %vm3681 = vcmp.lt.s32.totalorder %v763, 0
  %v3682 = vand.u32 %v763, 2139095040
  %v3683 = vshrl.u32 %v3682, 23
  %v3684 = vsub.s32 %v3683, 127
  %v3685 = vand.u32 2147483647, %v763
  %v3686 = vand.u32 %v3685, 8388607
  %v3687 = vor.u32 %v3686, 8388608
  %v3688 = vsub.s32 0, %v3687
  %v3689 = vadd.s32 %v3684, 1
  %vm3690 = vcmp.gt.s32.totalorder %v3689, 0
  %v3691 = vsel %vm3690, %v3689, 0
  %v3692 = vshrl.u32 %v3691, 5
  %v3693 = vand.u32 %v3691, 31
  %v3694 = vsub.s32 32, %v3693
  %v3695 = vshrl.u32 683565275, %v3694
  %v3696 = vshll.u32 683565275, %v3693
  %v3697 = vshrl.u32 2475754826, %v3694
  %v3698 = vor.u32 %v3696, %v3697
  %v3699 = vshll.u32 2475754826, %v3693
  %v3700 = vshrl.u32 2131351028, %v3694
  %v3701 = vor.u32 %v3699, %v3700
  %v3702 = vshll.u32 2131351028, %v3693
  %v3703 = vshrl.u32 2102212464, %v3694
  %v3704 = vor.u32 %v3702, %v3703
  %v3705 = vshll.u32 2102212464, %v3693
  %v3706 = vshrl.u32 920167782, %v3694
  %v3707 = vor.u32 %v3705, %v3706
  %v3708 = vshll.u32 920167782, %v3693
  %v3709 = vshrl.u32 1326507024, %v3694
  %v3710 = vor.u32 %v3708, %v3709
  %vm3711 = vcmp.lt.s32.totalorder %v3692, 1
  %vm3712 = vcmp.lt.s32.totalorder %v3692, 2
  %vm3713 = vcmp.lt.s32.totalorder %v3692, 3
  %vm3714 = vcmp.lt.s32.totalorder %v3692, 4
  %v3715 = vsel %vm3711, %v3695, %v3698
  %v3716 = vsel %vm3714, %v3704, 2102212464
  %v3717 = vsel %vm3713, %v3701, %v3716
  %v3718 = vsel %vm3712, %v3715, %v3717
  %v3719 = vsel %vm3711, %v3698, %v3701
  %v3720 = vsel %vm3714, %v3707, 920167782
  %v3721 = vsel %vm3713, %v3704, %v3720
  %v3722 = vsel %vm3712, %v3719, %v3721
  %v3723 = vsel %vm3711, %v3701, %v3704
  %v3724 = vsel %vm3714, %v3710, 1326507024
  %v3725 = vsel %vm3713, %v3707, %v3724
  %v3726 = vsel %vm3712, %v3723, %v3725
  %v3727 = vshll.u32 %v3687, 8
  %v3728 = vmul.u32.u64.compose %v3727, %v3726
  %v3729 = vextract.low.u32 %v3728
  %v3730 = vextract.high.u32 %v3728
  %v3731 = vmul.u32.u64.compose %v3727, %v3722
  %v3732 = vextract.low.u32 %v3731
  %v3733 = vextract.high.u32 %v3731
  %v3734 = vmul.u32 %v3727, %v3718
  %v3735 = vadd.s32 %v3730, %v3732
  %vm3736 = vc.u32 %v3730, %v3732
  %v3737 = vadd.s32 %v3733, 1
  %v3738 = vsel %vm3736, %v3737, %v3733
  %v3739 = vadd.s32 %v3734, %v3738
  %v3740 = vadd.s32 %v3739, 536870912
  %v3741 = vshrl.u32 %v3740, 30
  %v3742 = vshll.u32 %v3741, 30
  %v3743 = vsub.s32 %v3739, %v3742
  %vm3744 = vcmp.lt.s32.totalorder %v3743, 0
  %v3745 = vsub.s32 0, %v3743
  %v3746 = vsel %vm3744, %v3745, %v3743
  %v3747 = vclz %v3746
  %v3748 = vsub.s32 %v3747, 2
  %vm3749 = vcmp.gt.s32.totalorder 0, %v3748
  %v3750 = vsel %vm3749, 0, %v3748
  %v3751 = vsub.s32 32, %v3750
  %v3752 = vshll.u32 %v3743, %v3750
  %v3753 = vshrl.u32 %v3735, %v3751
  %v3754 = vor.u32 %v3752, %v3753
  %v3755 = vsub.s32 4294967266, %v3750
  %v3756 = vadd.s32 %v3755, 127
  %v3757 = vshll.u32 %v3756, 23
  %v3758 = vor.u32 4788187, %v3757
  %v3759 = vand.u32 2147483647, %v3758
  %v3761 = vcvt.s32.f32 %v3754
  %v3762 = vmul.f32 %v3761, %v3759
  %v3763 = vxor.u32 %v3762, 2147483648
  %v3764 = vsel %vm3681, %v3763, %v3762
  %v3765 = vsub.s32 4, %v3741
  %v3766 = vsel %vm3681, %v3765, %v3741
  %v3767 = vsel %vm3680, %v763, %v3764
  %v3768 = vsel %vm3680, 0, %v3766
  %v3769 = vcosq.f32.pop %v3767
  %v3770 = vsinq.f32.pop %v3767
  %vm3771 = vweird.f32 %v763
  %v3772 = vadd.s32 %v3768, 3
  %v3773 = vand.u32 %v3772, 3
  %vm3774 = vcmp.lt.s32.totalorder %v3773, 2
  %vm3775 = vcmp.eq.s32.totalorder %v3773, 0
  %v3776 = vxor.u32 %v3770, 2147483648
  %v3777 = vsel %vm3775, %v3769, %v3776
  %vm3778 = vcmp.eq.s32.totalorder %v3773, 2
  %v3779 = vxor.u32 %v3769, 2147483648
  %v3780 = vsel %vm3778, %v3779, %v3770
  %v3781 = vsel %vm3774, %v3777, %v3780
  %v3782 = vsel %vm3771, nan, %v3781
  %v3783 = vand.u32 2147483647, %v764
  %vm3784 = vcmp.le.f32.partialorder %v3783, 0.7853982
  %vm3785 = vcmp.lt.s32.totalorder %v764, 0
  %v3786 = vand.u32 %v764, 2139095040
  %v3787 = vshrl.u32 %v3786, 23
  %v3788 = vsub.s32 %v3787, 127
  %v3789 = vand.u32 2147483647, %v764
  %v3790 = vand.u32 %v3789, 8388607
  %v3791 = vor.u32 %v3790, 8388608
  %v3792 = vsub.s32 0, %v3791
  %v3793 = vadd.s32 %v3788, 1
  %vm3794 = vcmp.gt.s32.totalorder %v3793, 0
  %v3795 = vsel %vm3794, %v3793, 0
  %v3796 = vshrl.u32 %v3795, 5
  %v3797 = vand.u32 %v3795, 31
  %v3798 = vsub.s32 32, %v3797
  %v3799 = vshrl.u32 683565275, %v3798
  %v3800 = vshll.u32 683565275, %v3797
  %v3801 = vshrl.u32 2475754826, %v3798
  %v3802 = vor.u32 %v3800, %v3801
  %v3803 = vshll.u32 2475754826, %v3797
  %v3804 = vshrl.u32 2131351028, %v3798
  %v3805 = vor.u32 %v3803, %v3804
  %v3806 = vshll.u32 2131351028, %v3797
  %v3807 = vshrl.u32 2102212464, %v3798
  %v3808 = vor.u32 %v3806, %v3807
  %v3809 = vshll.u32 2102212464, %v3797
  %v3810 = vshrl.u32 920167782, %v3798
  %v3811 = vor.u32 %v3809, %v3810
  %v3812 = vshll.u32 920167782, %v3797
  %v3813 = vshrl.u32 1326507024, %v3798
  %v3814 = vor.u32 %v3812, %v3813
  %vm3815 = vcmp.lt.s32.totalorder %v3796, 1
  %vm3816 = vcmp.lt.s32.totalorder %v3796, 2
  %vm3817 = vcmp.lt.s32.totalorder %v3796, 3
  %vm3818 = vcmp.lt.s32.totalorder %v3796, 4
  %v3819 = vsel %vm3815, %v3799, %v3802
  %v3820 = vsel %vm3818, %v3808, 2102212464
  %v3821 = vsel %vm3817, %v3805, %v3820
  %v3822 = vsel %vm3816, %v3819, %v3821
  %v3823 = vsel %vm3815, %v3802, %v3805
  %v3824 = vsel %vm3818, %v3811, 920167782
  %v3825 = vsel %vm3817, %v3808, %v3824
  %v3826 = vsel %vm3816, %v3823, %v3825
  %v3827 = vsel %vm3815, %v3805, %v3808
  %v3828 = vsel %vm3818, %v3814, 1326507024
  %v3829 = vsel %vm3817, %v3811, %v3828
  %v3830 = vsel %vm3816, %v3827, %v3829
  %v3831 = vshll.u32 %v3791, 8
  %v3832 = vmul.u32.u64.compose %v3831, %v3830
  %v3833 = vextract.low.u32 %v3832
  %v3834 = vextract.high.u32 %v3832
  %v3835 = vmul.u32.u64.compose %v3831, %v3826
  %v3836 = vextract.low.u32 %v3835
  %v3837 = vextract.high.u32 %v3835
  %v3838 = vmul.u32 %v3831, %v3822
  %v3839 = vadd.s32 %v3834, %v3836
  %vm3840 = vc.u32 %v3834, %v3836
  %v3841 = vadd.s32 %v3837, 1
  %v3842 = vsel %vm3840, %v3841, %v3837
  %v3843 = vadd.s32 %v3838, %v3842
  %v3844 = vadd.s32 %v3843, 536870912
  %v3845 = vshrl.u32 %v3844, 30
  %v3846 = vshll.u32 %v3845, 30
  %v3847 = vsub.s32 %v3843, %v3846
  %vm3848 = vcmp.lt.s32.totalorder %v3847, 0
  %v3849 = vsub.s32 0, %v3847
  %v3850 = vsel %vm3848, %v3849, %v3847
  %v3851 = vclz %v3850
  %v3852 = vsub.s32 %v3851, 2
  %vm3853 = vcmp.gt.s32.totalorder 0, %v3852
  %v3854 = vsel %vm3853, 0, %v3852
  %v3855 = vsub.s32 32, %v3854
  %v3856 = vshll.u32 %v3847, %v3854
  %v3857 = vshrl.u32 %v3839, %v3855
  %v3858 = vor.u32 %v3856, %v3857
  %v3859 = vsub.s32 4294967266, %v3854
  %v3860 = vadd.s32 %v3859, 127
  %v3861 = vshll.u32 %v3860, 23
  %v3862 = vor.u32 4788187, %v3861
  %v3863 = vand.u32 2147483647, %v3862
  %v3865 = vcvt.s32.f32 %v3858
  %v3866 = vmul.f32 %v3865, %v3863
  %v3867 = vxor.u32 %v3866, 2147483648
  %v3868 = vsel %vm3785, %v3867, %v3866
  %v3869 = vsub.s32 4, %v3845
  %v3870 = vsel %vm3785, %v3869, %v3845
  %v3871 = vsel %vm3784, %v764, %v3868
  %v3872 = vsel %vm3784, 0, %v3870
  %v3873 = vcosq.f32.pop %v3871
  %v3874 = vsinq.f32.pop %v3871
  %vm3875 = vweird.f32 %v764
  %v3876 = vadd.s32 %v3872, 3
  %v3877 = vand.u32 %v3876, 3
  %vm3878 = vcmp.lt.s32.totalorder %v3877, 2
  %vm3879 = vcmp.eq.s32.totalorder %v3877, 0
  %v3880 = vxor.u32 %v3874, 2147483648
  %v3881 = vsel %vm3879, %v3873, %v3880
  %vm3882 = vcmp.eq.s32.totalorder %v3877, 2
  %v3883 = vxor.u32 %v3873, 2147483648
  %v3884 = vsel %vm3882, %v3883, %v3874
  %v3885 = vsel %vm3878, %v3881, %v3884
  %v3886 = vsel %vm3875, nan, %v3885
  %v3887 = vand.u32 2147483647, %v765
  %vm3888 = vcmp.le.f32.partialorder %v3887, 0.7853982
  %vm3889 = vcmp.lt.s32.totalorder %v765, 0
  %v3890 = vand.u32 %v765, 2139095040
  %v3891 = vshrl.u32 %v3890, 23
  %v3892 = vsub.s32 %v3891, 127
  %v3893 = vand.u32 2147483647, %v765
  %v3894 = vand.u32 %v3893, 8388607
  %v3895 = vor.u32 %v3894, 8388608
  %v3896 = vsub.s32 0, %v3895
  %v3897 = vadd.s32 %v3892, 1
  %vm3898 = vcmp.gt.s32.totalorder %v3897, 0
  %v3899 = vsel %vm3898, %v3897, 0
  %v3900 = vshrl.u32 %v3899, 5
  %v3901 = vand.u32 %v3899, 31
  %v3902 = vsub.s32 32, %v3901
  %v3903 = vshrl.u32 683565275, %v3902
  %v3904 = vshll.u32 683565275, %v3901
  %v3905 = vshrl.u32 2475754826, %v3902
  %v3906 = vor.u32 %v3904, %v3905
  %v3907 = vshll.u32 2475754826, %v3901
  %v3908 = vshrl.u32 2131351028, %v3902
  %v3909 = vor.u32 %v3907, %v3908
  %v3910 = vshll.u32 2131351028, %v3901
  %v3911 = vshrl.u32 2102212464, %v3902
  %v3912 = vor.u32 %v3910, %v3911
  %v3913 = vshll.u32 2102212464, %v3901
  %v3914 = vshrl.u32 920167782, %v3902
  %v3915 = vor.u32 %v3913, %v3914
  %v3916 = vshll.u32 920167782, %v3901
  %v3917 = vshrl.u32 1326507024, %v3902
  %v3918 = vor.u32 %v3916, %v3917
  %vm3919 = vcmp.lt.s32.totalorder %v3900, 1
  %vm3920 = vcmp.lt.s32.totalorder %v3900, 2
  %vm3921 = vcmp.lt.s32.totalorder %v3900, 3
  %vm3922 = vcmp.lt.s32.totalorder %v3900, 4
  %v3923 = vsel %vm3919, %v3903, %v3906
  %v3924 = vsel %vm3922, %v3912, 2102212464
  %v3925 = vsel %vm3921, %v3909, %v3924
  %v3926 = vsel %vm3920, %v3923, %v3925
  %v3927 = vsel %vm3919, %v3906, %v3909
  %v3928 = vsel %vm3922, %v3915, 920167782
  %v3929 = vsel %vm3921, %v3912, %v3928
  %v3930 = vsel %vm3920, %v3927, %v3929
  %v3931 = vsel %vm3919, %v3909, %v3912
  %v3932 = vsel %vm3922, %v3918, 1326507024
  %v3933 = vsel %vm3921, %v3915, %v3932
  %v3934 = vsel %vm3920, %v3931, %v3933
  %v3935 = vshll.u32 %v3895, 8
  %v3936 = vmul.u32.u64.compose %v3935, %v3934
  %v3937 = vextract.low.u32 %v3936
  %v3938 = vextract.high.u32 %v3936
  %v3939 = vmul.u32.u64.compose %v3935, %v3930
  %v3940 = vextract.low.u32 %v3939
  %v3941 = vextract.high.u32 %v3939
  %v3942 = vmul.u32 %v3935, %v3926
  %v3943 = vadd.s32 %v3938, %v3940
  %vm3944 = vc.u32 %v3938, %v3940
  %v3945 = vadd.s32 %v3941, 1
  %v3946 = vsel %vm3944, %v3945, %v3941
  %v3947 = vadd.s32 %v3942, %v3946
  %v3948 = vadd.s32 %v3947, 536870912
  %v3949 = vshrl.u32 %v3948, 30
  %v3950 = vshll.u32 %v3949, 30
  %v3951 = vsub.s32 %v3947, %v3950
  %vm3952 = vcmp.lt.s32.totalorder %v3951, 0
  %v3953 = vsub.s32 0, %v3951
  %v3954 = vsel %vm3952, %v3953, %v3951
  %v3955 = vclz %v3954
  %v3956 = vsub.s32 %v3955, 2
  %vm3957 = vcmp.gt.s32.totalorder 0, %v3956
  %v3958 = vsel %vm3957, 0, %v3956
  %v3959 = vsub.s32 32, %v3958
  %v3960 = vshll.u32 %v3951, %v3958
  %v3961 = vshrl.u32 %v3943, %v3959
  %v3962 = vor.u32 %v3960, %v3961
  %v3963 = vsub.s32 4294967266, %v3958
  %v3964 = vadd.s32 %v3963, 127
  %v3965 = vshll.u32 %v3964, 23
  %v3966 = vor.u32 4788187, %v3965
  %v3967 = vand.u32 2147483647, %v3966
  %v3969 = vcvt.s32.f32 %v3962
  %v3970 = vmul.f32 %v3969, %v3967
  %v3971 = vxor.u32 %v3970, 2147483648
  %v3972 = vsel %vm3889, %v3971, %v3970
  %v3973 = vsub.s32 4, %v3949
  %v3974 = vsel %vm3889, %v3973, %v3949
  %v3975 = vsel %vm3888, %v765, %v3972
  %v3976 = vsel %vm3888, 0, %v3974
  %v3977 = vcosq.f32.pop %v3975
  %v3978 = vsinq.f32.pop %v3975
  %vm3979 = vweird.f32 %v765
  %v3980 = vadd.s32 %v3976, 3
  %v3981 = vand.u32 %v3980, 3
  %vm3982 = vcmp.lt.s32.totalorder %v3981, 2
  %vm3983 = vcmp.eq.s32.totalorder %v3981, 0
  %v3984 = vxor.u32 %v3978, 2147483648
  %v3985 = vsel %vm3983, %v3977, %v3984
  %vm3986 = vcmp.eq.s32.totalorder %v3981, 2
  %v3987 = vxor.u32 %v3977, 2147483648
  %v3988 = vsel %vm3986, %v3987, %v3978
  %v3989 = vsel %vm3982, %v3985, %v3988
  %v3990 = vsel %vm3979, nan, %v3989
  %v3991 = vand.u32 2147483647, %v766
  %vm3992 = vcmp.le.f32.partialorder %v3991, 0.7853982
  %vm3993 = vcmp.lt.s32.totalorder %v766, 0
  %v3994 = vand.u32 %v766, 2139095040
  %v3995 = vshrl.u32 %v3994, 23
  %v3996 = vsub.s32 %v3995, 127
  %v3997 = vand.u32 2147483647, %v766
  %v3998 = vand.u32 %v3997, 8388607
  %v3999 = vor.u32 %v3998, 8388608
  %v4000 = vsub.s32 0, %v3999
  %v4001 = vadd.s32 %v3996, 1
  %vm4002 = vcmp.gt.s32.totalorder %v4001, 0
  %v4003 = vsel %vm4002, %v4001, 0
  %v4004 = vshrl.u32 %v4003, 5
  %v4005 = vand.u32 %v4003, 31
  %v4006 = vsub.s32 32, %v4005
  %v4007 = vshrl.u32 683565275, %v4006
  %v4008 = vshll.u32 683565275, %v4005
  %v4009 = vshrl.u32 2475754826, %v4006
  %v4010 = vor.u32 %v4008, %v4009
  %v4011 = vshll.u32 2475754826, %v4005
  %v4012 = vshrl.u32 2131351028, %v4006
  %v4013 = vor.u32 %v4011, %v4012
  %v4014 = vshll.u32 2131351028, %v4005
  %v4015 = vshrl.u32 2102212464, %v4006
  %v4016 = vor.u32 %v4014, %v4015
  %v4017 = vshll.u32 2102212464, %v4005
  %v4018 = vshrl.u32 920167782, %v4006
  %v4019 = vor.u32 %v4017, %v4018
  %v4020 = vshll.u32 920167782, %v4005
  %v4021 = vshrl.u32 1326507024, %v4006
  %v4022 = vor.u32 %v4020, %v4021
  %vm4023 = vcmp.lt.s32.totalorder %v4004, 1
  %vm4024 = vcmp.lt.s32.totalorder %v4004, 2
  %vm4025 = vcmp.lt.s32.totalorder %v4004, 3
  %vm4026 = vcmp.lt.s32.totalorder %v4004, 4
  %v4027 = vsel %vm4023, %v4007, %v4010
  %v4028 = vsel %vm4026, %v4016, 2102212464
  %v4029 = vsel %vm4025, %v4013, %v4028
  %v4030 = vsel %vm4024, %v4027, %v4029
  %v4031 = vsel %vm4023, %v4010, %v4013
  %v4032 = vsel %vm4026, %v4019, 920167782
  %v4033 = vsel %vm4025, %v4016, %v4032
  %v4034 = vsel %vm4024, %v4031, %v4033
  %v4035 = vsel %vm4023, %v4013, %v4016
  %v4036 = vsel %vm4026, %v4022, 1326507024
  %v4037 = vsel %vm4025, %v4019, %v4036
  %v4038 = vsel %vm4024, %v4035, %v4037
  %v4039 = vshll.u32 %v3999, 8
  %v4040 = vmul.u32.u64.compose %v4039, %v4038
  %v4041 = vextract.low.u32 %v4040
  %v4042 = vextract.high.u32 %v4040
  %v4043 = vmul.u32.u64.compose %v4039, %v4034
  %v4044 = vextract.low.u32 %v4043
  %v4045 = vextract.high.u32 %v4043
  %v4046 = vmul.u32 %v4039, %v4030
  %v4047 = vadd.s32 %v4042, %v4044
  %vm4048 = vc.u32 %v4042, %v4044
  %v4049 = vadd.s32 %v4045, 1
  %v4050 = vsel %vm4048, %v4049, %v4045
  %v4051 = vadd.s32 %v4046, %v4050
  %v4052 = vadd.s32 %v4051, 536870912
  %v4053 = vshrl.u32 %v4052, 30
  %v4054 = vshll.u32 %v4053, 30
  %v4055 = vsub.s32 %v4051, %v4054
  %vm4056 = vcmp.lt.s32.totalorder %v4055, 0
  %v4057 = vsub.s32 0, %v4055
  %v4058 = vsel %vm4056, %v4057, %v4055
  %v4059 = vclz %v4058
  %v4060 = vsub.s32 %v4059, 2
  %vm4061 = vcmp.gt.s32.totalorder 0, %v4060
  %v4062 = vsel %vm4061, 0, %v4060
  %v4063 = vsub.s32 32, %v4062
  %v4064 = vshll.u32 %v4055, %v4062
  %v4065 = vshrl.u32 %v4047, %v4063
  %v4066 = vor.u32 %v4064, %v4065
  %v4067 = vsub.s32 4294967266, %v4062
  %v4068 = vadd.s32 %v4067, 127
  %v4069 = vshll.u32 %v4068, 23
  %v4070 = vor.u32 4788187, %v4069
  %v4071 = vand.u32 2147483647, %v4070
  %v4073 = vcvt.s32.f32 %v4066
  %v4074 = vmul.f32 %v4073, %v4071
  %v4075 = vxor.u32 %v4074, 2147483648
  %v4076 = vsel %vm3993, %v4075, %v4074
  %v4077 = vsub.s32 4, %v4053
  %v4078 = vsel %vm3993, %v4077, %v4053
  %v4079 = vsel %vm3992, %v766, %v4076
  %v4080 = vsel %vm3992, 0, %v4078
  %v4081 = vcosq.f32.pop %v4079
  %v4082 = vsinq.f32.pop %v4079
  %vm4083 = vweird.f32 %v766
  %v4084 = vadd.s32 %v4080, 3
  %v4085 = vand.u32 %v4084, 3
  %vm4086 = vcmp.lt.s32.totalorder %v4085, 2
  %vm4087 = vcmp.eq.s32.totalorder %v4085, 0
  %v4088 = vxor.u32 %v4082, 2147483648
  %v4089 = vsel %vm4087, %v4081, %v4088
  %vm4090 = vcmp.eq.s32.totalorder %v4085, 2
  %v4091 = vxor.u32 %v4081, 2147483648
  %v4092 = vsel %vm4090, %v4091, %v4082
  %v4093 = vsel %vm4086, %v4089, %v4092
  %v4094 = vsel %vm4083, nan, %v4093
  %v4095 = vadd.f32 %v551, %v870
  %v4096 = vadd.f32 %v552, %v974
  %v4097 = vadd.f32 %v553, %v1078
  %v4098 = vadd.f32 %v554, %v1182
  %v4099 = vadd.f32 %v555, %v1286
  %v4100 = vadd.f32 %v556, %v1390
  %v4101 = vadd.f32 %v557, %v1494
  %v4102 = vadd.f32 %v558, %v1598
  %v4103 = vadd.f32 %v559, %v1702
  %v4104 = vadd.f32 %v560, %v1806
  %v4105 = vadd.f32 %v561, %v1910
  %v4106 = vadd.f32 %v562, %v2014
  %v4107 = vadd.f32 %v563, %v2118
  %v4108 = vadd.f32 %v564, %v2222
  %v4109 = vadd.f32 %v565, %v2326
  %v4110 = vadd.f32 %v566, %v2430
  %v4111 = vadd.f32 %v567, %v2534
  %v4112 = vadd.f32 %v568, %v2638
  %v4113 = vadd.f32 %v569, %v2742
  %v4114 = vadd.f32 %v570, %v2846
  %v4115 = vadd.f32 %v571, %v2950
  %v4116 = vadd.f32 %v572, %v3054
  %v4117 = vadd.f32 %v573, %v3158
  %v4118 = vadd.f32 %v574, %v3262
  %v4119 = vadd.f32 %v575, %v3366
  %v4120 = vadd.f32 %v576, %v3470
  %v4121 = vadd.f32 %v577, %v3574
  %v4122 = vadd.f32 %v578, %v3678
  %v4123 = vadd.f32 %v579, %v3782
  %v4124 = vadd.f32 %v580, %v3886
  %v4125 = vadd.f32 %v581, %v3990
  %v4126 = vadd.f32 %v582, %v4094
  %4127 = vst [vmem:[%s5] sm:$0xff] %v4095
  %vm4128 = vcmask 523264
  %4129 = vst.msk [vmem:[%s5 + $0x8] sm:$0xff] %vm4128, %v4096
  %4130 = vst [vmem:[%s5 + $0x10] sm:$0xff] %v4097
  %4131 = vst.msk [vmem:[%s5 + $0x18] sm:$0xff] %vm4128, %v4098
  %4132 = vst [vmem:[%s5 + $0x20] sm:$0xff] %v4099
  %4133 = vst.msk [vmem:[%s5 + $0x28] sm:$0xff] %vm4128, %v4100
  %4134 = vst [vmem:[%s5 + $0x30] sm:$0xff] %v4101
  %4135 = vst.msk [vmem:[%s5 + $0x38] sm:$0xff] %vm4128, %v4102
  %4136 = vst [vmem:[%s5 + $0x40] sm:$0xff] %v4103
  %4137 = vst.msk [vmem:[%s5 + $0x48] sm:$0xff] %vm4128, %v4104
  %4138 = vst [vmem:[%s5 + $0x50] sm:$0xff] %v4105
  %4139 = vst.msk [vmem:[%s5 + $0x58] sm:$0xff] %vm4128, %v4106
  %4140 = vst [vmem:[%s5 + $0x60] sm:$0xff] %v4107
  %4141 = vst.msk [vmem:[%s5 + $0x68] sm:$0xff] %vm4128, %v4108
  %4142 = vst [vmem:[%s5 + $0x70] sm:$0xff] %v4109
  %4143 = vst.msk [vmem:[%s5 + $0x78] sm:$0xff] %vm4128, %v4110
  %4144 = vst [vmem:[%s5 + $0x80] sm:$0xff] %v4111
  %4145 = vst.msk [vmem:[%s5 + $0x88] sm:$0xff] %vm4128, %v4112
  %4146 = vst [vmem:[%s5 + $0x90] sm:$0xff] %v4113
  %4147 = vst.msk [vmem:[%s5 + $0x98] sm:$0xff] %vm4128, %v4114
  %4148 = vst [vmem:[%s5 + $0xa0] sm:$0xff] %v4115
  %4149 = vst.msk [vmem:[%s5 + $0xa8] sm:$0xff] %vm4128, %v4116
  %4150 = vst [vmem:[%s5 + $0xb0] sm:$0xff] %v4117
  %4151 = vst.msk [vmem:[%s5 + $0xb8] sm:$0xff] %vm4128, %v4118
  %4152 = vst [vmem:[%s5 + $0xc0] sm:$0xff] %v4119
  %4153 = vst.msk [vmem:[%s5 + $0xc8] sm:$0xff] %vm4128, %v4120
  %4154 = vst [vmem:[%s5 + $0xd0] sm:$0xff] %v4121
  %4155 = vst.msk [vmem:[%s5 + $0xd8] sm:$0xff] %vm4128, %v4122
  %4156 = vst [vmem:[%s5 + $0xe0] sm:$0xff] %v4123
  %4157 = vst.msk [vmem:[%s5 + $0xe8] sm:$0xff] %vm4128, %v4124
  %4158 = vst [vmem:[%s5 + $0xf0] sm:$0xff] %v4125
  %4159 = vst.msk [vmem:[%s5 + $0xf8] sm:$0xff] %vm4128, %v4126
  // Predicated region
  $region22: #{tpu_custom_call.1} parent=0 // pred_check
    _
  $region23: #{tpu_custom_call.1} parent=0 // pred_check_branch
    %4161 = sbr.rel (0) target = $region25
  $region24: #{tpu_custom_call.1} parent=0 // pred_region
    _
  $region25: #{tpu_custom_call.1} parent=0 // pred_fallthru
    _
  // Predicated region
  $region26: #{tpu_custom_call.1} parent=0 // pred_check
    _
  $region27: #{tpu_custom_call.1} parent=0 // pred_check_branch
    %4163 = sbr.rel (0) target = $region29
  $region28: #{tpu_custom_call.1} parent=0 // pred_region
    _
  $region29: #{tpu_custom_call.1} parent=0 // pred_fallthru
    _

</llo_original>
